<compile_context>
chip_gen: v6e
topology: v6e:2x2x1
jax: 0.10.0
libtpu: 0.0.40
codegen_flags: <defaults>
</compile_context>

<pallas_src>
import functools

import jax
import jax.numpy as jnp
from jax import lax
from jax.experimental import pallas as pl
from jax.experimental.pallas import tpu as pltpu


def _relu(x):
    return jnp.maximum(x, 0.0)


def _sigmoid(x):
    # kept exact (no approx reciprocal) so the f32 reference check stays at 1e-4
    return 1.0 / (1.0 + jnp.exp(-x))


def _softplus(x):
    # numerically-stable softplus; shared by kernel and reference
    return jnp.maximum(x, 0.0) + jnp.log(1.0 + jnp.exp(-jnp.abs(x)))


def bond_order_kernel(num_layers,
                      src_col_ref, dst_col_ref, dst_row_ref, x_ref, ea_ref,
                      w_in_ref, b_in_ref,
                      wf_i_ref, wf_j_ref, wf_e_ref, bf_ref,
                      ws_i_ref, ws_j_ref, ws_e_ref, bs_ref,
                      wm_ref, bm_ref,
                      we0_i_ref, we0_j_ref, we0_e_ref, we_ref, be_ref,
                      wo_ref, bo_ref,
                      z_ref, e_ref):
    f32 = jnp.float32
    E = src_col_ref.shape[0]
    N = x_ref.shape[0]

    x = x_ref[...]              # (N, F)
    ea = ea_ref[...]            # (E, De)

    # ---- In-kernel one-hot gather/scatter matrices (never touch HBM) ----
    col_ids = lax.broadcasted_iota(jnp.int32, (E, N), 1)          # node id per lane
    src_oh = (src_col_ref[...] == col_ids).astype(f32)            # (E, N) gather src
    dst_oh = (dst_col_ref[...] == col_ids).astype(f32)            # (E, N) gather dst
    row_ids = lax.broadcasted_iota(jnp.int32, (N, E), 0)          # node id per sublane
    dst_oh_t = (dst_row_ref[...] == row_ids).astype(f32)          # (N, E) scatter-add

    def gather(oh, h):
        return jnp.dot(oh, h, preferred_element_type=f32)         # (E, H)

    # ---- Encoder.input_layer : Linear + ReLU ----
    h = _relu(jnp.dot(x, w_in_ref[...], preferred_element_type=f32) + b_in_ref[...])

    # ---- Encoder CGConv blocks (unrolled; num_layers static) ----
    for l in range(num_layers):
        x_j = gather(src_oh, h)        # source node feats per edge
        x_i = gather(dst_oh, h)        # target node feats per edge
        # split matmuls instead of lane-axis concat([x_i, x_j, ea])
        gate_pre = (jnp.dot(x_i, wf_i_ref[l], preferred_element_type=f32)
                    + jnp.dot(x_j, wf_j_ref[l], preferred_element_type=f32)
                    + jnp.dot(ea, wf_e_ref[l], preferred_element_type=f32)
                    + bf_ref[l])
        core_pre = (jnp.dot(x_i, ws_i_ref[l], preferred_element_type=f32)
                    + jnp.dot(x_j, ws_j_ref[l], preferred_element_type=f32)
                    + jnp.dot(ea, ws_e_ref[l], preferred_element_type=f32)
                    + bs_ref[l])
        msg = _sigmoid(gate_pre) * _softplus(core_pre)             # (E, H)
        # scatter-add over destination nodes as a standard (N,E)@(E,H) matmul
        h = h + jnp.dot(dst_oh_t, msg, preferred_element_type=f32)  # CGConv residual
        # CGConvBlock.ffw : Linear + ReLU
        h = _relu(jnp.dot(h, wm_ref[l], preferred_element_type=f32) + bm_ref[l])

    # ---- Edge head: first MLP layer fused with the [z_src, z_dst, ea] concat ----
    z_src = gather(src_oh, h)
    z_dst = gather(dst_oh, h)
    e = _relu(jnp.dot(z_src, we0_i_ref[...], preferred_element_type=f32)
              + jnp.dot(z_dst, we0_j_ref[...], preferred_element_type=f32)
              + jnp.dot(ea, we0_e_ref[...], preferred_element_type=f32)
              + be_ref[0])
    for l in range(1, num_layers):
        e = _relu(jnp.dot(e, we_ref[l], preferred_element_type=f32) + be_ref[l])

    # Output layer on a lane-padded weight slab -> unmasked lane-dense store.
    e_out = jnp.dot(e, wo_ref[...], preferred_element_type=f32) + bo_ref[...]

    z_ref[...] = h
    e_ref[...] = e_out


def bond_order_predictor(x, edge_index, edge_attr, params, num_layers=2):
    """Wrapper: passes index vectors + pre-sliced weights to the Pallas kernel."""
    N, F = x.shape
    E = edge_index.shape[1]
    De = edge_attr.shape[1]
    H = params["w_in"].shape[1]
    out_dim = params["w_out"].shape[1]
    # module constraint: edge-head width 2*F must equal 2*H + De
    assert 2 * F == 2 * H + De, "BondOrderPredictor requires 2*F == 2*hidden + De"

    src = edge_index[0].astype(jnp.int32)
    dst = edge_index[1].astype(jnp.int32)
    src_col = src.reshape(E, 1)
    dst_col = dst.reshape(E, 1)
    dst_row = dst.reshape(1, E)

    # pre-slice the concat-weights so the kernel uses split matmuls (no lane concat)
    wf, ws = params["w_f"], params["w_s"]
    wf_i, wf_j, wf_e = wf[:, :H], wf[:, H:2 * H], wf[:, 2 * H:]
    ws_i, ws_j, ws_e = ws[:, :H], ws[:, H:2 * H], ws[:, 2 * H:]
    we = params["w_e"]
    we0 = we[0]
    we0_i, we0_j, we0_e = we0[:H], we0[H:2 * H], we0[2 * H:]

    # lane-dense output slab: pad out_dim up to a multiple of 128
    o_pad = max(128, -(-out_dim // 128) * 128)
    wo_pad = jnp.zeros((2 * F, o_pad), jnp.float32).at[:, :out_dim].set(params["w_out"])
    bo_pad = jnp.zeros((1, o_pad), jnp.float32).at[:, :out_dim].set(params["b_out"])

    vmem = pl.BlockSpec(memory_space=pltpu.MemorySpace.VMEM)
    kernel = functools.partial(bond_order_kernel, num_layers)
    z, e_pad = pl.pallas_call(
        kernel,
        out_shape=(jax.ShapeDtypeStruct((N, H), jnp.float32),
                   jax.ShapeDtypeStruct((E, o_pad), jnp.float32)),
        in_specs=[vmem] * 24,
        out_specs=(vmem, vmem),
    )(src_col, dst_col, dst_row, x, edge_attr,
      params["w_in"], params["b_in"],
      wf_i, wf_j, wf_e, params["b_f"],
      ws_i, ws_j, ws_e, params["b_s"],
      params["w_mlp"], params["b_mlp"],
      we0_i, we0_j, we0_e, params["w_e"], params["b_e"],
      wo_pad, bo_pad)
    return z, e_pad[:, :out_dim]


def init_params(key, num_node_features, num_edge_features, hidden, out_dim, num_layers=2):
    F, De, H = num_node_features, num_edge_features, hidden
    cat_dim = 2 * H + De          # CGConv message input dim
    two_f = 2 * F                 # edge-head hidden dim (must equal 2*H + De)

    def lin(k, fan_in, fan_out):
        return (jax.random.normal(k, (fan_in, fan_out), jnp.float32)
                * (1.0 / jnp.sqrt(fan_in)))

    ks = jax.random.split(key, 12)
    params = {
        "w_in": lin(ks[0], F, H),
        "b_in": 0.1 * jax.random.normal(ks[1], (1, H), jnp.float32),
        "w_f": jnp.stack([lin(k, cat_dim, H) for k in jax.random.split(ks[2], num_layers)]),
        "b_f": 0.1 * jax.random.normal(ks[3], (num_layers, 1, H), jnp.float32),
        "w_s": jnp.stack([lin(k, cat_dim, H) for k in jax.random.split(ks[4], num_layers)]),
        "b_s": 0.1 * jax.random.normal(ks[5], (num_layers, 1, H), jnp.float32),
        "w_mlp": jnp.stack([lin(k, H, H) for k in jax.random.split(ks[6], num_layers)]),
        "b_mlp": 0.1 * jax.random.normal(ks[7], (num_layers, 1, H), jnp.float32),
        "w_e": jnp.stack([lin(k, two_f, two_f) for k in jax.random.split(ks[8], num_layers)]),
        "b_e": 0.1 * jax.random.normal(ks[9], (num_layers, 1, two_f), jnp.float32),
        "w_out": lin(ks[10], two_f, out_dim),
        "b_out": 0.1 * jax.random.normal(ks[11], (1, out_dim), jnp.float32),
    }
    return params


def reference_forward(x, edge_index, edge_attr, params, num_layers=2):
    """Pure-JAX reference (gather/segment_sum based) for correctness checking."""
    src, dst = edge_index[0], edge_index[1]
    N = x.shape[0]
    h = _relu(x @ params["w_in"] + params["b_in"])
    for l in range(num_layers):
        x_j = h[src]
        x_i = h[dst]
        zcat = jnp.concatenate([x_i, x_j, edge_attr], axis=-1)
        gate = _sigmoid(zcat @ params["w_f"][l] + params["b_f"][l])
        core = _softplus(zcat @ params["w_s"][l] + params["b_s"][l])
        msg = gate * core
        agg = jax.ops.segment_sum(msg, dst, num_segments=N)
        h = h + agg
        h = _relu(h @ params["w_mlp"][l] + params["b_mlp"][l])
    e = jnp.concatenate([h[src], h[dst], edge_attr], axis=-1)
    for l in range(num_layers):
        e = _relu(e @ params["w_e"][l] + params["b_e"][l])
    e = e @ params["w_out"] + params["b_out"]
    return h, e


if __name__ == "__main__":
    key = jax.random.PRNGKey(0)
    # Shapes chosen so the module's own constraint holds:
    #   2 * num_node_features == 2 * hidden_channels + num_edge_features
    N, E = 32, 64
    num_node_features = 10
    num_edge_features = 4
    hidden_channels = 8
    output_dim = 1
    num_layers = 2

    k_x, k_ei, k_ea, k_p = jax.random.split(key, 4)
    x = jax.random.normal(k_x, (N, num_node_features), jnp.float32)
    edge_index = jax.random.randint(k_ei, (2, E), 0, N, dtype=jnp.int32)
    edge_attr = jax.random.normal(k_ea, (E, num_edge_features), jnp.float32)

    params = init_params(k_p, num_node_features, num_edge_features,
                         hidden_channels, output_dim, num_layers)

    z, e = bond_order_predictor(x, edge_index, edge_attr, params, num_layers)
    jax.block_until_ready((z, e))

    z_ref, e_ref = reference_forward(x, edge_index, edge_attr, params, num_layers)
    assert z.shape == (N, hidden_channels) and e.shape == (E, output_dim)
    assert jnp.allclose(z, z_ref, rtol=1e-4, atol=1e-4)
    assert jnp.allclose(e, e_ref, rtol=1e-4, atol=1e-4)

    print("KERNEL_OK")
</pallas_src>

<mosaic_0001>
module attributes {stable_mosaic.version = 11 : i64} {
  func.func @bond_order_kernel(%arg0: memref<64x1xi32, #tpu.memory_space<vmem>>, %arg1: memref<64x1xi32, #tpu.memory_space<vmem>>, %arg2: memref<1x64xi32, #tpu.memory_space<vmem>>, %arg3: memref<32x10xf32, #tpu.memory_space<vmem>>, %arg4: memref<64x4xf32, #tpu.memory_space<vmem>>, %arg5: memref<10x8xf32, #tpu.memory_space<vmem>>, %arg6: memref<1x8xf32, #tpu.memory_space<vmem>>, %arg7: memref<2x8x8xf32, #tpu.memory_space<vmem>>, %arg8: memref<2x8x8xf32, #tpu.memory_space<vmem>>, %arg9: memref<2x4x8xf32, #tpu.memory_space<vmem>>, %arg10: memref<2x1x8xf32, #tpu.memory_space<vmem>>, %arg11: memref<2x8x8xf32, #tpu.memory_space<vmem>>, %arg12: memref<2x8x8xf32, #tpu.memory_space<vmem>>, %arg13: memref<2x4x8xf32, #tpu.memory_space<vmem>>, %arg14: memref<2x1x8xf32, #tpu.memory_space<vmem>>, %arg15: memref<2x8x8xf32, #tpu.memory_space<vmem>>, %arg16: memref<2x1x8xf32, #tpu.memory_space<vmem>>, %arg17: memref<8x20xf32, #tpu.memory_space<vmem>>, %arg18: memref<8x20xf32, #tpu.memory_space<vmem>>, %arg19: memref<4x20xf32, #tpu.memory_space<vmem>>, %arg20: memref<2x20x20xf32, #tpu.memory_space<vmem>>, %arg21: memref<2x1x20xf32, #tpu.memory_space<vmem>>, %arg22: memref<20x128xf32, #tpu.memory_space<vmem>>, %arg23: memref<1x128xf32, #tpu.memory_space<vmem>>, %arg24: memref<32x8xf32, #tpu.memory_space<vmem>>, %arg25: memref<64x128xf32, #tpu.memory_space<vmem>>) attributes {dimension_semantics = [], scalar_prefetch = 0 : i64, scratch_operands = 0 : i64, tpu.core_type = #tpu.core_type<tc>} {
    %c0 = arith.constant 0 : index
    %c0_0 = arith.constant 0 : index
    %0 = vector.load %arg3[%c0, %c0_0] : memref<32x10xf32, #tpu.memory_space<vmem>>, vector<32x10xf32>
    %c0_1 = arith.constant 0 : index
    %c0_2 = arith.constant 0 : index
    %1 = vector.load %arg4[%c0_1, %c0_2] : memref<64x4xf32, #tpu.memory_space<vmem>>, vector<64x4xf32>
    %2 = tpu.iota {dimensions = array<i32: 1>} : vector<64x32xi32>
    %c0_3 = arith.constant 0 : index
    %c0_4 = arith.constant 0 : index
    %3 = vector.load %arg0[%c0_3, %c0_4] : memref<64x1xi32, #tpu.memory_space<vmem>>, vector<64x1xi32>
    %4 = vector.broadcast %3 : vector<64x1xi32> to vector<64x32xi32>
    %5 = arith.cmpi eq, %4, %2 : vector<64x32xi32>
    %6 = arith.extui %5 : vector<64x32xi1> to vector<64x32xi32>
    %7 = arith.sitofp %6 : vector<64x32xi32> to vector<64x32xf32>
    %c0_5 = arith.constant 0 : index
    %c0_6 = arith.constant 0 : index
    %8 = vector.load %arg1[%c0_5, %c0_6] : memref<64x1xi32, #tpu.memory_space<vmem>>, vector<64x1xi32>
    %9 = vector.broadcast %8 : vector<64x1xi32> to vector<64x32xi32>
    %10 = arith.cmpi eq, %9, %2 : vector<64x32xi32>
    %11 = arith.extui %10 : vector<64x32xi1> to vector<64x32xi32>
    %12 = arith.sitofp %11 : vector<64x32xi32> to vector<64x32xf32>
    %13 = tpu.iota {dimensions = array<i32: 0>} : vector<32x64xi32>
    %c0_7 = arith.constant 0 : index
    %c0_8 = arith.constant 0 : index
    %14 = vector.load %arg2[%c0_7, %c0_8] : memref<1x64xi32, #tpu.memory_space<vmem>>, vector<1x64xi32>
    %15 = vector.broadcast %14 : vector<1x64xi32> to vector<32x64xi32>
    %16 = arith.cmpi eq, %15, %13 : vector<32x64xi32>
    %17 = arith.extui %16 : vector<32x64xi1> to vector<32x64xi32>
    %18 = arith.sitofp %17 : vector<32x64xi32> to vector<32x64xf32>
    %c0_9 = arith.constant 0 : index
    %c0_10 = arith.constant 0 : index
    %19 = vector.load %arg5[%c0_9, %c0_10] : memref<10x8xf32, #tpu.memory_space<vmem>>, vector<10x8xf32>
    %cst = arith.constant dense<0.000000e+00> : vector<32x8xf32>
    %20 = tpu.matmul %0, %19, %cst {dimension_numbers = #tpu.dot_dimension_numbers<[1], [0], [0], [1], [0, 0, 1, 1], [], []>} : vector<32x10xf32>, vector<10x8xf32>, vector<32x8xf32> -> vector<32x8xf32>
    %c0_11 = arith.constant 0 : index
    %c0_12 = arith.constant 0 : index
    %21 = vector.load %arg6[%c0_11, %c0_12] : memref<1x8xf32, #tpu.memory_space<vmem>>, vector<1x8xf32>
    %22 = vector.broadcast %21 : vector<1x8xf32> to vector<32x8xf32>
    %23 = arith.addf %20, %22 : vector<32x8xf32>
    %cst_13 = arith.constant 0.000000e+00 : f32
    %24 = vector.broadcast %cst_13 : f32 to vector<32x8xf32>
    %25 = arith.maximumf %23, %24 : vector<32x8xf32>
    %cst_14 = arith.constant dense<0.000000e+00> : vector<64x8xf32>
    %26 = tpu.matmul %7, %25, %cst_14 {dimension_numbers = #tpu.dot_dimension_numbers<[1], [0], [0], [1], [0, 0, 1, 1], [], []>} : vector<64x32xf32>, vector<32x8xf32>, vector<64x8xf32> -> vector<64x8xf32>
    %cst_15 = arith.constant dense<0.000000e+00> : vector<64x8xf32>
    %27 = tpu.matmul %12, %25, %cst_15 {dimension_numbers = #tpu.dot_dimension_numbers<[1], [0], [0], [1], [0, 0, 1, 1], [], []>} : vector<64x32xf32>, vector<32x8xf32>, vector<64x8xf32> -> vector<64x8xf32>
    %c0_16 = arith.constant 0 : index
    %c0_17 = arith.constant 0 : index
    %c0_18 = arith.constant 0 : index
    %28 = vector.load %arg7[%c0_16, %c0_17, %c0_18] : memref<2x8x8xf32, #tpu.memory_space<vmem>>, vector<1x8x8xf32>
    %29 = vector.shape_cast %28 : vector<1x8x8xf32> to vector<8x8xf32>
    %cst_19 = arith.constant dense<0.000000e+00> : vector<64x8xf32>
    %30 = tpu.matmul %27, %29, %cst_19 {dimension_numbers = #tpu.dot_dimension_numbers<[1], [0], [0], [1], [0, 0, 1, 1], [], []>} : vector<64x8xf32>, vector<8x8xf32>, vector<64x8xf32> -> vector<64x8xf32>
    %c0_20 = arith.constant 0 : index
    %c0_21 = arith.constant 0 : index
    %c0_22 = arith.constant 0 : index
    %31 = vector.load %arg8[%c0_20, %c0_21, %c0_22] : memref<2x8x8xf32, #tpu.memory_space<vmem>>, vector<1x8x8xf32>
    %32 = vector.shape_cast %31 : vector<1x8x8xf32> to vector<8x8xf32>
    %cst_23 = arith.constant dense<0.000000e+00> : vector<64x8xf32>
    %33 = tpu.matmul %26, %32, %cst_23 {dimension_numbers = #tpu.dot_dimension_numbers<[1], [0], [0], [1], [0, 0, 1, 1], [], []>} : vector<64x8xf32>, vector<8x8xf32>, vector<64x8xf32> -> vector<64x8xf32>
    %34 = arith.addf %30, %33 : vector<64x8xf32>
    %c0_24 = arith.constant 0 : index
    %c0_25 = arith.constant 0 : index
    %c0_26 = arith.constant 0 : index
    %35 = vector.load %arg9[%c0_24, %c0_25, %c0_26] : memref<2x4x8xf32, #tpu.memory_space<vmem>>, vector<1x4x8xf32>
    %36 = vector.shape_cast %35 : vector<1x4x8xf32> to vector<4x8xf32>
    %cst_27 = arith.constant dense<0.000000e+00> : vector<64x8xf32>
    %37 = tpu.matmul %1, %36, %cst_27 {dimension_numbers = #tpu.dot_dimension_numbers<[1], [0], [0], [1], [0, 0, 1, 1], [], []>} : vector<64x4xf32>, vector<4x8xf32>, vector<64x8xf32> -> vector<64x8xf32>
    %38 = arith.addf %34, %37 : vector<64x8xf32>
    %c0_28 = arith.constant 0 : index
    %c0_29 = arith.constant 0 : index
    %c0_30 = arith.constant 0 : index
    %39 = vector.load %arg10[%c0_28, %c0_29, %c0_30] : memref<2x1x8xf32, #tpu.memory_space<vmem>>, vector<1x1x8xf32>
    %40 = vector.shape_cast %39 : vector<1x1x8xf32> to vector<1x8xf32>
    %41 = vector.broadcast %40 : vector<1x8xf32> to vector<64x8xf32>
    %42 = arith.addf %38, %41 : vector<64x8xf32>
    %c0_31 = arith.constant 0 : index
    %c0_32 = arith.constant 0 : index
    %c0_33 = arith.constant 0 : index
    %43 = vector.load %arg11[%c0_31, %c0_32, %c0_33] : memref<2x8x8xf32, #tpu.memory_space<vmem>>, vector<1x8x8xf32>
    %44 = vector.shape_cast %43 : vector<1x8x8xf32> to vector<8x8xf32>
    %cst_34 = arith.constant dense<0.000000e+00> : vector<64x8xf32>
    %45 = tpu.matmul %27, %44, %cst_34 {dimension_numbers = #tpu.dot_dimension_numbers<[1], [0], [0], [1], [0, 0, 1, 1], [], []>} : vector<64x8xf32>, vector<8x8xf32>, vector<64x8xf32> -> vector<64x8xf32>
    %c0_35 = arith.constant 0 : index
    %c0_36 = arith.constant 0 : index
    %c0_37 = arith.constant 0 : index
    %46 = vector.load %arg12[%c0_35, %c0_36, %c0_37] : memref<2x8x8xf32, #tpu.memory_space<vmem>>, vector<1x8x8xf32>
    %47 = vector.shape_cast %46 : vector<1x8x8xf32> to vector<8x8xf32>
    %cst_38 = arith.constant dense<0.000000e+00> : vector<64x8xf32>
    %48 = tpu.matmul %26, %47, %cst_38 {dimension_numbers = #tpu.dot_dimension_numbers<[1], [0], [0], [1], [0, 0, 1, 1], [], []>} : vector<64x8xf32>, vector<8x8xf32>, vector<64x8xf32> -> vector<64x8xf32>
    %49 = arith.addf %45, %48 : vector<64x8xf32>
    %c0_39 = arith.constant 0 : index
    %c0_40 = arith.constant 0 : index
    %c0_41 = arith.constant 0 : index
    %50 = vector.load %arg13[%c0_39, %c0_40, %c0_41] : memref<2x4x8xf32, #tpu.memory_space<vmem>>, vector<1x4x8xf32>
    %51 = vector.shape_cast %50 : vector<1x4x8xf32> to vector<4x8xf32>
    %cst_42 = arith.constant dense<0.000000e+00> : vector<64x8xf32>
    %52 = tpu.matmul %1, %51, %cst_42 {dimension_numbers = #tpu.dot_dimension_numbers<[1], [0], [0], [1], [0, 0, 1, 1], [], []>} : vector<64x4xf32>, vector<4x8xf32>, vector<64x8xf32> -> vector<64x8xf32>
    %53 = arith.addf %49, %52 : vector<64x8xf32>
    %c0_43 = arith.constant 0 : index
    %c0_44 = arith.constant 0 : index
    %c0_45 = arith.constant 0 : index
    %54 = vector.load %arg14[%c0_43, %c0_44, %c0_45] : memref<2x1x8xf32, #tpu.memory_space<vmem>>, vector<1x1x8xf32>
    %55 = vector.shape_cast %54 : vector<1x1x8xf32> to vector<1x8xf32>
    %56 = vector.broadcast %55 : vector<1x8xf32> to vector<64x8xf32>
    %57 = arith.addf %53, %56 : vector<64x8xf32>
    %cst_46 = arith.constant 0.000000e+00 : f32
    %58 = vector.broadcast %cst_46 : f32 to vector<64x8xf32>
    %59 = arith.subf %58, %42 : vector<64x8xf32>
    %60 = math.exp %59 : vector<64x8xf32>
    %cst_47 = arith.constant 1.000000e+00 : f32
    %61 = vector.broadcast %cst_47 : f32 to vector<64x8xf32>
    %62 = arith.addf %61, %60 : vector<64x8xf32>
    %cst_48 = arith.constant 1.000000e+00 : f32
    %63 = vector.broadcast %cst_48 : f32 to vector<64x8xf32>
    %64 = arith.divf %63, %62 : vector<64x8xf32>
    %cst_49 = arith.constant 0.000000e+00 : f32
    %65 = vector.broadcast %cst_49 : f32 to vector<64x8xf32>
    %66 = arith.maximumf %57, %65 : vector<64x8xf32>
    %67 = math.absf %57 : vector<64x8xf32>
    %cst_50 = arith.constant 0.000000e+00 : f32
    %68 = vector.broadcast %cst_50 : f32 to vector<64x8xf32>
    %69 = arith.subf %68, %67 : vector<64x8xf32>
    %70 = math.exp %69 : vector<64x8xf32>
    %cst_51 = arith.constant 1.000000e+00 : f32
    %71 = vector.broadcast %cst_51 : f32 to vector<64x8xf32>
    %72 = arith.addf %71, %70 : vector<64x8xf32>
    %73 = math.log %72 : vector<64x8xf32>
    %74 = arith.addf %66, %73 : vector<64x8xf32>
    %75 = arith.mulf %64, %74 : vector<64x8xf32>
    %cst_52 = arith.constant dense<0.000000e+00> : vector<32x8xf32>
    %76 = tpu.matmul %18, %75, %cst_52 {dimension_numbers = #tpu.dot_dimension_numbers<[1], [0], [0], [1], [0, 0, 1, 1], [], []>} : vector<32x64xf32>, vector<64x8xf32>, vector<32x8xf32> -> vector<32x8xf32>
    %77 = arith.addf %25, %76 : vector<32x8xf32>
    %c0_53 = arith.constant 0 : index
    %c0_54 = arith.constant 0 : index
    %c0_55 = arith.constant 0 : index
    %78 = vector.load %arg15[%c0_53, %c0_54, %c0_55] : memref<2x8x8xf32, #tpu.memory_space<vmem>>, vector<1x8x8xf32>
    %79 = vector.shape_cast %78 : vector<1x8x8xf32> to vector<8x8xf32>
    %cst_56 = arith.constant dense<0.000000e+00> : vector<32x8xf32>
    %80 = tpu.matmul %77, %79, %cst_56 {dimension_numbers = #tpu.dot_dimension_numbers<[1], [0], [0], [1], [0, 0, 1, 1], [], []>} : vector<32x8xf32>, vector<8x8xf32>, vector<32x8xf32> -> vector<32x8xf32>
    %c0_57 = arith.constant 0 : index
    %c0_58 = arith.constant 0 : index
    %c0_59 = arith.constant 0 : index
    %81 = vector.load %arg16[%c0_57, %c0_58, %c0_59] : memref<2x1x8xf32, #tpu.memory_space<vmem>>, vector<1x1x8xf32>
    %82 = vector.shape_cast %81 : vector<1x1x8xf32> to vector<1x8xf32>
    %83 = vector.broadcast %82 : vector<1x8xf32> to vector<32x8xf32>
    %84 = arith.addf %80, %83 : vector<32x8xf32>
    %cst_60 = arith.constant 0.000000e+00 : f32
    %85 = vector.broadcast %cst_60 : f32 to vector<32x8xf32>
    %86 = arith.maximumf %84, %85 : vector<32x8xf32>
    %cst_61 = arith.constant dense<0.000000e+00> : vector<64x8xf32>
    %87 = tpu.matmul %7, %86, %cst_61 {dimension_numbers = #tpu.dot_dimension_numbers<[1], [0], [0], [1], [0, 0, 1, 1], [], []>} : vector<64x32xf32>, vector<32x8xf32>, vector<64x8xf32> -> vector<64x8xf32>
    %cst_62 = arith.constant dense<0.000000e+00> : vector<64x8xf32>
    %88 = tpu.matmul %12, %86, %cst_62 {dimension_numbers = #tpu.dot_dimension_numbers<[1], [0], [0], [1], [0, 0, 1, 1], [], []>} : vector<64x32xf32>, vector<32x8xf32>, vector<64x8xf32> -> vector<64x8xf32>
    %c1 = arith.constant 1 : index
    %c0_63 = arith.constant 0 : index
    %c0_64 = arith.constant 0 : index
    %89 = vector.load %arg7[%c1, %c0_63, %c0_64] : memref<2x8x8xf32, #tpu.memory_space<vmem>>, vector<1x8x8xf32>
    %90 = vector.shape_cast %89 : vector<1x8x8xf32> to vector<8x8xf32>
    %cst_65 = arith.constant dense<0.000000e+00> : vector<64x8xf32>
    %91 = tpu.matmul %88, %90, %cst_65 {dimension_numbers = #tpu.dot_dimension_numbers<[1], [0], [0], [1], [0, 0, 1, 1], [], []>} : vector<64x8xf32>, vector<8x8xf32>, vector<64x8xf32> -> vector<64x8xf32>
    %c1_66 = arith.constant 1 : index
    %c0_67 = arith.constant 0 : index
    %c0_68 = arith.constant 0 : index
    %92 = vector.load %arg8[%c1_66, %c0_67, %c0_68] : memref<2x8x8xf32, #tpu.memory_space<vmem>>, vector<1x8x8xf32>
    %93 = vector.shape_cast %92 : vector<1x8x8xf32> to vector<8x8xf32>
    %cst_69 = arith.constant dense<0.000000e+00> : vector<64x8xf32>
    %94 = tpu.matmul %87, %93, %cst_69 {dimension_numbers = #tpu.dot_dimension_numbers<[1], [0], [0], [1], [0, 0, 1, 1], [], []>} : vector<64x8xf32>, vector<8x8xf32>, vector<64x8xf32> -> vector<64x8xf32>
    %95 = arith.addf %91, %94 : vector<64x8xf32>
    %c1_70 = arith.constant 1 : index
    %c0_71 = arith.constant 0 : index
    %c0_72 = arith.constant 0 : index
    %96 = vector.load %arg9[%c1_70, %c0_71, %c0_72] : memref<2x4x8xf32, #tpu.memory_space<vmem>>, vector<1x4x8xf32>
    %97 = vector.shape_cast %96 : vector<1x4x8xf32> to vector<4x8xf32>
    %cst_73 = arith.constant dense<0.000000e+00> : vector<64x8xf32>
    %98 = tpu.matmul %1, %97, %cst_73 {dimension_numbers = #tpu.dot_dimension_numbers<[1], [0], [0], [1], [0, 0, 1, 1], [], []>} : vector<64x4xf32>, vector<4x8xf32>, vector<64x8xf32> -> vector<64x8xf32>
    %99 = arith.addf %95, %98 : vector<64x8xf32>
    %c1_74 = arith.constant 1 : index
    %c0_75 = arith.constant 0 : index
    %c0_76 = arith.constant 0 : index
    %100 = vector.load %arg10[%c1_74, %c0_75, %c0_76] : memref<2x1x8xf32, #tpu.memory_space<vmem>>, vector<1x1x8xf32>
    %101 = vector.shape_cast %100 : vector<1x1x8xf32> to vector<1x8xf32>
    %102 = vector.broadcast %101 : vector<1x8xf32> to vector<64x8xf32>
    %103 = arith.addf %99, %102 : vector<64x8xf32>
    %c1_77 = arith.constant 1 : index
    %c0_78 = arith.constant 0 : index
    %c0_79 = arith.constant 0 : index
    %104 = vector.load %arg11[%c1_77, %c0_78, %c0_79] : memref<2x8x8xf32, #tpu.memory_space<vmem>>, vector<1x8x8xf32>
    %105 = vector.shape_cast %104 : vector<1x8x8xf32> to vector<8x8xf32>
    %cst_80 = arith.constant dense<0.000000e+00> : vector<64x8xf32>
    %106 = tpu.matmul %88, %105, %cst_80 {dimension_numbers = #tpu.dot_dimension_numbers<[1], [0], [0], [1], [0, 0, 1, 1], [], []>} : vector<64x8xf32>, vector<8x8xf32>, vector<64x8xf32> -> vector<64x8xf32>
    %c1_81 = arith.constant 1 : index
    %c0_82 = arith.constant 0 : index
    %c0_83 = arith.constant 0 : index
    %107 = vector.load %arg12[%c1_81, %c0_82, %c0_83] : memref<2x8x8xf32, #tpu.memory_space<vmem>>, vector<1x8x8xf32>
    %108 = vector.shape_cast %107 : vector<1x8x8xf32> to vector<8x8xf32>
    %cst_84 = arith.constant dense<0.000000e+00> : vector<64x8xf32>
    %109 = tpu.matmul %87, %108, %cst_84 {dimension_numbers = #tpu.dot_dimension_numbers<[1], [0], [0], [1], [0, 0, 1, 1], [], []>} : vector<64x8xf32>, vector<8x8xf32>, vector<64x8xf32> -> vector<64x8xf32>
    %110 = arith.addf %106, %109 : vector<64x8xf32>
    %c1_85 = arith.constant 1 : index
    %c0_86 = arith.constant 0 : index
    %c0_87 = arith.constant 0 : index
    %111 = vector.load %arg13[%c1_85, %c0_86, %c0_87] : memref<2x4x8xf32, #tpu.memory_space<vmem>>, vector<1x4x8xf32>
    %112 = vector.shape_cast %111 : vector<1x4x8xf32> to vector<4x8xf32>
    %cst_88 = arith.constant dense<0.000000e+00> : vector<64x8xf32>
    %113 = tpu.matmul %1, %112, %cst_88 {dimension_numbers = #tpu.dot_dimension_numbers<[1], [0], [0], [1], [0, 0, 1, 1], [], []>} : vector<64x4xf32>, vector<4x8xf32>, vector<64x8xf32> -> vector<64x8xf32>
    %114 = arith.addf %110, %113 : vector<64x8xf32>
    %c1_89 = arith.constant 1 : index
    %c0_90 = arith.constant 0 : index
    %c0_91 = arith.constant 0 : index
    %115 = vector.load %arg14[%c1_89, %c0_90, %c0_91] : memref<2x1x8xf32, #tpu.memory_space<vmem>>, vector<1x1x8xf32>
    %116 = vector.shape_cast %115 : vector<1x1x8xf32> to vector<1x8xf32>
    %117 = vector.broadcast %116 : vector<1x8xf32> to vector<64x8xf32>
    %118 = arith.addf %114, %117 : vector<64x8xf32>
    %cst_92 = arith.constant 0.000000e+00 : f32
    %119 = vector.broadcast %cst_92 : f32 to vector<64x8xf32>
    %120 = arith.subf %119, %103 : vector<64x8xf32>
    %121 = math.exp %120 : vector<64x8xf32>
    %cst_93 = arith.constant 1.000000e+00 : f32
    %122 = vector.broadcast %cst_93 : f32 to vector<64x8xf32>
    %123 = arith.addf %122, %121 : vector<64x8xf32>
    %cst_94 = arith.constant 1.000000e+00 : f32
    %124 = vector.broadcast %cst_94 : f32 to vector<64x8xf32>
    %125 = arith.divf %124, %123 : vector<64x8xf32>
    %cst_95 = arith.constant 0.000000e+00 : f32
    %126 = vector.broadcast %cst_95 : f32 to vector<64x8xf32>
    %127 = arith.maximumf %118, %126 : vector<64x8xf32>
    %128 = math.absf %118 : vector<64x8xf32>
    %cst_96 = arith.constant 0.000000e+00 : f32
    %129 = vector.broadcast %cst_96 : f32 to vector<64x8xf32>
    %130 = arith.subf %129, %128 : vector<64x8xf32>
    %131 = math.exp %130 : vector<64x8xf32>
    %cst_97 = arith.constant 1.000000e+00 : f32
    %132 = vector.broadcast %cst_97 : f32 to vector<64x8xf32>
    %133 = arith.addf %132, %131 : vector<64x8xf32>
    %134 = math.log %133 : vector<64x8xf32>
    %135 = arith.addf %127, %134 : vector<64x8xf32>
    %136 = arith.mulf %125, %135 : vector<64x8xf32>
    %cst_98 = arith.constant dense<0.000000e+00> : vector<32x8xf32>
    %137 = tpu.matmul %18, %136, %cst_98 {dimension_numbers = #tpu.dot_dimension_numbers<[1], [0], [0], [1], [0, 0, 1, 1], [], []>} : vector<32x64xf32>, vector<64x8xf32>, vector<32x8xf32> -> vector<32x8xf32>
    %138 = arith.addf %86, %137 : vector<32x8xf32>
    %c1_99 = arith.constant 1 : index
    %c0_100 = arith.constant 0 : index
    %c0_101 = arith.constant 0 : index
    %139 = vector.load %arg15[%c1_99, %c0_100, %c0_101] : memref<2x8x8xf32, #tpu.memory_space<vmem>>, vector<1x8x8xf32>
    %140 = vector.shape_cast %139 : vector<1x8x8xf32> to vector<8x8xf32>
    %cst_102 = arith.constant dense<0.000000e+00> : vector<32x8xf32>
    %141 = tpu.matmul %138, %140, %cst_102 {dimension_numbers = #tpu.dot_dimension_numbers<[1], [0], [0], [1], [0, 0, 1, 1], [], []>} : vector<32x8xf32>, vector<8x8xf32>, vector<32x8xf32> -> vector<32x8xf32>
    %c1_103 = arith.constant 1 : index
    %c0_104 = arith.constant 0 : index
    %c0_105 = arith.constant 0 : index
    %142 = vector.load %arg16[%c1_103, %c0_104, %c0_105] : memref<2x1x8xf32, #tpu.memory_space<vmem>>, vector<1x1x8xf32>
    %143 = vector.shape_cast %142 : vector<1x1x8xf32> to vector<1x8xf32>
    %144 = vector.broadcast %143 : vector<1x8xf32> to vector<32x8xf32>
    %145 = arith.addf %141, %144 : vector<32x8xf32>
    %cst_106 = arith.constant 0.000000e+00 : f32
    %146 = vector.broadcast %cst_106 : f32 to vector<32x8xf32>
    %147 = arith.maximumf %145, %146 : vector<32x8xf32>
    %cst_107 = arith.constant dense<0.000000e+00> : vector<64x8xf32>
    %148 = tpu.matmul %7, %147, %cst_107 {dimension_numbers = #tpu.dot_dimension_numbers<[1], [0], [0], [1], [0, 0, 1, 1], [], []>} : vector<64x32xf32>, vector<32x8xf32>, vector<64x8xf32> -> vector<64x8xf32>
    %cst_108 = arith.constant dense<0.000000e+00> : vector<64x8xf32>
    %149 = tpu.matmul %12, %147, %cst_108 {dimension_numbers = #tpu.dot_dimension_numbers<[1], [0], [0], [1], [0, 0, 1, 1], [], []>} : vector<64x32xf32>, vector<32x8xf32>, vector<64x8xf32> -> vector<64x8xf32>
    %c0_109 = arith.constant 0 : index
    %c0_110 = arith.constant 0 : index
    %150 = vector.load %arg17[%c0_109, %c0_110] : memref<8x20xf32, #tpu.memory_space<vmem>>, vector<8x20xf32>
    %cst_111 = arith.constant dense<0.000000e+00> : vector<64x20xf32>
    %151 = tpu.matmul %148, %150, %cst_111 {dimension_numbers = #tpu.dot_dimension_numbers<[1], [0], [0], [1], [0, 0, 1, 1], [], []>} : vector<64x8xf32>, vector<8x20xf32>, vector<64x20xf32> -> vector<64x20xf32>
    %c0_112 = arith.constant 0 : index
    %c0_113 = arith.constant 0 : index
    %152 = vector.load %arg18[%c0_112, %c0_113] : memref<8x20xf32, #tpu.memory_space<vmem>>, vector<8x20xf32>
    %cst_114 = arith.constant dense<0.000000e+00> : vector<64x20xf32>
    %153 = tpu.matmul %149, %152, %cst_114 {dimension_numbers = #tpu.dot_dimension_numbers<[1], [0], [0], [1], [0, 0, 1, 1], [], []>} : vector<64x8xf32>, vector<8x20xf32>, vector<64x20xf32> -> vector<64x20xf32>
    %154 = arith.addf %151, %153 : vector<64x20xf32>
    %c0_115 = arith.constant 0 : index
    %c0_116 = arith.constant 0 : index
    %155 = vector.load %arg19[%c0_115, %c0_116] : memref<4x20xf32, #tpu.memory_space<vmem>>, vector<4x20xf32>
    %cst_117 = arith.constant dense<0.000000e+00> : vector<64x20xf32>
    %156 = tpu.matmul %1, %155, %cst_117 {dimension_numbers = #tpu.dot_dimension_numbers<[1], [0], [0], [1], [0, 0, 1, 1], [], []>} : vector<64x4xf32>, vector<4x20xf32>, vector<64x20xf32> -> vector<64x20xf32>
    %157 = arith.addf %154, %156 : vector<64x20xf32>
    %c0_118 = arith.constant 0 : index
    %c0_119 = arith.constant 0 : index
    %c0_120 = arith.constant 0 : index
    %158 = vector.load %arg21[%c0_118, %c0_119, %c0_120] : memref<2x1x20xf32, #tpu.memory_space<vmem>>, vector<1x1x20xf32>
    %159 = vector.shape_cast %158 : vector<1x1x20xf32> to vector<1x20xf32>
    %160 = vector.broadcast %159 : vector<1x20xf32> to vector<64x20xf32>
    %161 = arith.addf %157, %160 : vector<64x20xf32>
    %cst_121 = arith.constant 0.000000e+00 : f32
    %162 = vector.broadcast %cst_121 : f32 to vector<64x20xf32>
    %163 = arith.maximumf %161, %162 : vector<64x20xf32>
    %c1_122 = arith.constant 1 : index
    %c0_123 = arith.constant 0 : index
    %c0_124 = arith.constant 0 : index
    %164 = vector.load %arg20[%c1_122, %c0_123, %c0_124] : memref<2x20x20xf32, #tpu.memory_space<vmem>>, vector<1x20x20xf32>
    %165 = vector.shape_cast %164 : vector<1x20x20xf32> to vector<20x20xf32>
    %cst_125 = arith.constant dense<0.000000e+00> : vector<64x20xf32>
    %166 = tpu.matmul %163, %165, %cst_125 {dimension_numbers = #tpu.dot_dimension_numbers<[1], [0], [0], [1], [0, 0, 1, 1], [], []>} : vector<64x20xf32>, vector<20x20xf32>, vector<64x20xf32> -> vector<64x20xf32>
    %c1_126 = arith.constant 1 : index
    %c0_127 = arith.constant 0 : index
    %c0_128 = arith.constant 0 : index
    %167 = vector.load %arg21[%c1_126, %c0_127, %c0_128] : memref<2x1x20xf32, #tpu.memory_space<vmem>>, vector<1x1x20xf32>
    %168 = vector.shape_cast %167 : vector<1x1x20xf32> to vector<1x20xf32>
    %169 = vector.broadcast %168 : vector<1x20xf32> to vector<64x20xf32>
    %170 = arith.addf %166, %169 : vector<64x20xf32>
    %cst_129 = arith.constant 0.000000e+00 : f32
    %171 = vector.broadcast %cst_129 : f32 to vector<64x20xf32>
    %172 = arith.maximumf %170, %171 : vector<64x20xf32>
    %c0_130 = arith.constant 0 : index
    %c0_131 = arith.constant 0 : index
    %173 = vector.load %arg22[%c0_130, %c0_131] : memref<20x128xf32, #tpu.memory_space<vmem>>, vector<20x128xf32>
    %cst_132 = arith.constant dense<0.000000e+00> : vector<64x128xf32>
    %174 = tpu.matmul %172, %173, %cst_132 {dimension_numbers = #tpu.dot_dimension_numbers<[1], [0], [0], [1], [0, 0, 1, 1], [], []>} : vector<64x20xf32>, vector<20x128xf32>, vector<64x128xf32> -> vector<64x128xf32>
    %c0_133 = arith.constant 0 : index
    %c0_134 = arith.constant 0 : index
    %175 = vector.load %arg23[%c0_133, %c0_134] : memref<1x128xf32, #tpu.memory_space<vmem>>, vector<1x128xf32>
    %176 = vector.broadcast %175 : vector<1x128xf32> to vector<64x128xf32>
    %177 = arith.addf %174, %176 : vector<64x128xf32>
    %c0_135 = arith.constant 0 : index
    %c0_136 = arith.constant 0 : index
    %178 = vector.load %arg24[%c0_135, %c0_136] : memref<32x8xf32, #tpu.memory_space<vmem>>, vector<32x8xf32>
    tpu.vector_store %arg24[%c0_135, %c0_136], %147 {strides = array<i32>} : memref<32x8xf32, #tpu.memory_space<vmem>>, vector<32x8xf32>,
    %c0_137 = arith.constant 0 : index
    %c0_138 = arith.constant 0 : index
    %179 = vector.load %arg25[%c0_137, %c0_138] : memref<64x128xf32, #tpu.memory_space<vmem>>, vector<64x128xf32>
    tpu.vector_store %arg25[%c0_137, %c0_138], %177 {strides = array<i32>} : memref<64x128xf32, #tpu.memory_space<vmem>>, vector<64x128xf32>,
    return
  }
}

</mosaic_0001>

<llo_original>
// kernel: tpu_custom_call.1
$region0: #{tpu_custom_call.1}
  #allocation0 [shape = 'u32[]', space=smem, size = 0x4, offset = 0x4, fixed_abs, tag = 'smem constant byte address 0x4 - core index']
  #allocation1 [shape = 'u32[144,128]{1,0:T(1,128)}', space=vmem, size = 0x12000, scoped, tag = 'internal scratch']
  %s0 = inlined_call_operand.vmem [shape: s32[64,1], index: 0, kind: input, shape index: {}]
  %s1 = inlined_call_operand.vmem [shape: s32[64,1], index: 1, kind: input, shape index: {}]
  %s2 = inlined_call_operand.vmem [shape: s32[1,64], index: 2, kind: input, shape index: {}]
  %s3 = inlined_call_operand.vmem [shape: f32[32,10], index: 3, kind: input, shape index: {}]
  %s4 = inlined_call_operand.vmem [shape: f32[64,4], index: 4, kind: input, shape index: {}]
  %s5 = inlined_call_operand.vmem [shape: f32[10,8], index: 5, kind: input, shape index: {}]
  %s6 = inlined_call_operand.vmem [shape: f32[1,8], index: 6, kind: input, shape index: {}]
  %s7 = inlined_call_operand.vmem [shape: f32[2,8,8], index: 7, kind: input, shape index: {}]
  %s8 = inlined_call_operand.vmem [shape: f32[2,8,8], index: 8, kind: input, shape index: {}]
  %s9 = inlined_call_operand.vmem [shape: f32[2,4,8], index: 9, kind: input, shape index: {}]
  %s10 = inlined_call_operand.vmem [shape: f32[2,1,8], index: 10, kind: input, shape index: {}]
  %s11 = inlined_call_operand.vmem [shape: f32[2,8,8], index: 11, kind: input, shape index: {}]
  %s12 = inlined_call_operand.vmem [shape: f32[2,8,8], index: 12, kind: input, shape index: {}]
  %s13 = inlined_call_operand.vmem [shape: f32[2,4,8], index: 13, kind: input, shape index: {}]
  %s14 = inlined_call_operand.vmem [shape: f32[2,1,8], index: 14, kind: input, shape index: {}]
  %s15 = inlined_call_operand.vmem [shape: f32[2,8,8], index: 15, kind: input, shape index: {}]
  %s16 = inlined_call_operand.vmem [shape: f32[2,1,8], index: 16, kind: input, shape index: {}]
  %s17 = inlined_call_operand.vmem [shape: f32[8,20], index: 17, kind: input, shape index: {}]
  %s18 = inlined_call_operand.vmem [shape: f32[8,20], index: 18, kind: input, shape index: {}]
  %s19 = inlined_call_operand.vmem [shape: f32[4,20], index: 19, kind: input, shape index: {}]
  %s20 = inlined_call_operand.vmem [shape: f32[2,20,20], index: 20, kind: input, shape index: {}]
  %s21 = inlined_call_operand.vmem [shape: f32[2,1,20], index: 21, kind: input, shape index: {}]
  %s22 = inlined_call_operand.vmem [shape: f32[20,128], index: 22, kind: input, shape index: {}]
  %s23 = inlined_call_operand.vmem [shape: f32[1,128], index: 23, kind: input, shape index: {}]
  %s24 = inlined_call_operand.vmem [shape: f32[32,8], index: 24, kind: output, shape index: {0}]
  %s25 = inlined_call_operand.hbm [shape: f32[64,128], index: 25, kind: output, shape index: {1}]
  %26 = xla_tuple %s24, %s25
  %s27 = sld [smem:[#allocation0]]
  $region114: #{tpu_custom_call.1} parent=0
    _
  %s29 = ssub.s32 1, %s27
  %s30 = scalar_select 0, %s29, %s27
  $region1: #{tpu_custom_call.1} parent=0
    #allocation2 [shape = 'u8[32768]{0}', space=vmem, size = 0x8000, scoped, tag = 'output window, operand 1, single buffered']
    #allocation3 [shape = 's32[1]{0}', space=sflag, size = 0x4, scoped, tag = 'scoped memory for tpu_custom_call.1']
    %31 = vsyncpa [#allocation3], 0
    // Predicated region
    $region2: #{tpu_custom_call.1} parent=1 // pred_check
      _
    $region3: #{tpu_custom_call.1} parent=1 // pred_check_branch
      %33 = sbr.rel (0) target = $region5
    $region4: #{tpu_custom_call.1} parent=1 // pred_region
      _
    $region5: #{tpu_custom_call.1} parent=1 // pred_fallthru
      _
    // Predicated region
    $region6: #{tpu_custom_call.1} parent=1 // pred_check
      _
    $region7: #{tpu_custom_call.1} parent=1 // pred_check_branch
      %35 = sbr.rel (0) target = $region9
    $region8: #{tpu_custom_call.1} parent=1 // pred_region
      _
    $region9: #{tpu_custom_call.1} parent=1 // pred_fallthru
      _
    // Predicated region
    $region10: #{tpu_custom_call.1} parent=1 // pred_check
      _
    $region11: #{tpu_custom_call.1} parent=1 // pred_check_branch
      %37 = sbr.rel (0) target = $region13
    $region12: #{tpu_custom_call.1} parent=1 // pred_region
      _
    $region13: #{tpu_custom_call.1} parent=1 // pred_fallthru
      _
    // Predicated region
    $region14: #{tpu_custom_call.1} parent=1 // pred_check
      _
    $region15: #{tpu_custom_call.1} parent=1 // pred_check_branch
      %39 = sbr.rel (0) target = $region17
    $region16: #{tpu_custom_call.1} parent=1 // pred_region
      _
    $region17: #{tpu_custom_call.1} parent=1 // pred_fallthru
      _
    // Predicated region
    $region18: #{tpu_custom_call.1} parent=1 // pred_check
      _
    $region19: #{tpu_custom_call.1} parent=1 // pred_check_branch
      %41 = sbr.rel (0) target = $region21
    $region20: #{tpu_custom_call.1} parent=1 // pred_region
      _
    $region21: #{tpu_custom_call.1} parent=1 // pred_fallthru
      _
    // Predicated region
    $region22: #{tpu_custom_call.1} parent=1 // pred_check
      _
    $region23: #{tpu_custom_call.1} parent=1 // pred_check_branch
      %43 = sbr.rel (0) target = $region25
    $region24: #{tpu_custom_call.1} parent=1 // pred_region
      _
    $region25: #{tpu_custom_call.1} parent=1 // pred_fallthru
      _
    // Predicated region
    $region26: #{tpu_custom_call.1} parent=1 // pred_check
      _
    $region27: #{tpu_custom_call.1} parent=1 // pred_check_branch
      %45 = sbr.rel (0) target = $region29
    $region28: #{tpu_custom_call.1} parent=1 // pred_region
      _
    $region29: #{tpu_custom_call.1} parent=1 // pred_fallthru
      _
    // Predicated region
    $region30: #{tpu_custom_call.1} parent=1 // pred_check
      _
    $region31: #{tpu_custom_call.1} parent=1 // pred_check_branch
      %47 = sbr.rel (0) target = $region33
    $region32: #{tpu_custom_call.1} parent=1 // pred_region
      _
    $region33: #{tpu_custom_call.1} parent=1 // pred_fallthru
      _
    // Predicated region
    $region34: #{tpu_custom_call.1} parent=1 // pred_check
      _
    $region35: #{tpu_custom_call.1} parent=1 // pred_check_branch
      %49 = sbr.rel (0) target = $region37
    $region36: #{tpu_custom_call.1} parent=1 // pred_region
      _
    $region37: #{tpu_custom_call.1} parent=1 // pred_fallthru
      _
    // Predicated region
    $region38: #{tpu_custom_call.1} parent=1 // pred_check
      _
    $region39: #{tpu_custom_call.1} parent=1 // pred_check_branch
      %51 = sbr.rel (0) target = $region41
    $region40: #{tpu_custom_call.1} parent=1 // pred_region
      _
    $region41: #{tpu_custom_call.1} parent=1 // pred_fallthru
      _
    // Predicated region
    $region42: #{tpu_custom_call.1} parent=1 // pred_check
      _
    $region43: #{tpu_custom_call.1} parent=1 // pred_check_branch
      %53 = sbr.rel (0) target = $region45
    $region44: #{tpu_custom_call.1} parent=1 // pred_region
      _
    $region45: #{tpu_custom_call.1} parent=1 // pred_fallthru
      _
    // Predicated region
    $region46: #{tpu_custom_call.1} parent=1 // pred_check
      _
    $region47: #{tpu_custom_call.1} parent=1 // pred_check_branch
      %55 = sbr.rel (0) target = $region49
    $region48: #{tpu_custom_call.1} parent=1 // pred_region
      _
    $region49: #{tpu_custom_call.1} parent=1 // pred_fallthru
      _
    // Predicated region
    $region50: #{tpu_custom_call.1} parent=1 // pred_check
      _
    $region51: #{tpu_custom_call.1} parent=1 // pred_check_branch
      %57 = sbr.rel (0) target = $region53
    $region52: #{tpu_custom_call.1} parent=1 // pred_region
      _
    $region53: #{tpu_custom_call.1} parent=1 // pred_fallthru
      _
    // Predicated region
    $region54: #{tpu_custom_call.1} parent=1 // pred_check
      _
    $region55: #{tpu_custom_call.1} parent=1 // pred_check_branch
      %59 = sbr.rel (0) target = $region57
    $region56: #{tpu_custom_call.1} parent=1 // pred_region
      _
    $region57: #{tpu_custom_call.1} parent=1 // pred_fallthru
      _
    // Predicated region
    $region58: #{tpu_custom_call.1} parent=1 // pred_check
      _
    $region59: #{tpu_custom_call.1} parent=1 // pred_check_branch
      %61 = sbr.rel (0) target = $region61
    $region60: #{tpu_custom_call.1} parent=1 // pred_region
      _
    $region61: #{tpu_custom_call.1} parent=1 // pred_fallthru
      _
    // Predicated region
    $region62: #{tpu_custom_call.1} parent=1 // pred_check
      _
    $region63: #{tpu_custom_call.1} parent=1 // pred_check_branch
      %63 = sbr.rel (0) target = $region65
    $region64: #{tpu_custom_call.1} parent=1 // pred_region
      _
    $region65: #{tpu_custom_call.1} parent=1 // pred_fallthru
      _
    // Predicated region
    $region66: #{tpu_custom_call.1} parent=1 // pred_check
      _
    $region67: #{tpu_custom_call.1} parent=1 // pred_check_branch
      %65 = sbr.rel (0) target = $region69
    $region68: #{tpu_custom_call.1} parent=1 // pred_region
      _
    $region69: #{tpu_custom_call.1} parent=1 // pred_fallthru
      _
    // Predicated region
    $region70: #{tpu_custom_call.1} parent=1 // pred_check
      _
    $region71: #{tpu_custom_call.1} parent=1 // pred_check_branch
      %67 = sbr.rel (0) target = $region73
    $region72: #{tpu_custom_call.1} parent=1 // pred_region
      _
    $region73: #{tpu_custom_call.1} parent=1 // pred_fallthru
      _
    // Predicated region
    $region74: #{tpu_custom_call.1} parent=1 // pred_check
      _
    $region75: #{tpu_custom_call.1} parent=1 // pred_check_branch
      %69 = sbr.rel (0) target = $region77
    $region76: #{tpu_custom_call.1} parent=1 // pred_region
      _
    $region77: #{tpu_custom_call.1} parent=1 // pred_fallthru
      _
    // Predicated region
    $region78: #{tpu_custom_call.1} parent=1 // pred_check
      _
    $region79: #{tpu_custom_call.1} parent=1 // pred_check_branch
      %71 = sbr.rel (0) target = $region81
    $region80: #{tpu_custom_call.1} parent=1 // pred_region
      _
    $region81: #{tpu_custom_call.1} parent=1 // pred_fallthru
      _
    // Predicated region
    $region82: #{tpu_custom_call.1} parent=1 // pred_check
      _
    $region83: #{tpu_custom_call.1} parent=1 // pred_check_branch
      %73 = sbr.rel (0) target = $region85
    $region84: #{tpu_custom_call.1} parent=1 // pred_region
      _
    $region85: #{tpu_custom_call.1} parent=1 // pred_fallthru
      _
    // Predicated region
    $region86: #{tpu_custom_call.1} parent=1 // pred_check
      _
    $region87: #{tpu_custom_call.1} parent=1 // pred_check_branch
      %75 = sbr.rel (0) target = $region89
    $region88: #{tpu_custom_call.1} parent=1 // pred_region
      _
    $region89: #{tpu_custom_call.1} parent=1 // pred_fallthru
      _
    // Predicated region
    $region90: #{tpu_custom_call.1} parent=1 // pred_check
      _
    $region91: #{tpu_custom_call.1} parent=1 // pred_check_branch
      %77 = sbr.rel (0) target = $region93
    $region92: #{tpu_custom_call.1} parent=1 // pred_region
      _
    $region93: #{tpu_custom_call.1} parent=1 // pred_fallthru
      _
    // Predicated region
    $region94: #{tpu_custom_call.1} parent=1 // pred_check
      _
    $region95: #{tpu_custom_call.1} parent=1 // pred_check_branch
      %79 = sbr.rel (0) target = $region97
    $region96: #{tpu_custom_call.1} parent=1 // pred_region
      _
    $region97: #{tpu_custom_call.1} parent=1 // pred_fallthru
      _
    %v80 = vld [vmem:[%s3] sm:$0xff]
    %v81 = vld [vmem:[%s3 + $0x8] sm:$0xff]
    %v82 = vld [vmem:[%s3 + $0x10] sm:$0xff]
    %v83 = vld [vmem:[%s3 + $0x18] sm:$0xff]
    %v84 = vld [vmem:[%s4] sm:$0xff]
    %v85 = vld [vmem:[%s4 + $0x8] sm:$0xff]
    %v86 = vld [vmem:[%s4 + $0x10] sm:$0xff]
    %v87 = vld [vmem:[%s4 + $0x18] sm:$0xff]
    %v88 = vld [vmem:[%s4 + $0x20] sm:$0xff]
    %v89 = vld [vmem:[%s4 + $0x28] sm:$0xff]
    %v90 = vld [vmem:[%s4 + $0x30] sm:$0xff]
    %v91 = vld [vmem:[%s4 + $0x38] sm:$0xff]
    %v92 = vlaneseq
    %v93 = vand.u32 %v92, 127
    %v94 = vld [vmem:[%s0] sm:$0xff]
    %v95 = vld [vmem:[%s0 + $0x8] sm:$0xff]
    %v96 = vld [vmem:[%s0 + $0x10] sm:$0xff]
    %v97 = vld [vmem:[%s0 + $0x18] sm:$0xff]
    %v98 = vld [vmem:[%s0 + $0x20] sm:$0xff]
    %v99 = vld [vmem:[%s0 + $0x28] sm:$0xff]
    %v100 = vld [vmem:[%s0 + $0x30] sm:$0xff]
    %v101 = vld [vmem:[%s0 + $0x38] sm:$0xff]
    %102 = vset.pattern.permute.xlu0 0
    %103 = vperm.xlu0 %102, %v94
    %v104 = vpop.permute.xlu0 %103
    %105 = vset.pattern.permute.xlu0 0
    %106 = vperm.xlu0 %105, %v95
    %v107 = vpop.permute.xlu0 %106
    %108 = vset.pattern.permute.xlu0 0
    %109 = vperm.xlu0 %108, %v96
    %v110 = vpop.permute.xlu0 %109
    %111 = vset.pattern.permute.xlu0 0
    %112 = vperm.xlu0 %111, %v97
    %v113 = vpop.permute.xlu0 %112
    %114 = vset.pattern.permute.xlu0 0
    %115 = vperm.xlu0 %114, %v98
    %v116 = vpop.permute.xlu0 %115
    %117 = vset.pattern.permute.xlu0 0
    %118 = vperm.xlu0 %117, %v99
    %v119 = vpop.permute.xlu0 %118
    %120 = vset.pattern.permute.xlu0 0
    %121 = vperm.xlu0 %120, %v100
    %v122 = vpop.permute.xlu0 %121
    %123 = vset.pattern.permute.xlu0 0
    %124 = vperm.xlu0 %123, %v101
    %v125 = vpop.permute.xlu0 %124
    %vm126 = vcmp.eq.s32.totalorder %v104, %v93
    %vm127 = vcmp.eq.s32.totalorder %v107, %v93
    %vm128 = vcmp.eq.s32.totalorder %v110, %v93
    %vm129 = vcmp.eq.s32.totalorder %v113, %v93
    %vm130 = vcmp.eq.s32.totalorder %v116, %v93
    %vm131 = vcmp.eq.s32.totalorder %v119, %v93
    %vm132 = vcmp.eq.s32.totalorder %v122, %v93
    %vm133 = vcmp.eq.s32.totalorder %v125, %v93
    %v134 = vsel %vm126, 1, 0
    %v135 = vsel %vm127, 1, 0
    %v136 = vsel %vm128, 1, 0
    %v137 = vsel %vm129, 1, 0
    %v138 = vsel %vm130, 1, 0
    %v139 = vsel %vm131, 1, 0
    %v140 = vsel %vm132, 1, 0
    %v141 = vsel %vm133, 1, 0
    %v142 = vcvt.s32.f32 %v134
    %v143 = vcvt.s32.f32 %v135
    %v144 = vcvt.s32.f32 %v136
    %v145 = vcvt.s32.f32 %v137
    %v146 = vcvt.s32.f32 %v138
    %v147 = vcvt.s32.f32 %v139
    %v148 = vcvt.s32.f32 %v140
    %v149 = vcvt.s32.f32 %v141
    %v150 = vld [vmem:[%s1] sm:$0xff]
    %v151 = vld [vmem:[%s1 + $0x8] sm:$0xff]
    %v152 = vld [vmem:[%s1 + $0x10] sm:$0xff]
    %v153 = vld [vmem:[%s1 + $0x18] sm:$0xff]
    %v154 = vld [vmem:[%s1 + $0x20] sm:$0xff]
    %v155 = vld [vmem:[%s1 + $0x28] sm:$0xff]
    %v156 = vld [vmem:[%s1 + $0x30] sm:$0xff]
    %v157 = vld [vmem:[%s1 + $0x38] sm:$0xff]
    %158 = vset.pattern.permute.xlu0 0
    %159 = vperm.xlu0 %158, %v150
    %v160 = vpop.permute.xlu0 %159
    %161 = vset.pattern.permute.xlu0 0
    %162 = vperm.xlu0 %161, %v151
    %v163 = vpop.permute.xlu0 %162
    %164 = vset.pattern.permute.xlu0 0
    %165 = vperm.xlu0 %164, %v152
    %v166 = vpop.permute.xlu0 %165
    %167 = vset.pattern.permute.xlu0 0
    %168 = vperm.xlu0 %167, %v153
    %v169 = vpop.permute.xlu0 %168
    %170 = vset.pattern.permute.xlu0 0
    %171 = vperm.xlu0 %170, %v154
    %v172 = vpop.permute.xlu0 %171
    %173 = vset.pattern.permute.xlu0 0
    %174 = vperm.xlu0 %173, %v155
    %v175 = vpop.permute.xlu0 %174
    %176 = vset.pattern.permute.xlu0 0
    %177 = vperm.xlu0 %176, %v156
    %v178 = vpop.permute.xlu0 %177
    %179 = vset.pattern.permute.xlu0 0
    %180 = vperm.xlu0 %179, %v157
    %v181 = vpop.permute.xlu0 %180
    %vm182 = vcmp.eq.s32.totalorder %v160, %v93
    %vm183 = vcmp.eq.s32.totalorder %v163, %v93
    %vm184 = vcmp.eq.s32.totalorder %v166, %v93
    %vm185 = vcmp.eq.s32.totalorder %v169, %v93
    %vm186 = vcmp.eq.s32.totalorder %v172, %v93
    %vm187 = vcmp.eq.s32.totalorder %v175, %v93
    %vm188 = vcmp.eq.s32.totalorder %v178, %v93
    %vm189 = vcmp.eq.s32.totalorder %v181, %v93
    %v190 = vsel %vm182, 1, 0
    %v191 = vsel %vm183, 1, 0
    %v192 = vsel %vm184, 1, 0
    %v193 = vsel %vm185, 1, 0
    %v194 = vsel %vm186, 1, 0
    %v195 = vsel %vm187, 1, 0
    %v196 = vsel %vm188, 1, 0
    %v197 = vsel %vm189, 1, 0
    %v198 = vcvt.s32.f32 %v190
    %v199 = vcvt.s32.f32 %v191
    %v200 = vcvt.s32.f32 %v192
    %v201 = vcvt.s32.f32 %v193
    %v202 = vcvt.s32.f32 %v194
    %v203 = vcvt.s32.f32 %v195
    %v204 = vcvt.s32.f32 %v196
    %v205 = vcvt.s32.f32 %v197
    %v206 = vlaneseq
    %v207 = vshrl.u32 %v206, 7
    %v208 = vadd.s32 %v207, 8
    %v209 = vadd.s32 %v207, 16
    %v210 = vadd.s32 %v207, 24
    %v211 = vld [vmem:[%s2] sm:$0x1]
    %v212 = vlaneseq
    %v213 = vshrl.u32 %v212, 7
    %v214 = vsub.s32 0, %v213
    %v215 = vrot.slane %v211, %v214
    %vm216 = vcmp.eq.s32.totalorder %v215, %v207
    %vm217 = vcmp.eq.s32.totalorder %v215, %v208
    %vm218 = vcmp.eq.s32.totalorder %v215, %v209
    %vm219 = vcmp.eq.s32.totalorder %v215, %v210
    %v220 = vsel %vm216, 1, 0
    %v221 = vsel %vm217, 1, 0
    %v222 = vsel %vm218, 1, 0
    %v223 = vsel %vm219, 1, 0
    %v224 = vcvt.s32.f32 %v220
    %v225 = vcvt.s32.f32 %v221
    %v226 = vcvt.s32.f32 %v222
    %v227 = vcvt.s32.f32 %v223
    %v228 = vld [vmem:[%s5] sm:$0xff]
    %v229 = vld [vmem:[%s5 + $0x8] sm:$0x3]
    %v230 = vld [vmem:[%s6] sm:$0x1]
    %v232 = vlaneseq
    %v233 = vshrl.u32 %v232, 7
    %v234 = vsub.s32 0, %v233
    %v235 = vrot.slane %v230, %v234
    %vm237 = vcmask 80896
    %v239 = vsel %vm237, %v80, 0
    %v242 = vsel %vm237, %v81, 0
    %v245 = vsel %vm237, %v82, 0
    %v248 = vsel %vm237, %v83, 0
    %vm250 = vcmask 1041408
    %v252 = vsel %vm250, %v229, 0
    %254 = vmatprep.subr.mxu0 0.0
    %255 = vmatpush1.msra.mxu0 0.0
    %256 = vmatprep.subr.mxu0 0.0
    %257 = vmatpush1.msra.mxu0 0.0
    %258 = vmatprep.subr.mxu0 0.0
    %259 = vmatpush1.msra.mxu0 0.0
    %260 = vmatprep.subr.mxu0 0.0
    %261 = vmatpush1.msra.mxu0 0.0
    %262 = vmatprep.subr.mxu0 0.0
    %263 = vmatpush1.msra.mxu0 0.0
    %264 = vmatprep.subr.mxu0 0.0
    %265 = vmatpush1.msra.mxu0 0.0
    %266 = vmatprep.subr.mxu0 0.0
    %267 = vmatpush1.msra.mxu0 0.0
    %268 = vmatprep.subr.mxu0 0.0
    %269 = vmatpush1.msra.mxu0 0.0
    %270 = vmatprep.subr.mxu0 0.0
    %271 = vmatpush1.msra.mxu0 0.0
    %272 = vmatprep.subr.mxu0 0.0
    %273 = vmatpush1.msra.mxu0 0.0
    %274 = vmatprep.subr.mxu0 0.0
    %275 = vmatpush1.msra.mxu0 0.0
    %276 = vmatprep.subr.mxu0 0.0
    %277 = vmatpush1.msra.mxu0 0.0
    %278 = vmatprep.subr.mxu0 0.0
    %279 = vmatpush1.msra.mxu0 0.0
    %280 = vmatprep.subr.mxu0 0.0
    %281 = vmatpush1.msra.mxu0 0.0
    %282 = vmatprep.subr.mxu0 0.0
    %283 = vmatpush1.msra.mxu0 %v252
    %284 = vmatprep.subr.mxu0 0.0
    %285 = vmatpush1.msra.mxu0 %v228
    %286 = vmatprep.subr.mxu0 0.0
    %287 = vmatpush2.msra.mxu0 0.0
    %288 = vmatprep.subr.mxu0 0.0
    %289 = vmatpush2.msra.mxu0 0.0
    %290 = vmatprep.subr.mxu0 0.0
    %291 = vmatpush2.msra.mxu0 0.0
    %292 = vmatprep.subr.mxu0 0.0
    %293 = vmatpush2.msra.mxu0 0.0
    %294 = vmatprep.subr.mxu0 0.0
    %295 = vmatpush2.msra.mxu0 0.0
    %296 = vmatprep.subr.mxu0 0.0
    %297 = vmatpush2.msra.mxu0 0.0
    %298 = vmatprep.subr.mxu0 0.0
    %299 = vmatpush2.msra.mxu0 0.0
    %300 = vmatprep.subr.mxu0 0.0
    %301 = vmatpush2.msra.mxu0 0.0
    %302 = vmatprep.subr.mxu0 0.0
    %303 = vmatpush2.msra.mxu0 0.0
    %304 = vmatprep.subr.mxu0 0.0
    %305 = vmatpush2.msra.mxu0 0.0
    %306 = vmatprep.subr.mxu0 0.0
    %307 = vmatpush2.msra.mxu0 0.0
    %308 = vmatprep.subr.mxu0 0.0
    %309 = vmatpush2.msra.mxu0 0.0
    %310 = vmatprep.subr.mxu0 0.0
    %311 = vmatpush2.msra.mxu0 0.0
    %312 = vmatprep.subr.mxu0 0.0
    %313 = vmatpush2.msra.mxu0 0.0
    %314 = vmatprep.subr.mxu0 0.0
    %315 = vmatpush2.msra.mxu0 0.0
    %316 = vmatprep.subr.mxu0 0.0
    %317 = vmatpush2.msra.mxu0 0.0
    %318 = vmatprep.mubr.f32.mxu0 0.0
    %319 = vmatmul.mubr.f32.gmra.mxu0 %v239
    %v320 = vpop.f32.mrf.mxu0
    %v321 = vadd.f32 %v235, %v320
    %v322 = vpop.f32.mrf.mxu0
    %323 = vmatprep.mubr.f32.mxu0 0.0
    %324 = vmatmul.mubr.f32.gmra.mxu0 %v242
    %v325 = vpop.f32.mrf.mxu0
    %v326 = vadd.f32 %v235, %v325
    %v327 = vpop.f32.mrf.mxu0
    %328 = vmatprep.mubr.f32.mxu0 0.0
    %329 = vmatmul.mubr.f32.gmra.mxu0 %v245
    %v330 = vpop.f32.mrf.mxu0
    %v331 = vadd.f32 %v235, %v330
    %v332 = vpop.f32.mrf.mxu0
    %333 = vmatprep.mubr.f32.mxu0 0.0
    %334 = vmatmul.mubr.f32.gmra.mxu0 %v248
    %v335 = vpop.f32.mrf.mxu0
    %v336 = vadd.f32 %v235, %v335
    %v337 = vpop.f32.mrf.mxu0
    %338 = vdwg.mxu0
    %v339 = vmax.f32 %v321, 0.0
    %v340 = vmax.f32 %v326, 0.0
    %v341 = vmax.f32 %v331, 0.0
    %v342 = vmax.f32 %v336, 0.0
    %vm343 = vcmask 261120
    %v345 = vsel %vm343, %v142, 0
    %v348 = vsel %vm343, %v143, 0
    %v351 = vsel %vm343, %v144, 0
    %v354 = vsel %vm343, %v145, 0
    %v357 = vsel %vm343, %v146, 0
    %v360 = vsel %vm343, %v147, 0
    %v363 = vsel %vm343, %v148, 0
    %v366 = vsel %vm343, %v149, 0
    %368 = vmatprep.subr.mxu0 0.0
    %369 = vmatpush1.msra.mxu0 0.0
    %370 = vmatprep.subr.mxu0 0.0
    %371 = vmatpush1.msra.mxu0 0.0
    %372 = vmatprep.subr.mxu0 0.0
    %373 = vmatpush1.msra.mxu0 0.0
    %374 = vmatprep.subr.mxu0 0.0
    %375 = vmatpush1.msra.mxu0 0.0
    %376 = vmatprep.subr.mxu0 0.0
    %377 = vmatpush1.msra.mxu0 0.0
    %378 = vmatprep.subr.mxu0 0.0
    %379 = vmatpush1.msra.mxu0 0.0
    %380 = vmatprep.subr.mxu0 0.0
    %381 = vmatpush1.msra.mxu0 0.0
    %382 = vmatprep.subr.mxu0 0.0
    %383 = vmatpush1.msra.mxu0 0.0
    %384 = vmatprep.subr.mxu0 0.0
    %385 = vmatpush1.msra.mxu0 0.0
    %386 = vmatprep.subr.mxu0 0.0
    %387 = vmatpush1.msra.mxu0 0.0
    %388 = vmatprep.subr.mxu0 0.0
    %389 = vmatpush1.msra.mxu0 0.0
    %390 = vmatprep.subr.mxu0 0.0
    %391 = vmatpush1.msra.mxu0 0.0
    %392 = vmatprep.subr.mxu0 0.0
    %393 = vmatpush1.msra.mxu0 %v342
    %394 = vmatprep.subr.mxu0 0.0
    %395 = vmatpush1.msra.mxu0 %v341
    %396 = vmatprep.subr.mxu0 0.0
    %397 = vmatpush1.msra.mxu0 %v340
    %398 = vmatprep.subr.mxu0 0.0
    %399 = vmatpush1.msra.mxu0 %v339
    %400 = vmatprep.subr.mxu0 0.0
    %401 = vmatpush2.msra.mxu0 0.0
    %402 = vmatprep.subr.mxu0 0.0
    %403 = vmatpush2.msra.mxu0 0.0
    %404 = vmatprep.subr.mxu0 0.0
    %405 = vmatpush2.msra.mxu0 0.0
    %406 = vmatprep.subr.mxu0 0.0
    %407 = vmatpush2.msra.mxu0 0.0
    %408 = vmatprep.subr.mxu0 0.0
    %409 = vmatpush2.msra.mxu0 0.0
    %410 = vmatprep.subr.mxu0 0.0
    %411 = vmatpush2.msra.mxu0 0.0
    %412 = vmatprep.subr.mxu0 0.0
    %413 = vmatpush2.msra.mxu0 0.0
    %414 = vmatprep.subr.mxu0 0.0
    %415 = vmatpush2.msra.mxu0 0.0
    %416 = vmatprep.subr.mxu0 0.0
    %417 = vmatpush2.msra.mxu0 0.0
    %418 = vmatprep.subr.mxu0 0.0
    %419 = vmatpush2.msra.mxu0 0.0
    %420 = vmatprep.subr.mxu0 0.0
    %421 = vmatpush2.msra.mxu0 0.0
    %422 = vmatprep.subr.mxu0 0.0
    %423 = vmatpush2.msra.mxu0 0.0
    %424 = vmatprep.subr.mxu0 0.0
    %425 = vmatpush2.msra.mxu0 0.0
    %426 = vmatprep.subr.mxu0 0.0
    %427 = vmatpush2.msra.mxu0 0.0
    %428 = vmatprep.subr.mxu0 0.0
    %429 = vmatpush2.msra.mxu0 0.0
    %430 = vmatprep.subr.mxu0 0.0
    %431 = vmatpush2.msra.mxu0 0.0
    %432 = vmatprep.mubr.f32.mxu0 0.0
    %433 = vmatmul.mubr.f32.gmra.mxu0 %v345
    %v434 = vpop.f32.mrf.mxu0
    %v435 = vadd.f32 0.0, %v434
    %v436 = vpop.f32.mrf.mxu0
    %437 = vmatprep.mubr.f32.mxu0 0.0
    %438 = vmatmul.mubr.f32.gmra.mxu0 %v348
    %v439 = vpop.f32.mrf.mxu0
    %v440 = vadd.f32 0.0, %v439
    %v441 = vpop.f32.mrf.mxu0
    %442 = vmatprep.mubr.f32.mxu0 0.0
    %443 = vmatmul.mubr.f32.gmra.mxu0 %v351
    %v444 = vpop.f32.mrf.mxu0
    %v445 = vadd.f32 0.0, %v444
    %v446 = vpop.f32.mrf.mxu0
    %447 = vmatprep.mubr.f32.mxu0 0.0
    %448 = vmatmul.mubr.f32.gmra.mxu0 %v354
    %v449 = vpop.f32.mrf.mxu0
    %v450 = vadd.f32 0.0, %v449
    %v451 = vpop.f32.mrf.mxu0
    %452 = vmatprep.mubr.f32.mxu0 0.0
    %453 = vmatmul.mubr.f32.gmra.mxu0 %v357
    %v454 = vpop.f32.mrf.mxu0
    %v455 = vadd.f32 0.0, %v454
    %v456 = vpop.f32.mrf.mxu0
    %457 = vmatprep.mubr.f32.mxu0 0.0
    %458 = vmatmul.mubr.f32.gmra.mxu0 %v360
    %v459 = vpop.f32.mrf.mxu0
    %v460 = vadd.f32 0.0, %v459
    %v461 = vpop.f32.mrf.mxu0
    %462 = vmatprep.mubr.f32.mxu0 0.0
    %463 = vmatmul.mubr.f32.gmra.mxu0 %v363
    %v464 = vpop.f32.mrf.mxu0
    %v465 = vadd.f32 0.0, %v464
    %v466 = vpop.f32.mrf.mxu0
    %467 = vmatprep.mubr.f32.mxu0 0.0
    %468 = vmatmul.mubr.f32.gmra.mxu0 %v366
    %v469 = vpop.f32.mrf.mxu0
    %v470 = vadd.f32 0.0, %v469
    %v471 = vpop.f32.mrf.mxu0
    %472 = vdwg.mxu0
    %v474 = vsel %vm343, %v198, 0
    %v477 = vsel %vm343, %v199, 0
    %v480 = vsel %vm343, %v200, 0
    %v483 = vsel %vm343, %v201, 0
    %v486 = vsel %vm343, %v202, 0
    %v489 = vsel %vm343, %v203, 0
    %v492 = vsel %vm343, %v204, 0
    %v495 = vsel %vm343, %v205, 0
    %497 = vmatprep.subr.mxu0 0.0
    %498 = vmatpush1.msra.mxu0 0.0
    %499 = vmatprep.subr.mxu0 0.0
    %500 = vmatpush1.msra.mxu0 0.0
    %501 = vmatprep.subr.mxu0 0.0
    %502 = vmatpush1.msra.mxu0 0.0
    %503 = vmatprep.subr.mxu0 0.0
    %504 = vmatpush1.msra.mxu0 0.0
    %505 = vmatprep.subr.mxu0 0.0
    %506 = vmatpush1.msra.mxu0 0.0
    %507 = vmatprep.subr.mxu0 0.0
    %508 = vmatpush1.msra.mxu0 0.0
    %509 = vmatprep.subr.mxu0 0.0
    %510 = vmatpush1.msra.mxu0 0.0
    %511 = vmatprep.subr.mxu0 0.0
    %512 = vmatpush1.msra.mxu0 0.0
    %513 = vmatprep.subr.mxu0 0.0
    %514 = vmatpush1.msra.mxu0 0.0
    %515 = vmatprep.subr.mxu0 0.0
    %516 = vmatpush1.msra.mxu0 0.0
    %517 = vmatprep.subr.mxu0 0.0
    %518 = vmatpush1.msra.mxu0 0.0
    %519 = vmatprep.subr.mxu0 0.0
    %520 = vmatpush1.msra.mxu0 0.0
    %521 = vmatprep.subr.mxu0 0.0
    %522 = vmatpush1.msra.mxu0 %v342
    %523 = vmatprep.subr.mxu0 0.0
    %524 = vmatpush1.msra.mxu0 %v341
    %525 = vmatprep.subr.mxu0 0.0
    %526 = vmatpush1.msra.mxu0 %v340
    %527 = vmatprep.subr.mxu0 0.0
    %528 = vmatpush1.msra.mxu0 %v339
    %529 = vmatprep.subr.mxu0 0.0
    %530 = vmatpush2.msra.mxu0 0.0
    %531 = vmatprep.subr.mxu0 0.0
    %532 = vmatpush2.msra.mxu0 0.0
    %533 = vmatprep.subr.mxu0 0.0
    %534 = vmatpush2.msra.mxu0 0.0
    %535 = vmatprep.subr.mxu0 0.0
    %536 = vmatpush2.msra.mxu0 0.0
    %537 = vmatprep.subr.mxu0 0.0
    %538 = vmatpush2.msra.mxu0 0.0
    %539 = vmatprep.subr.mxu0 0.0
    %540 = vmatpush2.msra.mxu0 0.0
    %541 = vmatprep.subr.mxu0 0.0
    %542 = vmatpush2.msra.mxu0 0.0
    %543 = vmatprep.subr.mxu0 0.0
    %544 = vmatpush2.msra.mxu0 0.0
    %545 = vmatprep.subr.mxu0 0.0
    %546 = vmatpush2.msra.mxu0 0.0
    %547 = vmatprep.subr.mxu0 0.0
    %548 = vmatpush2.msra.mxu0 0.0
    %549 = vmatprep.subr.mxu0 0.0
    %550 = vmatpush2.msra.mxu0 0.0
    %551 = vmatprep.subr.mxu0 0.0
    %552 = vmatpush2.msra.mxu0 0.0
    %553 = vmatprep.subr.mxu0 0.0
    %554 = vmatpush2.msra.mxu0 0.0
    %555 = vmatprep.subr.mxu0 0.0
    %556 = vmatpush2.msra.mxu0 0.0
    %557 = vmatprep.subr.mxu0 0.0
    %558 = vmatpush2.msra.mxu0 0.0
    %559 = vmatprep.subr.mxu0 0.0
    %560 = vmatpush2.msra.mxu0 0.0
    %561 = vmatprep.mubr.f32.mxu0 0.0
    %562 = vmatmul.mubr.f32.gmra.mxu0 %v474
    %v563 = vpop.f32.mrf.mxu0
    %v564 = vadd.f32 0.0, %v563
    %v565 = vpop.f32.mrf.mxu0
    %566 = vmatprep.mubr.f32.mxu0 0.0
    %567 = vmatmul.mubr.f32.gmra.mxu0 %v477
    %v568 = vpop.f32.mrf.mxu0
    %v569 = vadd.f32 0.0, %v568
    %v570 = vpop.f32.mrf.mxu0
    %571 = vmatprep.mubr.f32.mxu0 0.0
    %572 = vmatmul.mubr.f32.gmra.mxu0 %v480
    %v573 = vpop.f32.mrf.mxu0
    %v574 = vadd.f32 0.0, %v573
    %v575 = vpop.f32.mrf.mxu0
    %576 = vmatprep.mubr.f32.mxu0 0.0
    %577 = vmatmul.mubr.f32.gmra.mxu0 %v483
    %v578 = vpop.f32.mrf.mxu0
    %v579 = vadd.f32 0.0, %v578
    %v580 = vpop.f32.mrf.mxu0
    %581 = vmatprep.mubr.f32.mxu0 0.0
    %582 = vmatmul.mubr.f32.gmra.mxu0 %v486
    %v583 = vpop.f32.mrf.mxu0
    %v584 = vadd.f32 0.0, %v583
    %v585 = vpop.f32.mrf.mxu0
    %586 = vmatprep.mubr.f32.mxu0 0.0
    %587 = vmatmul.mubr.f32.gmra.mxu0 %v489
    %v588 = vpop.f32.mrf.mxu0
    %v589 = vadd.f32 0.0, %v588
    %v590 = vpop.f32.mrf.mxu0
    %591 = vmatprep.mubr.f32.mxu0 0.0
    %592 = vmatmul.mubr.f32.gmra.mxu0 %v492
    %v593 = vpop.f32.mrf.mxu0
    %v594 = vadd.f32 0.0, %v593
    %v595 = vpop.f32.mrf.mxu0
    %596 = vmatprep.mubr.f32.mxu0 0.0
    %597 = vmatmul.mubr.f32.gmra.mxu0 %v495
    %v598 = vpop.f32.mrf.mxu0
    %v599 = vadd.f32 0.0, %v598
    %v600 = vpop.f32.mrf.mxu0
    %601 = vdwg.mxu0
    %v602 = vld [vmem:[%s7] sm:$0xff]
    %v603 = vld [vmem:[%s8] sm:$0xff]
    %vm604 = vcmask 64512
    %v606 = vsel %vm604, %v435, 0
    %v609 = vsel %vm604, %v440, 0
    %v612 = vsel %vm604, %v445, 0
    %v615 = vsel %vm604, %v450, 0
    %v618 = vsel %vm604, %v455, 0
    %v621 = vsel %vm604, %v460, 0
    %v624 = vsel %vm604, %v465, 0
    %v627 = vsel %vm604, %v470, 0
    %629 = vmatprep.subr.mxu0 0.0
    %630 = vmatpush1.msra.mxu0 0.0
    %631 = vmatprep.subr.mxu0 0.0
    %632 = vmatpush1.msra.mxu0 0.0
    %633 = vmatprep.subr.mxu0 0.0
    %634 = vmatpush1.msra.mxu0 0.0
    %635 = vmatprep.subr.mxu0 0.0
    %636 = vmatpush1.msra.mxu0 0.0
    %637 = vmatprep.subr.mxu0 0.0
    %638 = vmatpush1.msra.mxu0 0.0
    %639 = vmatprep.subr.mxu0 0.0
    %640 = vmatpush1.msra.mxu0 0.0
    %641 = vmatprep.subr.mxu0 0.0
    %642 = vmatpush1.msra.mxu0 0.0
    %643 = vmatprep.subr.mxu0 0.0
    %644 = vmatpush1.msra.mxu0 0.0
    %645 = vmatprep.subr.mxu0 0.0
    %646 = vmatpush1.msra.mxu0 0.0
    %647 = vmatprep.subr.mxu0 0.0
    %648 = vmatpush1.msra.mxu0 0.0
    %649 = vmatprep.subr.mxu0 0.0
    %650 = vmatpush1.msra.mxu0 0.0
    %651 = vmatprep.subr.mxu0 0.0
    %652 = vmatpush1.msra.mxu0 0.0
    %653 = vmatprep.subr.mxu0 0.0
    %654 = vmatpush1.msra.mxu0 0.0
    %655 = vmatprep.subr.mxu0 0.0
    %656 = vmatpush1.msra.mxu0 0.0
    %657 = vmatprep.subr.mxu0 0.0
    %658 = vmatpush1.msra.mxu0 0.0
    %659 = vmatprep.subr.mxu0 0.0
    %660 = vmatpush1.msra.mxu0 %v603
    %661 = vmatprep.subr.mxu0 0.0
    %662 = vmatpush2.msra.mxu0 0.0
    %663 = vmatprep.subr.mxu0 0.0
    %664 = vmatpush2.msra.mxu0 0.0
    %665 = vmatprep.subr.mxu0 0.0
    %666 = vmatpush2.msra.mxu0 0.0
    %667 = vmatprep.subr.mxu0 0.0
    %668 = vmatpush2.msra.mxu0 0.0
    %669 = vmatprep.subr.mxu0 0.0
    %670 = vmatpush2.msra.mxu0 0.0
    %671 = vmatprep.subr.mxu0 0.0
    %672 = vmatpush2.msra.mxu0 0.0
    %673 = vmatprep.subr.mxu0 0.0
    %674 = vmatpush2.msra.mxu0 0.0
    %675 = vmatprep.subr.mxu0 0.0
    %676 = vmatpush2.msra.mxu0 0.0
    %677 = vmatprep.subr.mxu0 0.0
    %678 = vmatpush2.msra.mxu0 0.0
    %679 = vmatprep.subr.mxu0 0.0
    %680 = vmatpush2.msra.mxu0 0.0
    %681 = vmatprep.subr.mxu0 0.0
    %682 = vmatpush2.msra.mxu0 0.0
    %683 = vmatprep.subr.mxu0 0.0
    %684 = vmatpush2.msra.mxu0 0.0
    %685 = vmatprep.subr.mxu0 0.0
    %686 = vmatpush2.msra.mxu0 0.0
    %687 = vmatprep.subr.mxu0 0.0
    %688 = vmatpush2.msra.mxu0 0.0
    %689 = vmatprep.subr.mxu0 0.0
    %690 = vmatpush2.msra.mxu0 0.0
    %691 = vmatprep.subr.mxu0 0.0
    %692 = vmatpush2.msra.mxu0 0.0
    %693 = vmatprep.mubr.f32.mxu0 0.0
    %694 = vmatmul.mubr.f32.gmra.mxu0 %v606
    %v695 = vpop.f32.mrf.mxu0
    %v696 = vadd.f32 0.0, %v695
    %v697 = vpop.f32.mrf.mxu0
    %698 = vmatprep.mubr.f32.mxu0 0.0
    %699 = vmatmul.mubr.f32.gmra.mxu0 %v609
    %v700 = vpop.f32.mrf.mxu0
    %v701 = vadd.f32 0.0, %v700
    %v702 = vpop.f32.mrf.mxu0
    %703 = vmatprep.mubr.f32.mxu0 0.0
    %704 = vmatmul.mubr.f32.gmra.mxu0 %v612
    %v705 = vpop.f32.mrf.mxu0
    %v706 = vadd.f32 0.0, %v705
    %v707 = vpop.f32.mrf.mxu0
    %708 = vmatprep.mubr.f32.mxu0 0.0
    %709 = vmatmul.mubr.f32.gmra.mxu0 %v615
    %v710 = vpop.f32.mrf.mxu0
    %v711 = vadd.f32 0.0, %v710
    %v712 = vpop.f32.mrf.mxu0
    %713 = vmatprep.mubr.f32.mxu0 0.0
    %714 = vmatmul.mubr.f32.gmra.mxu0 %v618
    %v715 = vpop.f32.mrf.mxu0
    %v716 = vadd.f32 0.0, %v715
    %v717 = vpop.f32.mrf.mxu0
    %718 = vmatprep.mubr.f32.mxu0 0.0
    %719 = vmatmul.mubr.f32.gmra.mxu0 %v621
    %v720 = vpop.f32.mrf.mxu0
    %v721 = vadd.f32 0.0, %v720
    %v722 = vpop.f32.mrf.mxu0
    %723 = vmatprep.mubr.f32.mxu0 0.0
    %724 = vmatmul.mubr.f32.gmra.mxu0 %v624
    %v725 = vpop.f32.mrf.mxu0
    %v726 = vadd.f32 0.0, %v725
    %v727 = vpop.f32.mrf.mxu0
    %728 = vmatprep.mubr.f32.mxu0 0.0
    %729 = vmatmul.mubr.f32.gmra.mxu0 %v627
    %v730 = vpop.f32.mrf.mxu0
    %v731 = vadd.f32 0.0, %v730
    %v732 = vpop.f32.mrf.mxu0
    %733 = vdwg.mxu0
    %v735 = vsel %vm604, %v564, 0
    %v738 = vsel %vm604, %v569, 0
    %v741 = vsel %vm604, %v574, 0
    %v744 = vsel %vm604, %v579, 0
    %v747 = vsel %vm604, %v584, 0
    %v750 = vsel %vm604, %v589, 0
    %v753 = vsel %vm604, %v594, 0
    %v756 = vsel %vm604, %v599, 0
    %758 = vmatprep.subr.mxu0 0.0
    %759 = vmatpush1.msra.mxu0 0.0
    %760 = vmatprep.subr.mxu0 0.0
    %761 = vmatpush1.msra.mxu0 0.0
    %762 = vmatprep.subr.mxu0 0.0
    %763 = vmatpush1.msra.mxu0 0.0
    %764 = vmatprep.subr.mxu0 0.0
    %765 = vmatpush1.msra.mxu0 0.0
    %766 = vmatprep.subr.mxu0 0.0
    %767 = vmatpush1.msra.mxu0 0.0
    %768 = vmatprep.subr.mxu0 0.0
    %769 = vmatpush1.msra.mxu0 0.0
    %770 = vmatprep.subr.mxu0 0.0
    %771 = vmatpush1.msra.mxu0 0.0
    %772 = vmatprep.subr.mxu0 0.0
    %773 = vmatpush1.msra.mxu0 0.0
    %774 = vmatprep.subr.mxu0 0.0
    %775 = vmatpush1.msra.mxu0 0.0
    %776 = vmatprep.subr.mxu0 0.0
    %777 = vmatpush1.msra.mxu0 0.0
    %778 = vmatprep.subr.mxu0 0.0
    %779 = vmatpush1.msra.mxu0 0.0
    %780 = vmatprep.subr.mxu0 0.0
    %781 = vmatpush1.msra.mxu0 0.0
    %782 = vmatprep.subr.mxu0 0.0
    %783 = vmatpush1.msra.mxu0 0.0
    %784 = vmatprep.subr.mxu0 0.0
    %785 = vmatpush1.msra.mxu0 0.0
    %786 = vmatprep.subr.mxu0 0.0
    %787 = vmatpush1.msra.mxu0 0.0
    %788 = vmatprep.subr.mxu0 0.0
    %789 = vmatpush1.msra.mxu0 %v602
    %790 = vmatprep.subr.mxu0 0.0
    %791 = vmatpush2.msra.mxu0 0.0
    %792 = vmatprep.subr.mxu0 0.0
    %793 = vmatpush2.msra.mxu0 0.0
    %794 = vmatprep.subr.mxu0 0.0
    %795 = vmatpush2.msra.mxu0 0.0
    %796 = vmatprep.subr.mxu0 0.0
    %797 = vmatpush2.msra.mxu0 0.0
    %798 = vmatprep.subr.mxu0 0.0
    %799 = vmatpush2.msra.mxu0 0.0
    %800 = vmatprep.subr.mxu0 0.0
    %801 = vmatpush2.msra.mxu0 0.0
    %802 = vmatprep.subr.mxu0 0.0
    %803 = vmatpush2.msra.mxu0 0.0
    %804 = vmatprep.subr.mxu0 0.0
    %805 = vmatpush2.msra.mxu0 0.0
    %806 = vmatprep.subr.mxu0 0.0
    %807 = vmatpush2.msra.mxu0 0.0
    %808 = vmatprep.subr.mxu0 0.0
    %809 = vmatpush2.msra.mxu0 0.0
    %810 = vmatprep.subr.mxu0 0.0
    %811 = vmatpush2.msra.mxu0 0.0
    %812 = vmatprep.subr.mxu0 0.0
    %813 = vmatpush2.msra.mxu0 0.0
    %814 = vmatprep.subr.mxu0 0.0
    %815 = vmatpush2.msra.mxu0 0.0
    %816 = vmatprep.subr.mxu0 0.0
    %817 = vmatpush2.msra.mxu0 0.0
    %818 = vmatprep.subr.mxu0 0.0
    %819 = vmatpush2.msra.mxu0 0.0
    %820 = vmatprep.subr.mxu0 0.0
    %821 = vmatpush2.msra.mxu0 0.0
    %822 = vmatprep.mubr.f32.mxu0 0.0
    %823 = vmatmul.mubr.f32.gmra.mxu0 %v735
    %v824 = vpop.f32.mrf.mxu0
    %v825 = vadd.f32 %v696, %v824
    %v826 = vpop.f32.mrf.mxu0
    %827 = vmatprep.mubr.f32.mxu0 0.0
    %828 = vmatmul.mubr.f32.gmra.mxu0 %v738
    %v829 = vpop.f32.mrf.mxu0
    %v830 = vadd.f32 %v701, %v829
    %v831 = vpop.f32.mrf.mxu0
    %832 = vmatprep.mubr.f32.mxu0 0.0
    %833 = vmatmul.mubr.f32.gmra.mxu0 %v741
    %v834 = vpop.f32.mrf.mxu0
    %v835 = vadd.f32 %v706, %v834
    %v836 = vpop.f32.mrf.mxu0
    %837 = vmatprep.mubr.f32.mxu0 0.0
    %838 = vmatmul.mubr.f32.gmra.mxu0 %v744
    %v839 = vpop.f32.mrf.mxu0
    %v840 = vadd.f32 %v711, %v839
    %v841 = vpop.f32.mrf.mxu0
    %842 = vmatprep.mubr.f32.mxu0 0.0
    %843 = vmatmul.mubr.f32.gmra.mxu0 %v747
    %v844 = vpop.f32.mrf.mxu0
    %v845 = vadd.f32 %v716, %v844
    %v846 = vpop.f32.mrf.mxu0
    %847 = vmatprep.mubr.f32.mxu0 0.0
    %848 = vmatmul.mubr.f32.gmra.mxu0 %v750
    %v849 = vpop.f32.mrf.mxu0
    %v850 = vadd.f32 %v721, %v849
    %v851 = vpop.f32.mrf.mxu0
    %852 = vmatprep.mubr.f32.mxu0 0.0
    %853 = vmatmul.mubr.f32.gmra.mxu0 %v753
    %v854 = vpop.f32.mrf.mxu0
    %v855 = vadd.f32 %v726, %v854
    %v856 = vpop.f32.mrf.mxu0
    %857 = vmatprep.mubr.f32.mxu0 0.0
    %858 = vmatmul.mubr.f32.gmra.mxu0 %v756
    %v859 = vpop.f32.mrf.mxu0
    %v860 = vadd.f32 %v731, %v859
    %v861 = vpop.f32.mrf.mxu0
    %862 = vdwg.mxu0
    %v863 = vld [vmem:[%s9] sm:$0xf]
    %vm864 = vcmask 31744
    %v866 = vsel %vm864, %v84, 0
    %v869 = vsel %vm864, %v85, 0
    %v872 = vsel %vm864, %v86, 0
    %v875 = vsel %vm864, %v87, 0
    %v878 = vsel %vm864, %v88, 0
    %v881 = vsel %vm864, %v89, 0
    %v884 = vsel %vm864, %v90, 0
    %v887 = vsel %vm864, %v91, 0
    %vm889 = vcmask 1043456
    %v891 = vsel %vm889, %v863, 0
    %893 = vmatprep.subr.mxu0 0.0
    %894 = vmatpush1.msra.mxu0 0.0
    %895 = vmatprep.subr.mxu0 0.0
    %896 = vmatpush1.msra.mxu0 0.0
    %897 = vmatprep.subr.mxu0 0.0
    %898 = vmatpush1.msra.mxu0 0.0
    %899 = vmatprep.subr.mxu0 0.0
    %900 = vmatpush1.msra.mxu0 0.0
    %901 = vmatprep.subr.mxu0 0.0
    %902 = vmatpush1.msra.mxu0 0.0
    %903 = vmatprep.subr.mxu0 0.0
    %904 = vmatpush1.msra.mxu0 0.0
    %905 = vmatprep.subr.mxu0 0.0
    %906 = vmatpush1.msra.mxu0 0.0
    %907 = vmatprep.subr.mxu0 0.0
    %908 = vmatpush1.msra.mxu0 0.0
    %909 = vmatprep.subr.mxu0 0.0
    %910 = vmatpush1.msra.mxu0 0.0
    %911 = vmatprep.subr.mxu0 0.0
    %912 = vmatpush1.msra.mxu0 0.0
    %913 = vmatprep.subr.mxu0 0.0
    %914 = vmatpush1.msra.mxu0 0.0
    %915 = vmatprep.subr.mxu0 0.0
    %916 = vmatpush1.msra.mxu0 0.0
    %917 = vmatprep.subr.mxu0 0.0
    %918 = vmatpush1.msra.mxu0 0.0
    %919 = vmatprep.subr.mxu0 0.0
    %920 = vmatpush1.msra.mxu0 0.0
    %921 = vmatprep.subr.mxu0 0.0
    %922 = vmatpush1.msra.mxu0 0.0
    %923 = vmatprep.subr.mxu0 0.0
    %924 = vmatpush1.msra.mxu0 %v891
    %925 = vmatprep.subr.mxu0 0.0
    %926 = vmatpush2.msra.mxu0 0.0
    %927 = vmatprep.subr.mxu0 0.0
    %928 = vmatpush2.msra.mxu0 0.0
    %929 = vmatprep.subr.mxu0 0.0
    %930 = vmatpush2.msra.mxu0 0.0
    %931 = vmatprep.subr.mxu0 0.0
    %932 = vmatpush2.msra.mxu0 0.0
    %933 = vmatprep.subr.mxu0 0.0
    %934 = vmatpush2.msra.mxu0 0.0
    %935 = vmatprep.subr.mxu0 0.0
    %936 = vmatpush2.msra.mxu0 0.0
    %937 = vmatprep.subr.mxu0 0.0
    %938 = vmatpush2.msra.mxu0 0.0
    %939 = vmatprep.subr.mxu0 0.0
    %940 = vmatpush2.msra.mxu0 0.0
    %941 = vmatprep.subr.mxu0 0.0
    %942 = vmatpush2.msra.mxu0 0.0
    %943 = vmatprep.subr.mxu0 0.0
    %944 = vmatpush2.msra.mxu0 0.0
    %945 = vmatprep.subr.mxu0 0.0
    %946 = vmatpush2.msra.mxu0 0.0
    %947 = vmatprep.subr.mxu0 0.0
    %948 = vmatpush2.msra.mxu0 0.0
    %949 = vmatprep.subr.mxu0 0.0
    %950 = vmatpush2.msra.mxu0 0.0
    %951 = vmatprep.subr.mxu0 0.0
    %952 = vmatpush2.msra.mxu0 0.0
    %953 = vmatprep.subr.mxu0 0.0
    %954 = vmatpush2.msra.mxu0 0.0
    %955 = vmatprep.subr.mxu0 0.0
    %956 = vmatpush2.msra.mxu0 0.0
    %957 = vmatprep.mubr.f32.mxu0 0.0
    %958 = vmatmul.mubr.f32.gmra.mxu0 %v866
    %v959 = vpop.f32.mrf.mxu0
    %v960 = vadd.f32 0.0, %v959
    %v961 = vpop.f32.mrf.mxu0
    %962 = vmatprep.mubr.f32.mxu0 0.0
    %963 = vmatmul.mubr.f32.gmra.mxu0 %v869
    %v964 = vpop.f32.mrf.mxu0
    %v965 = vadd.f32 0.0, %v964
    %v966 = vpop.f32.mrf.mxu0
    %967 = vmatprep.mubr.f32.mxu0 0.0
    %968 = vmatmul.mubr.f32.gmra.mxu0 %v872
    %v969 = vpop.f32.mrf.mxu0
    %v970 = vadd.f32 0.0, %v969
    %v971 = vpop.f32.mrf.mxu0
    %972 = vmatprep.mubr.f32.mxu0 0.0
    %973 = vmatmul.mubr.f32.gmra.mxu0 %v875
    %v974 = vpop.f32.mrf.mxu0
    %v975 = vadd.f32 0.0, %v974
    %v976 = vpop.f32.mrf.mxu0
    %977 = vmatprep.mubr.f32.mxu0 0.0
    %978 = vmatmul.mubr.f32.gmra.mxu0 %v878
    %v979 = vpop.f32.mrf.mxu0
    %v980 = vadd.f32 0.0, %v979
    %v981 = vpop.f32.mrf.mxu0
    %982 = vmatprep.mubr.f32.mxu0 0.0
    %983 = vmatmul.mubr.f32.gmra.mxu0 %v881
    %v984 = vpop.f32.mrf.mxu0
    %v985 = vadd.f32 0.0, %v984
    %v986 = vpop.f32.mrf.mxu0
    %987 = vmatprep.mubr.f32.mxu0 0.0
    %988 = vmatmul.mubr.f32.gmra.mxu0 %v884
    %v989 = vpop.f32.mrf.mxu0
    %v990 = vadd.f32 0.0, %v989
    %v991 = vpop.f32.mrf.mxu0
    %992 = vmatprep.mubr.f32.mxu0 0.0
    %993 = vmatmul.mubr.f32.gmra.mxu0 %v887
    %v994 = vpop.f32.mrf.mxu0
    %v995 = vadd.f32 0.0, %v994
    %v996 = vpop.f32.mrf.mxu0
    %997 = vdwg.mxu0
    %v998 = vadd.f32 %v825, %v960
    %v999 = vadd.f32 %v830, %v965
    %v1000 = vadd.f32 %v835, %v970
    %v1001 = vadd.f32 %v840, %v975
    %v1002 = vadd.f32 %v845, %v980
    %v1003 = vadd.f32 %v850, %v985
    %v1004 = vadd.f32 %v855, %v990
    %v1005 = vadd.f32 %v860, %v995
    %v1006 = vld [vmem:[%s10] sm:$0x1]
    %v1008 = vlaneseq
    %v1009 = vshrl.u32 %v1008, 7
    %v1010 = vsub.s32 0, %v1009
    %v1011 = vrot.slane %v1006, %v1010
    %v1013 = vadd.f32 %v998, %v1011
    %v1014 = vadd.f32 %v999, %v1011
    %v1015 = vadd.f32 %v1000, %v1011
    %v1016 = vadd.f32 %v1001, %v1011
    %v1017 = vadd.f32 %v1002, %v1011
    %v1018 = vadd.f32 %v1003, %v1011
    %v1019 = vadd.f32 %v1004, %v1011
    %v1020 = vadd.f32 %v1005, %v1011
    %v1021 = vld [vmem:[%s11] sm:$0xff]
    %v1022 = vld [vmem:[%s12] sm:$0xff]
    %1023 = vmatprep.subr.mxu0 0.0
    %1024 = vmatpush1.msra.mxu0 0.0
    %1025 = vmatprep.subr.mxu0 0.0
    %1026 = vmatpush1.msra.mxu0 0.0
    %1027 = vmatprep.subr.mxu0 0.0
    %1028 = vmatpush1.msra.mxu0 0.0
    %1029 = vmatprep.subr.mxu0 0.0
    %1030 = vmatpush1.msra.mxu0 0.0
    %1031 = vmatprep.subr.mxu0 0.0
    %1032 = vmatpush1.msra.mxu0 0.0
    %1033 = vmatprep.subr.mxu0 0.0
    %1034 = vmatpush1.msra.mxu0 0.0
    %1035 = vmatprep.subr.mxu0 0.0
    %1036 = vmatpush1.msra.mxu0 0.0
    %1037 = vmatprep.subr.mxu0 0.0
    %1038 = vmatpush1.msra.mxu0 0.0
    %1039 = vmatprep.subr.mxu0 0.0
    %1040 = vmatpush1.msra.mxu0 0.0
    %1041 = vmatprep.subr.mxu0 0.0
    %1042 = vmatpush1.msra.mxu0 0.0
    %1043 = vmatprep.subr.mxu0 0.0
    %1044 = vmatpush1.msra.mxu0 0.0
    %1045 = vmatprep.subr.mxu0 0.0
    %1046 = vmatpush1.msra.mxu0 0.0
    %1047 = vmatprep.subr.mxu0 0.0
    %1048 = vmatpush1.msra.mxu0 0.0
    %1049 = vmatprep.subr.mxu0 0.0
    %1050 = vmatpush1.msra.mxu0 0.0
    %1051 = vmatprep.subr.mxu0 0.0
    %1052 = vmatpush1.msra.mxu0 0.0
    %1053 = vmatprep.subr.mxu0 0.0
    %1054 = vmatpush1.msra.mxu0 %v1022
    %1055 = vmatprep.subr.mxu0 0.0
    %1056 = vmatpush2.msra.mxu0 0.0
    %1057 = vmatprep.subr.mxu0 0.0
    %1058 = vmatpush2.msra.mxu0 0.0
    %1059 = vmatprep.subr.mxu0 0.0
    %1060 = vmatpush2.msra.mxu0 0.0
    %1061 = vmatprep.subr.mxu0 0.0
    %1062 = vmatpush2.msra.mxu0 0.0
    %1063 = vmatprep.subr.mxu0 0.0
    %1064 = vmatpush2.msra.mxu0 0.0
    %1065 = vmatprep.subr.mxu0 0.0
    %1066 = vmatpush2.msra.mxu0 0.0
    %1067 = vmatprep.subr.mxu0 0.0
    %1068 = vmatpush2.msra.mxu0 0.0
    %1069 = vmatprep.subr.mxu0 0.0
    %1070 = vmatpush2.msra.mxu0 0.0
    %1071 = vmatprep.subr.mxu0 0.0
    %1072 = vmatpush2.msra.mxu0 0.0
    %1073 = vmatprep.subr.mxu0 0.0
    %1074 = vmatpush2.msra.mxu0 0.0
    %1075 = vmatprep.subr.mxu0 0.0
    %1076 = vmatpush2.msra.mxu0 0.0
    %1077 = vmatprep.subr.mxu0 0.0
    %1078 = vmatpush2.msra.mxu0 0.0
    %1079 = vmatprep.subr.mxu0 0.0
    %1080 = vmatpush2.msra.mxu0 0.0
    %1081 = vmatprep.subr.mxu0 0.0
    %1082 = vmatpush2.msra.mxu0 0.0
    %1083 = vmatprep.subr.mxu0 0.0
    %1084 = vmatpush2.msra.mxu0 0.0
    %1085 = vmatprep.subr.mxu0 0.0
    %1086 = vmatpush2.msra.mxu0 0.0
    %1087 = vmatprep.mubr.f32.mxu0 0.0
    %1088 = vmatmul.mubr.f32.gmra.mxu0 %v606
    %v1089 = vpop.f32.mrf.mxu0
    %v1090 = vadd.f32 0.0, %v1089
    %v1091 = vpop.f32.mrf.mxu0
    %1092 = vmatprep.mubr.f32.mxu0 0.0
    %1093 = vmatmul.mubr.f32.gmra.mxu0 %v609
    %v1094 = vpop.f32.mrf.mxu0
    %v1095 = vadd.f32 0.0, %v1094
    %v1096 = vpop.f32.mrf.mxu0
    %1097 = vmatprep.mubr.f32.mxu0 0.0
    %1098 = vmatmul.mubr.f32.gmra.mxu0 %v612
    %v1099 = vpop.f32.mrf.mxu0
    %v1100 = vadd.f32 0.0, %v1099
    %v1101 = vpop.f32.mrf.mxu0
    %1102 = vmatprep.mubr.f32.mxu0 0.0
    %1103 = vmatmul.mubr.f32.gmra.mxu0 %v615
    %v1104 = vpop.f32.mrf.mxu0
    %v1105 = vadd.f32 0.0, %v1104
    %v1106 = vpop.f32.mrf.mxu0
    %1107 = vmatprep.mubr.f32.mxu0 0.0
    %1108 = vmatmul.mubr.f32.gmra.mxu0 %v618
    %v1109 = vpop.f32.mrf.mxu0
    %v1110 = vadd.f32 0.0, %v1109
    %v1111 = vpop.f32.mrf.mxu0
    %1112 = vmatprep.mubr.f32.mxu0 0.0
    %1113 = vmatmul.mubr.f32.gmra.mxu0 %v621
    %v1114 = vpop.f32.mrf.mxu0
    %v1115 = vadd.f32 0.0, %v1114
    %v1116 = vpop.f32.mrf.mxu0
    %1117 = vmatprep.mubr.f32.mxu0 0.0
    %1118 = vmatmul.mubr.f32.gmra.mxu0 %v624
    %v1119 = vpop.f32.mrf.mxu0
    %v1120 = vadd.f32 0.0, %v1119
    %v1121 = vpop.f32.mrf.mxu0
    %1122 = vmatprep.mubr.f32.mxu0 0.0
    %1123 = vmatmul.mubr.f32.gmra.mxu0 %v627
    %v1124 = vpop.f32.mrf.mxu0
    %v1125 = vadd.f32 0.0, %v1124
    %v1126 = vpop.f32.mrf.mxu0
    %1127 = vdwg.mxu0
    %1128 = vmatprep.subr.mxu0 0.0
    %1129 = vmatpush1.msra.mxu0 0.0
    %1130 = vmatprep.subr.mxu0 0.0
    %1131 = vmatpush1.msra.mxu0 0.0
    %1132 = vmatprep.subr.mxu0 0.0
    %1133 = vmatpush1.msra.mxu0 0.0
    %1134 = vmatprep.subr.mxu0 0.0
    %1135 = vmatpush1.msra.mxu0 0.0
    %1136 = vmatprep.subr.mxu0 0.0
    %1137 = vmatpush1.msra.mxu0 0.0
    %1138 = vmatprep.subr.mxu0 0.0
    %1139 = vmatpush1.msra.mxu0 0.0
    %1140 = vmatprep.subr.mxu0 0.0
    %1141 = vmatpush1.msra.mxu0 0.0
    %1142 = vmatprep.subr.mxu0 0.0
    %1143 = vmatpush1.msra.mxu0 0.0
    %1144 = vmatprep.subr.mxu0 0.0
    %1145 = vmatpush1.msra.mxu0 0.0
    %1146 = vmatprep.subr.mxu0 0.0
    %1147 = vmatpush1.msra.mxu0 0.0
    %1148 = vmatprep.subr.mxu0 0.0
    %1149 = vmatpush1.msra.mxu0 0.0
    %1150 = vmatprep.subr.mxu0 0.0
    %1151 = vmatpush1.msra.mxu0 0.0
    %1152 = vmatprep.subr.mxu0 0.0
    %1153 = vmatpush1.msra.mxu0 0.0
    %1154 = vmatprep.subr.mxu0 0.0
    %1155 = vmatpush1.msra.mxu0 0.0
    %1156 = vmatprep.subr.mxu0 0.0
    %1157 = vmatpush1.msra.mxu0 0.0
    %1158 = vmatprep.subr.mxu0 0.0
    %1159 = vmatpush1.msra.mxu0 %v1021
    %1160 = vmatprep.subr.mxu0 0.0
    %1161 = vmatpush2.msra.mxu0 0.0
    %1162 = vmatprep.subr.mxu0 0.0
    %1163 = vmatpush2.msra.mxu0 0.0
    %1164 = vmatprep.subr.mxu0 0.0
    %1165 = vmatpush2.msra.mxu0 0.0
    %1166 = vmatprep.subr.mxu0 0.0
    %1167 = vmatpush2.msra.mxu0 0.0
    %1168 = vmatprep.subr.mxu0 0.0
    %1169 = vmatpush2.msra.mxu0 0.0
    %1170 = vmatprep.subr.mxu0 0.0
    %1171 = vmatpush2.msra.mxu0 0.0
    %1172 = vmatprep.subr.mxu0 0.0
    %1173 = vmatpush2.msra.mxu0 0.0
    %1174 = vmatprep.subr.mxu0 0.0
    %1175 = vmatpush2.msra.mxu0 0.0
    %1176 = vmatprep.subr.mxu0 0.0
    %1177 = vmatpush2.msra.mxu0 0.0
    %1178 = vmatprep.subr.mxu0 0.0
    %1179 = vmatpush2.msra.mxu0 0.0
    %1180 = vmatprep.subr.mxu0 0.0
    %1181 = vmatpush2.msra.mxu0 0.0
    %1182 = vmatprep.subr.mxu0 0.0
    %1183 = vmatpush2.msra.mxu0 0.0
    %1184 = vmatprep.subr.mxu0 0.0
    %1185 = vmatpush2.msra.mxu0 0.0
    %1186 = vmatprep.subr.mxu0 0.0
    %1187 = vmatpush2.msra.mxu0 0.0
    %1188 = vmatprep.subr.mxu0 0.0
    %1189 = vmatpush2.msra.mxu0 0.0
    %1190 = vmatprep.subr.mxu0 0.0
    %1191 = vmatpush2.msra.mxu0 0.0
    %1192 = vmatprep.mubr.f32.mxu0 0.0
    %1193 = vmatmul.mubr.f32.gmra.mxu0 %v735
    %v1194 = vpop.f32.mrf.mxu0
    %v1195 = vadd.f32 %v1090, %v1194
    %v1196 = vpop.f32.mrf.mxu0
    %1197 = vmatprep.mubr.f32.mxu0 0.0
    %1198 = vmatmul.mubr.f32.gmra.mxu0 %v738
    %v1199 = vpop.f32.mrf.mxu0
    %v1200 = vadd.f32 %v1095, %v1199
    %v1201 = vpop.f32.mrf.mxu0
    %1202 = vmatprep.mubr.f32.mxu0 0.0
    %1203 = vmatmul.mubr.f32.gmra.mxu0 %v741
    %v1204 = vpop.f32.mrf.mxu0
    %v1205 = vadd.f32 %v1100, %v1204
    %v1206 = vpop.f32.mrf.mxu0
    %1207 = vmatprep.mubr.f32.mxu0 0.0
    %1208 = vmatmul.mubr.f32.gmra.mxu0 %v744
    %v1209 = vpop.f32.mrf.mxu0
    %v1210 = vadd.f32 %v1105, %v1209
    %v1211 = vpop.f32.mrf.mxu0
    %1212 = vmatprep.mubr.f32.mxu0 0.0
    %1213 = vmatmul.mubr.f32.gmra.mxu0 %v747
    %v1214 = vpop.f32.mrf.mxu0
    %v1215 = vadd.f32 %v1110, %v1214
    %v1216 = vpop.f32.mrf.mxu0
    %1217 = vmatprep.mubr.f32.mxu0 0.0
    %1218 = vmatmul.mubr.f32.gmra.mxu0 %v750
    %v1219 = vpop.f32.mrf.mxu0
    %v1220 = vadd.f32 %v1115, %v1219
    %v1221 = vpop.f32.mrf.mxu0
    %1222 = vmatprep.mubr.f32.mxu0 0.0
    %1223 = vmatmul.mubr.f32.gmra.mxu0 %v753
    %v1224 = vpop.f32.mrf.mxu0
    %v1225 = vadd.f32 %v1120, %v1224
    %v1226 = vpop.f32.mrf.mxu0
    %1227 = vmatprep.mubr.f32.mxu0 0.0
    %1228 = vmatmul.mubr.f32.gmra.mxu0 %v756
    %v1229 = vpop.f32.mrf.mxu0
    %v1230 = vadd.f32 %v1125, %v1229
    %v1231 = vpop.f32.mrf.mxu0
    %1232 = vdwg.mxu0
    %v1233 = vld [vmem:[%s13] sm:$0xf]
    %v1235 = vsel %vm889, %v1233, 0
    %1237 = vmatprep.subr.mxu0 0.0
    %1238 = vmatpush1.msra.mxu0 0.0
    %1239 = vmatprep.subr.mxu0 0.0
    %1240 = vmatpush1.msra.mxu0 0.0
    %1241 = vmatprep.subr.mxu0 0.0
    %1242 = vmatpush1.msra.mxu0 0.0
    %1243 = vmatprep.subr.mxu0 0.0
    %1244 = vmatpush1.msra.mxu0 0.0
    %1245 = vmatprep.subr.mxu0 0.0
    %1246 = vmatpush1.msra.mxu0 0.0
    %1247 = vmatprep.subr.mxu0 0.0
    %1248 = vmatpush1.msra.mxu0 0.0
    %1249 = vmatprep.subr.mxu0 0.0
    %1250 = vmatpush1.msra.mxu0 0.0
    %1251 = vmatprep.subr.mxu0 0.0
    %1252 = vmatpush1.msra.mxu0 0.0
    %1253 = vmatprep.subr.mxu0 0.0
    %1254 = vmatpush1.msra.mxu0 0.0
    %1255 = vmatprep.subr.mxu0 0.0
    %1256 = vmatpush1.msra.mxu0 0.0
    %1257 = vmatprep.subr.mxu0 0.0
    %1258 = vmatpush1.msra.mxu0 0.0
    %1259 = vmatprep.subr.mxu0 0.0
    %1260 = vmatpush1.msra.mxu0 0.0
    %1261 = vmatprep.subr.mxu0 0.0
    %1262 = vmatpush1.msra.mxu0 0.0
    %1263 = vmatprep.subr.mxu0 0.0
    %1264 = vmatpush1.msra.mxu0 0.0
    %1265 = vmatprep.subr.mxu0 0.0
    %1266 = vmatpush1.msra.mxu0 0.0
    %1267 = vmatprep.subr.mxu0 0.0
    %1268 = vmatpush1.msra.mxu0 %v1235
    %1269 = vmatprep.subr.mxu0 0.0
    %1270 = vmatpush2.msra.mxu0 0.0
    %1271 = vmatprep.subr.mxu0 0.0
    %1272 = vmatpush2.msra.mxu0 0.0
    %1273 = vmatprep.subr.mxu0 0.0
    %1274 = vmatpush2.msra.mxu0 0.0
    %1275 = vmatprep.subr.mxu0 0.0
    %1276 = vmatpush2.msra.mxu0 0.0
    %1277 = vmatprep.subr.mxu0 0.0
    %1278 = vmatpush2.msra.mxu0 0.0
    %1279 = vmatprep.subr.mxu0 0.0
    %1280 = vmatpush2.msra.mxu0 0.0
    %1281 = vmatprep.subr.mxu0 0.0
    %1282 = vmatpush2.msra.mxu0 0.0
    %1283 = vmatprep.subr.mxu0 0.0
    %1284 = vmatpush2.msra.mxu0 0.0
    %1285 = vmatprep.subr.mxu0 0.0
    %1286 = vmatpush2.msra.mxu0 0.0
    %1287 = vmatprep.subr.mxu0 0.0
    %1288 = vmatpush2.msra.mxu0 0.0
    %1289 = vmatprep.subr.mxu0 0.0
    %1290 = vmatpush2.msra.mxu0 0.0
    %1291 = vmatprep.subr.mxu0 0.0
    %1292 = vmatpush2.msra.mxu0 0.0
    %1293 = vmatprep.subr.mxu0 0.0
    %1294 = vmatpush2.msra.mxu0 0.0
    %1295 = vmatprep.subr.mxu0 0.0
    %1296 = vmatpush2.msra.mxu0 0.0
    %1297 = vmatprep.subr.mxu0 0.0
    %1298 = vmatpush2.msra.mxu0 0.0
    %1299 = vmatprep.subr.mxu0 0.0
    %1300 = vmatpush2.msra.mxu0 0.0
    %1301 = vmatprep.mubr.f32.mxu0 0.0
    %1302 = vmatmul.mubr.f32.gmra.mxu0 %v866
    %v1303 = vpop.f32.mrf.mxu0
    %v1304 = vadd.f32 0.0, %v1303
    %v1305 = vpop.f32.mrf.mxu0
    %1306 = vmatprep.mubr.f32.mxu0 0.0
    %1307 = vmatmul.mubr.f32.gmra.mxu0 %v869
    %v1308 = vpop.f32.mrf.mxu0
    %v1309 = vadd.f32 0.0, %v1308
    %v1310 = vpop.f32.mrf.mxu0
    %1311 = vmatprep.mubr.f32.mxu0 0.0
    %1312 = vmatmul.mubr.f32.gmra.mxu0 %v872
    %v1313 = vpop.f32.mrf.mxu0
    %v1314 = vadd.f32 0.0, %v1313
    %v1315 = vpop.f32.mrf.mxu0
    %1316 = vmatprep.mubr.f32.mxu0 0.0
    %1317 = vmatmul.mubr.f32.gmra.mxu0 %v875
    %v1318 = vpop.f32.mrf.mxu0
    %v1319 = vadd.f32 0.0, %v1318
    %v1320 = vpop.f32.mrf.mxu0
    %1321 = vmatprep.mubr.f32.mxu0 0.0
    %1322 = vmatmul.mubr.f32.gmra.mxu0 %v878
    %v1323 = vpop.f32.mrf.mxu0
    %v1324 = vadd.f32 0.0, %v1323
    %v1325 = vpop.f32.mrf.mxu0
    %1326 = vmatprep.mubr.f32.mxu0 0.0
    %1327 = vmatmul.mubr.f32.gmra.mxu0 %v881
    %v1328 = vpop.f32.mrf.mxu0
    %v1329 = vadd.f32 0.0, %v1328
    %v1330 = vpop.f32.mrf.mxu0
    %1331 = vmatprep.mubr.f32.mxu0 0.0
    %1332 = vmatmul.mubr.f32.gmra.mxu0 %v884
    %v1333 = vpop.f32.mrf.mxu0
    %v1334 = vadd.f32 0.0, %v1333
    %v1335 = vpop.f32.mrf.mxu0
    %1336 = vmatprep.mubr.f32.mxu0 0.0
    %1337 = vmatmul.mubr.f32.gmra.mxu0 %v887
    %v1338 = vpop.f32.mrf.mxu0
    %v1339 = vadd.f32 0.0, %v1338
    %v1340 = vpop.f32.mrf.mxu0
    %1341 = vdwg.mxu0
    %v1342 = vadd.f32 %v1195, %v1304
    %v1343 = vadd.f32 %v1200, %v1309
    %v1344 = vadd.f32 %v1205, %v1314
    %v1345 = vadd.f32 %v1210, %v1319
    %v1346 = vadd.f32 %v1215, %v1324
    %v1347 = vadd.f32 %v1220, %v1329
    %v1348 = vadd.f32 %v1225, %v1334
    %v1349 = vadd.f32 %v1230, %v1339
    %v1350 = vld [vmem:[%s14] sm:$0x1]
    %v1352 = vlaneseq
    %v1353 = vshrl.u32 %v1352, 7
    %v1354 = vsub.s32 0, %v1353
    %v1355 = vrot.slane %v1350, %v1354
    %v1357 = vadd.f32 %v1342, %v1355
    %v1358 = vadd.f32 %v1343, %v1355
    %v1359 = vadd.f32 %v1344, %v1355
    %v1360 = vadd.f32 %v1345, %v1355
    %v1361 = vadd.f32 %v1346, %v1355
    %v1362 = vadd.f32 %v1347, %v1355
    %v1363 = vadd.f32 %v1348, %v1355
    %v1364 = vadd.f32 %v1349, %v1355
    %v1365 = vsub.f32 0.0, %v1013
    %v1366 = vsub.f32 0.0, %v1014
    %v1367 = vsub.f32 0.0, %v1015
    %v1368 = vsub.f32 0.0, %v1016
    %v1369 = vsub.f32 0.0, %v1017
    %v1370 = vsub.f32 0.0, %v1018
    %v1371 = vsub.f32 0.0, %v1019
    %v1372 = vsub.f32 0.0, %v1020
    %v1373 = vmul.f32 %v1365, 1.442695
    %v1374 = vpow.pop %v1373
    %v1375 = vmul.f32 %v1366, 1.442695
    %v1376 = vpow.pop %v1375
    %v1377 = vmul.f32 %v1367, 1.442695
    %v1378 = vpow.pop %v1377
    %v1379 = vmul.f32 %v1368, 1.442695
    %v1380 = vpow.pop %v1379
    %v1381 = vmul.f32 %v1369, 1.442695
    %v1382 = vpow.pop %v1381
    %v1383 = vmul.f32 %v1370, 1.442695
    %v1384 = vpow.pop %v1383
    %v1385 = vmul.f32 %v1371, 1.442695
    %v1386 = vpow.pop %v1385
    %v1387 = vmul.f32 %v1372, 1.442695
    %v1388 = vpow.pop %v1387
    %v1389 = vadd.f32 %v1374, 1.0
    %v1390 = vadd.f32 %v1376, 1.0
    %v1391 = vadd.f32 %v1378, 1.0
    %v1392 = vadd.f32 %v1380, 1.0
    %v1393 = vadd.f32 %v1382, 1.0
    %v1394 = vadd.f32 %v1384, 1.0
    %v1395 = vadd.f32 %v1386, 1.0
    %v1396 = vadd.f32 %v1388, 1.0
    %v1397 = vrcp.pop %v1389
    %v1398 = vmul.f32 1.0, %v1397
    %v1399 = vrcp.pop %v1390
    %v1400 = vmul.f32 1.0, %v1399
    %v1401 = vrcp.pop %v1391
    %v1402 = vmul.f32 1.0, %v1401
    %v1403 = vrcp.pop %v1392
    %v1404 = vmul.f32 1.0, %v1403
    %v1405 = vrcp.pop %v1393
    %v1406 = vmul.f32 1.0, %v1405
    %v1407 = vrcp.pop %v1394
    %v1408 = vmul.f32 1.0, %v1407
    %v1409 = vrcp.pop %v1395
    %v1410 = vmul.f32 1.0, %v1409
    %v1411 = vrcp.pop %v1396
    %v1412 = vmul.f32 1.0, %v1411
    %v1413 = vmax.f32 %v1357, 0.0
    %v1414 = vmax.f32 %v1358, 0.0
    %v1415 = vmax.f32 %v1359, 0.0
    %v1416 = vmax.f32 %v1360, 0.0
    %v1417 = vmax.f32 %v1361, 0.0
    %v1418 = vmax.f32 %v1362, 0.0
    %v1419 = vmax.f32 %v1363, 0.0
    %v1420 = vmax.f32 %v1364, 0.0
    %v1421 = vand.u32 2147483647, %v1357
    %v1422 = vand.u32 2147483647, %v1358
    %v1423 = vand.u32 2147483647, %v1359
    %v1424 = vand.u32 2147483647, %v1360
    %v1425 = vand.u32 2147483647, %v1361
    %v1426 = vand.u32 2147483647, %v1362
    %v1427 = vand.u32 2147483647, %v1363
    %v1428 = vand.u32 2147483647, %v1364
    %v1429 = vsub.f32 0.0, %v1421
    %v1430 = vsub.f32 0.0, %v1422
    %v1431 = vsub.f32 0.0, %v1423
    %v1432 = vsub.f32 0.0, %v1424
    %v1433 = vsub.f32 0.0, %v1425
    %v1434 = vsub.f32 0.0, %v1426
    %v1435 = vsub.f32 0.0, %v1427
    %v1436 = vsub.f32 0.0, %v1428
    %v1437 = vmul.f32 %v1429, 1.442695
    %v1438 = vpow.pop %v1437
    %v1439 = vmul.f32 %v1430, 1.442695
    %v1440 = vpow.pop %v1439
    %v1441 = vmul.f32 %v1431, 1.442695
    %v1442 = vpow.pop %v1441
    %v1443 = vmul.f32 %v1432, 1.442695
    %v1444 = vpow.pop %v1443
    %v1445 = vmul.f32 %v1433, 1.442695
    %v1446 = vpow.pop %v1445
    %v1447 = vmul.f32 %v1434, 1.442695
    %v1448 = vpow.pop %v1447
    %v1449 = vmul.f32 %v1435, 1.442695
    %v1450 = vpow.pop %v1449
    %v1451 = vmul.f32 %v1436, 1.442695
    %v1452 = vpow.pop %v1451
    %v1453 = vadd.f32 %v1438, 1.0
    %v1454 = vadd.f32 %v1440, 1.0
    %v1455 = vadd.f32 %v1442, 1.0
    %v1456 = vadd.f32 %v1444, 1.0
    %v1457 = vadd.f32 %v1446, 1.0
    %v1458 = vadd.f32 %v1448, 1.0
    %v1459 = vadd.f32 %v1450, 1.0
    %v1460 = vadd.f32 %v1452, 1.0
    %v1461 = vlog2.pop %v1453
    %v1462 = vmul.f32 %v1461, 0.6931472
    %v1463 = vlog2.pop %v1454
    %v1464 = vmul.f32 %v1463, 0.6931472
    %v1465 = vlog2.pop %v1455
    %v1466 = vmul.f32 %v1465, 0.6931472
    %v1467 = vlog2.pop %v1456
    %v1468 = vmul.f32 %v1467, 0.6931472
    %v1469 = vlog2.pop %v1457
    %v1470 = vmul.f32 %v1469, 0.6931472
    %v1471 = vlog2.pop %v1458
    %v1472 = vmul.f32 %v1471, 0.6931472
    %v1473 = vlog2.pop %v1459
    %v1474 = vmul.f32 %v1473, 0.6931472
    %v1475 = vlog2.pop %v1460
    %v1476 = vmul.f32 %v1475, 0.6931472
    %v1477 = vadd.f32 %v1413, %v1462
    %v1478 = vadd.f32 %v1414, %v1464
    %v1479 = vadd.f32 %v1415, %v1466
    %v1480 = vadd.f32 %v1416, %v1468
    %v1481 = vadd.f32 %v1417, %v1470
    %v1482 = vadd.f32 %v1418, %v1472
    %v1483 = vadd.f32 %v1419, %v1474
    %v1484 = vadd.f32 %v1420, %v1476
    %v1485 = vmul.f32 %v1398, %v1477
    %v1486 = vmul.f32 %v1400, %v1478
    %v1487 = vmul.f32 %v1402, %v1479
    %v1488 = vmul.f32 %v1404, %v1480
    %v1489 = vmul.f32 %v1406, %v1481
    %v1490 = vmul.f32 %v1408, %v1482
    %v1491 = vmul.f32 %v1410, %v1483
    %v1492 = vmul.f32 %v1412, %v1484
    %vm1493 = vcmask 523264
    %v1495 = vsel %vm1493, %v224, 0
    %v1498 = vsel %vm1493, %v225, 0
    %v1501 = vsel %vm1493, %v226, 0
    %v1504 = vsel %vm1493, %v227, 0
    %1506 = vmatprep.subr.mxu0 0.0
    %1507 = vmatpush1.msra.mxu0 0.0
    %1508 = vmatprep.subr.mxu0 0.0
    %1509 = vmatpush1.msra.mxu0 0.0
    %1510 = vmatprep.subr.mxu0 0.0
    %1511 = vmatpush1.msra.mxu0 0.0
    %1512 = vmatprep.subr.mxu0 0.0
    %1513 = vmatpush1.msra.mxu0 0.0
    %1514 = vmatprep.subr.mxu0 0.0
    %1515 = vmatpush1.msra.mxu0 0.0
    %1516 = vmatprep.subr.mxu0 0.0
    %1517 = vmatpush1.msra.mxu0 0.0
    %1518 = vmatprep.subr.mxu0 0.0
    %1519 = vmatpush1.msra.mxu0 0.0
    %1520 = vmatprep.subr.mxu0 0.0
    %1521 = vmatpush1.msra.mxu0 0.0
    %1522 = vmatprep.subr.mxu0 0.0
    %1523 = vmatpush1.msra.mxu0 %v1492
    %1524 = vmatprep.subr.mxu0 0.0
    %1525 = vmatpush1.msra.mxu0 %v1491
    %1526 = vmatprep.subr.mxu0 0.0
    %1527 = vmatpush1.msra.mxu0 %v1490
    %1528 = vmatprep.subr.mxu0 0.0
    %1529 = vmatpush1.msra.mxu0 %v1489
    %1530 = vmatprep.subr.mxu0 0.0
    %1531 = vmatpush1.msra.mxu0 %v1488
    %1532 = vmatprep.subr.mxu0 0.0
    %1533 = vmatpush1.msra.mxu0 %v1487
    %1534 = vmatprep.subr.mxu0 0.0
    %1535 = vmatpush1.msra.mxu0 %v1486
    %1536 = vmatprep.subr.mxu0 0.0
    %1537 = vmatpush1.msra.mxu0 %v1485
    %1538 = vmatprep.subr.mxu0 0.0
    %1539 = vmatpush2.msra.mxu0 0.0
    %1540 = vmatprep.subr.mxu0 0.0
    %1541 = vmatpush2.msra.mxu0 0.0
    %1542 = vmatprep.subr.mxu0 0.0
    %1543 = vmatpush2.msra.mxu0 0.0
    %1544 = vmatprep.subr.mxu0 0.0
    %1545 = vmatpush2.msra.mxu0 0.0
    %1546 = vmatprep.subr.mxu0 0.0
    %1547 = vmatpush2.msra.mxu0 0.0
    %1548 = vmatprep.subr.mxu0 0.0
    %1549 = vmatpush2.msra.mxu0 0.0
    %1550 = vmatprep.subr.mxu0 0.0
    %1551 = vmatpush2.msra.mxu0 0.0
    %1552 = vmatprep.subr.mxu0 0.0
    %1553 = vmatpush2.msra.mxu0 0.0
    %1554 = vmatprep.subr.mxu0 0.0
    %1555 = vmatpush2.msra.mxu0 0.0
    %1556 = vmatprep.subr.mxu0 0.0
    %1557 = vmatpush2.msra.mxu0 0.0
    %1558 = vmatprep.subr.mxu0 0.0
    %1559 = vmatpush2.msra.mxu0 0.0
    %1560 = vmatprep.subr.mxu0 0.0
    %1561 = vmatpush2.msra.mxu0 0.0
    %1562 = vmatprep.subr.mxu0 0.0
    %1563 = vmatpush2.msra.mxu0 0.0
    %1564 = vmatprep.subr.mxu0 0.0
    %1565 = vmatpush2.msra.mxu0 0.0
    %1566 = vmatprep.subr.mxu0 0.0
    %1567 = vmatpush2.msra.mxu0 0.0
    %1568 = vmatprep.subr.mxu0 0.0
    %1569 = vmatpush2.msra.mxu0 0.0
    %1570 = vmatprep.mubr.f32.mxu0 0.0
    %1571 = vmatmul.mubr.f32.gmra.mxu0 %v1495
    %v1572 = vpop.f32.mrf.mxu0
    %v1573 = vadd.f32 0.0, %v1572
    %v1574 = vpop.f32.mrf.mxu0
    %1575 = vmatprep.mubr.f32.mxu0 0.0
    %1576 = vmatmul.mubr.f32.gmra.mxu0 %v1498
    %v1577 = vpop.f32.mrf.mxu0
    %v1578 = vadd.f32 0.0, %v1577
    %v1579 = vpop.f32.mrf.mxu0
    %1580 = vmatprep.mubr.f32.mxu0 0.0
    %1581 = vmatmul.mubr.f32.gmra.mxu0 %v1501
    %v1582 = vpop.f32.mrf.mxu0
    %v1583 = vadd.f32 0.0, %v1582
    %v1584 = vpop.f32.mrf.mxu0
    %1585 = vmatprep.mubr.f32.mxu0 0.0
    %1586 = vmatmul.mubr.f32.gmra.mxu0 %v1504
    %v1587 = vpop.f32.mrf.mxu0
    %v1588 = vadd.f32 0.0, %v1587
    %v1589 = vpop.f32.mrf.mxu0
    %1590 = vdwg.mxu0
    %v1591 = vadd.f32 %v339, %v1573
    %v1592 = vadd.f32 %v340, %v1578
    %v1593 = vadd.f32 %v341, %v1583
    %v1594 = vadd.f32 %v342, %v1588
    %v1595 = vld [vmem:[%s15] sm:$0xff]
    %v1596 = vld [vmem:[%s16] sm:$0x1]
    %v1598 = vlaneseq
    %v1599 = vshrl.u32 %v1598, 7
    %v1600 = vsub.s32 0, %v1599
    %v1601 = vrot.slane %v1596, %v1600
    %v1604 = vsel %vm604, %v1591, 0
    %v1607 = vsel %vm604, %v1592, 0
    %v1610 = vsel %vm604, %v1593, 0
    %v1613 = vsel %vm604, %v1594, 0
    %1615 = vmatprep.subr.mxu0 0.0
    %1616 = vmatpush1.msra.mxu0 0.0
    %1617 = vmatprep.subr.mxu0 0.0
    %1618 = vmatpush1.msra.mxu0 0.0
    %1619 = vmatprep.subr.mxu0 0.0
    %1620 = vmatpush1.msra.mxu0 0.0
    %1621 = vmatprep.subr.mxu0 0.0
    %1622 = vmatpush1.msra.mxu0 0.0
    %1623 = vmatprep.subr.mxu0 0.0
    %1624 = vmatpush1.msra.mxu0 0.0
    %1625 = vmatprep.subr.mxu0 0.0
    %1626 = vmatpush1.msra.mxu0 0.0
    %1627 = vmatprep.subr.mxu0 0.0
    %1628 = vmatpush1.msra.mxu0 0.0
    %1629 = vmatprep.subr.mxu0 0.0
    %1630 = vmatpush1.msra.mxu0 0.0
    %1631 = vmatprep.subr.mxu0 0.0
    %1632 = vmatpush1.msra.mxu0 0.0
    %1633 = vmatprep.subr.mxu0 0.0
    %1634 = vmatpush1.msra.mxu0 0.0
    %1635 = vmatprep.subr.mxu0 0.0
    %1636 = vmatpush1.msra.mxu0 0.0
    %1637 = vmatprep.subr.mxu0 0.0
    %1638 = vmatpush1.msra.mxu0 0.0
    %1639 = vmatprep.subr.mxu0 0.0
    %1640 = vmatpush1.msra.mxu0 0.0
    %1641 = vmatprep.subr.mxu0 0.0
    %1642 = vmatpush1.msra.mxu0 0.0
    %1643 = vmatprep.subr.mxu0 0.0
    %1644 = vmatpush1.msra.mxu0 0.0
    %1645 = vmatprep.subr.mxu0 0.0
    %1646 = vmatpush1.msra.mxu0 %v1595
    %1647 = vmatprep.subr.mxu0 0.0
    %1648 = vmatpush2.msra.mxu0 0.0
    %1649 = vmatprep.subr.mxu0 0.0
    %1650 = vmatpush2.msra.mxu0 0.0
    %1651 = vmatprep.subr.mxu0 0.0
    %1652 = vmatpush2.msra.mxu0 0.0
    %1653 = vmatprep.subr.mxu0 0.0
    %1654 = vmatpush2.msra.mxu0 0.0
    %1655 = vmatprep.subr.mxu0 0.0
    %1656 = vmatpush2.msra.mxu0 0.0
    %1657 = vmatprep.subr.mxu0 0.0
    %1658 = vmatpush2.msra.mxu0 0.0
    %1659 = vmatprep.subr.mxu0 0.0
    %1660 = vmatpush2.msra.mxu0 0.0
    %1661 = vmatprep.subr.mxu0 0.0
    %1662 = vmatpush2.msra.mxu0 0.0
    %1663 = vmatprep.subr.mxu0 0.0
    %1664 = vmatpush2.msra.mxu0 0.0
    %1665 = vmatprep.subr.mxu0 0.0
    %1666 = vmatpush2.msra.mxu0 0.0
    %1667 = vmatprep.subr.mxu0 0.0
    %1668 = vmatpush2.msra.mxu0 0.0
    %1669 = vmatprep.subr.mxu0 0.0
    %1670 = vmatpush2.msra.mxu0 0.0
    %1671 = vmatprep.subr.mxu0 0.0
    %1672 = vmatpush2.msra.mxu0 0.0
    %1673 = vmatprep.subr.mxu0 0.0
    %1674 = vmatpush2.msra.mxu0 0.0
    %1675 = vmatprep.subr.mxu0 0.0
    %1676 = vmatpush2.msra.mxu0 0.0
    %1677 = vmatprep.subr.mxu0 0.0
    %1678 = vmatpush2.msra.mxu0 0.0
    %1679 = vmatprep.mubr.f32.mxu0 0.0
    %1680 = vmatmul.mubr.f32.gmra.mxu0 %v1604
    %v1681 = vpop.f32.mrf.mxu0
    %v1682 = vadd.f32 %v1601, %v1681
    %v1683 = vpop.f32.mrf.mxu0
    %1684 = vmatprep.mubr.f32.mxu0 0.0
    %1685 = vmatmul.mubr.f32.gmra.mxu0 %v1607
    %v1686 = vpop.f32.mrf.mxu0
    %v1687 = vadd.f32 %v1601, %v1686
    %v1688 = vpop.f32.mrf.mxu0
    %1689 = vmatprep.mubr.f32.mxu0 0.0
    %1690 = vmatmul.mubr.f32.gmra.mxu0 %v1610
    %v1691 = vpop.f32.mrf.mxu0
    %v1692 = vadd.f32 %v1601, %v1691
    %v1693 = vpop.f32.mrf.mxu0
    %1694 = vmatprep.mubr.f32.mxu0 0.0
    %1695 = vmatmul.mubr.f32.gmra.mxu0 %v1613
    %v1696 = vpop.f32.mrf.mxu0
    %v1697 = vadd.f32 %v1601, %v1696
    %v1698 = vpop.f32.mrf.mxu0
    %1699 = vdwg.mxu0
    %v1700 = vmax.f32 %v1682, 0.0
    %v1701 = vmax.f32 %v1687, 0.0
    %v1702 = vmax.f32 %v1692, 0.0
    %v1703 = vmax.f32 %v1697, 0.0
    %1704 = vmatprep.subr.mxu0 0.0
    %1705 = vmatpush1.msra.mxu0 0.0
    %1706 = vmatprep.subr.mxu0 0.0
    %1707 = vmatpush1.msra.mxu0 0.0
    %1708 = vmatprep.subr.mxu0 0.0
    %1709 = vmatpush1.msra.mxu0 0.0
    %1710 = vmatprep.subr.mxu0 0.0
    %1711 = vmatpush1.msra.mxu0 0.0
    %1712 = vmatprep.subr.mxu0 0.0
    %1713 = vmatpush1.msra.mxu0 0.0
    %1714 = vmatprep.subr.mxu0 0.0
    %1715 = vmatpush1.msra.mxu0 0.0
    %1716 = vmatprep.subr.mxu0 0.0
    %1717 = vmatpush1.msra.mxu0 0.0
    %1718 = vmatprep.subr.mxu0 0.0
    %1719 = vmatpush1.msra.mxu0 0.0
    %1720 = vmatprep.subr.mxu0 0.0
    %1721 = vmatpush1.msra.mxu0 0.0
    %1722 = vmatprep.subr.mxu0 0.0
    %1723 = vmatpush1.msra.mxu0 0.0
    %1724 = vmatprep.subr.mxu0 0.0
    %1725 = vmatpush1.msra.mxu0 0.0
    %1726 = vmatprep.subr.mxu0 0.0
    %1727 = vmatpush1.msra.mxu0 0.0
    %1728 = vmatprep.subr.mxu0 0.0
    %1729 = vmatpush1.msra.mxu0 %v1703
    %1730 = vmatprep.subr.mxu0 0.0
    %1731 = vmatpush1.msra.mxu0 %v1702
    %1732 = vmatprep.subr.mxu0 0.0
    %1733 = vmatpush1.msra.mxu0 %v1701
    %1734 = vmatprep.subr.mxu0 0.0
    %1735 = vmatpush1.msra.mxu0 %v1700
    %1736 = vmatprep.subr.mxu0 0.0
    %1737 = vmatpush2.msra.mxu0 0.0
    %1738 = vmatprep.subr.mxu0 0.0
    %1739 = vmatpush2.msra.mxu0 0.0
    %1740 = vmatprep.subr.mxu0 0.0
    %1741 = vmatpush2.msra.mxu0 0.0
    %1742 = vmatprep.subr.mxu0 0.0
    %1743 = vmatpush2.msra.mxu0 0.0
    %1744 = vmatprep.subr.mxu0 0.0
    %1745 = vmatpush2.msra.mxu0 0.0
    %1746 = vmatprep.subr.mxu0 0.0
    %1747 = vmatpush2.msra.mxu0 0.0
    %1748 = vmatprep.subr.mxu0 0.0
    %1749 = vmatpush2.msra.mxu0 0.0
    %1750 = vmatprep.subr.mxu0 0.0
    %1751 = vmatpush2.msra.mxu0 0.0
    %1752 = vmatprep.subr.mxu0 0.0
    %1753 = vmatpush2.msra.mxu0 0.0
    %1754 = vmatprep.subr.mxu0 0.0
    %1755 = vmatpush2.msra.mxu0 0.0
    %1756 = vmatprep.subr.mxu0 0.0
    %1757 = vmatpush2.msra.mxu0 0.0
    %1758 = vmatprep.subr.mxu0 0.0
    %1759 = vmatpush2.msra.mxu0 0.0
    %1760 = vmatprep.subr.mxu0 0.0
    %1761 = vmatpush2.msra.mxu0 0.0
    %1762 = vmatprep.subr.mxu0 0.0
    %1763 = vmatpush2.msra.mxu0 0.0
    %1764 = vmatprep.subr.mxu0 0.0
    %1765 = vmatpush2.msra.mxu0 0.0
    %1766 = vmatprep.subr.mxu0 0.0
    %1767 = vmatpush2.msra.mxu0 0.0
    %1768 = vmatprep.mubr.f32.mxu0 0.0
    %1769 = vmatmul.mubr.f32.gmra.mxu0 %v345
    %v1770 = vpop.f32.mrf.mxu0
    %v1771 = vadd.f32 0.0, %v1770
    %v1772 = vpop.f32.mrf.mxu0
    %1773 = vmatprep.mubr.f32.mxu0 0.0
    %1774 = vmatmul.mubr.f32.gmra.mxu0 %v348
    %v1775 = vpop.f32.mrf.mxu0
    %v1776 = vadd.f32 0.0, %v1775
    %v1777 = vpop.f32.mrf.mxu0
    %1778 = vmatprep.mubr.f32.mxu0 0.0
    %1779 = vmatmul.mubr.f32.gmra.mxu0 %v351
    %v1780 = vpop.f32.mrf.mxu0
    %v1781 = vadd.f32 0.0, %v1780
    %v1782 = vpop.f32.mrf.mxu0
    %1783 = vmatprep.mubr.f32.mxu0 0.0
    %1784 = vmatmul.mubr.f32.gmra.mxu0 %v354
    %v1785 = vpop.f32.mrf.mxu0
    %v1786 = vadd.f32 0.0, %v1785
    %v1787 = vpop.f32.mrf.mxu0
    %1788 = vmatprep.mubr.f32.mxu0 0.0
    %1789 = vmatmul.mubr.f32.gmra.mxu0 %v357
    %v1790 = vpop.f32.mrf.mxu0
    %v1791 = vadd.f32 0.0, %v1790
    %v1792 = vpop.f32.mrf.mxu0
    %1793 = vmatprep.mubr.f32.mxu0 0.0
    %1794 = vmatmul.mubr.f32.gmra.mxu0 %v360
    %v1795 = vpop.f32.mrf.mxu0
    %v1796 = vadd.f32 0.0, %v1795
    %v1797 = vpop.f32.mrf.mxu0
    %1798 = vmatprep.mubr.f32.mxu0 0.0
    %1799 = vmatmul.mubr.f32.gmra.mxu0 %v363
    %v1800 = vpop.f32.mrf.mxu0
    %v1801 = vadd.f32 0.0, %v1800
    %v1802 = vpop.f32.mrf.mxu0
    %1803 = vmatprep.mubr.f32.mxu0 0.0
    %1804 = vmatmul.mubr.f32.gmra.mxu0 %v366
    %v1805 = vpop.f32.mrf.mxu0
    %v1806 = vadd.f32 0.0, %v1805
    %v1807 = vpop.f32.mrf.mxu0
    %1808 = vdwg.mxu0
    %1809 = vmatprep.subr.mxu0 0.0
    %1810 = vmatpush1.msra.mxu0 0.0
    %1811 = vmatprep.subr.mxu0 0.0
    %1812 = vmatpush1.msra.mxu0 0.0
    %1813 = vmatprep.subr.mxu0 0.0
    %1814 = vmatpush1.msra.mxu0 0.0
    %1815 = vmatprep.subr.mxu0 0.0
    %1816 = vmatpush1.msra.mxu0 0.0
    %1817 = vmatprep.subr.mxu0 0.0
    %1818 = vmatpush1.msra.mxu0 0.0
    %1819 = vmatprep.subr.mxu0 0.0
    %1820 = vmatpush1.msra.mxu0 0.0
    %1821 = vmatprep.subr.mxu0 0.0
    %1822 = vmatpush1.msra.mxu0 0.0
    %1823 = vmatprep.subr.mxu0 0.0
    %1824 = vmatpush1.msra.mxu0 0.0
    %1825 = vmatprep.subr.mxu0 0.0
    %1826 = vmatpush1.msra.mxu0 0.0
    %1827 = vmatprep.subr.mxu0 0.0
    %1828 = vmatpush1.msra.mxu0 0.0
    %1829 = vmatprep.subr.mxu0 0.0
    %1830 = vmatpush1.msra.mxu0 0.0
    %1831 = vmatprep.subr.mxu0 0.0
    %1832 = vmatpush1.msra.mxu0 0.0
    %1833 = vmatprep.subr.mxu0 0.0
    %1834 = vmatpush1.msra.mxu0 %v1703
    %1835 = vmatprep.subr.mxu0 0.0
    %1836 = vmatpush1.msra.mxu0 %v1702
    %1837 = vmatprep.subr.mxu0 0.0
    %1838 = vmatpush1.msra.mxu0 %v1701
    %1839 = vmatprep.subr.mxu0 0.0
    %1840 = vmatpush1.msra.mxu0 %v1700
    %1841 = vmatprep.subr.mxu0 0.0
    %1842 = vmatpush2.msra.mxu0 0.0
    %1843 = vmatprep.subr.mxu0 0.0
    %1844 = vmatpush2.msra.mxu0 0.0
    %1845 = vmatprep.subr.mxu0 0.0
    %1846 = vmatpush2.msra.mxu0 0.0
    %1847 = vmatprep.subr.mxu0 0.0
    %1848 = vmatpush2.msra.mxu0 0.0
    %1849 = vmatprep.subr.mxu0 0.0
    %1850 = vmatpush2.msra.mxu0 0.0
    %1851 = vmatprep.subr.mxu0 0.0
    %1852 = vmatpush2.msra.mxu0 0.0
    %1853 = vmatprep.subr.mxu0 0.0
    %1854 = vmatpush2.msra.mxu0 0.0
    %1855 = vmatprep.subr.mxu0 0.0
    %1856 = vmatpush2.msra.mxu0 0.0
    %1857 = vmatprep.subr.mxu0 0.0
    %1858 = vmatpush2.msra.mxu0 0.0
    %1859 = vmatprep.subr.mxu0 0.0
    %1860 = vmatpush2.msra.mxu0 0.0
    %1861 = vmatprep.subr.mxu0 0.0
    %1862 = vmatpush2.msra.mxu0 0.0
    %1863 = vmatprep.subr.mxu0 0.0
    %1864 = vmatpush2.msra.mxu0 0.0
    %1865 = vmatprep.subr.mxu0 0.0
    %1866 = vmatpush2.msra.mxu0 0.0
    %1867 = vmatprep.subr.mxu0 0.0
    %1868 = vmatpush2.msra.mxu0 0.0
    %1869 = vmatprep.subr.mxu0 0.0
    %1870 = vmatpush2.msra.mxu0 0.0
    %1871 = vmatprep.subr.mxu0 0.0
    %1872 = vmatpush2.msra.mxu0 0.0
    %1873 = vmatprep.mubr.f32.mxu0 0.0
    %1874 = vmatmul.mubr.f32.gmra.mxu0 %v474
    %v1875 = vpop.f32.mrf.mxu0
    %v1876 = vadd.f32 0.0, %v1875
    %v1877 = vpop.f32.mrf.mxu0
    %1878 = vmatprep.mubr.f32.mxu0 0.0
    %1879 = vmatmul.mubr.f32.gmra.mxu0 %v477
    %v1880 = vpop.f32.mrf.mxu0
    %v1881 = vadd.f32 0.0, %v1880
    %v1882 = vpop.f32.mrf.mxu0
    %1883 = vmatprep.mubr.f32.mxu0 0.0
    %1884 = vmatmul.mubr.f32.gmra.mxu0 %v480
    %v1885 = vpop.f32.mrf.mxu0
    %v1886 = vadd.f32 0.0, %v1885
    %v1887 = vpop.f32.mrf.mxu0
    %1888 = vmatprep.mubr.f32.mxu0 0.0
    %1889 = vmatmul.mubr.f32.gmra.mxu0 %v483
    %v1890 = vpop.f32.mrf.mxu0
    %v1891 = vadd.f32 0.0, %v1890
    %v1892 = vpop.f32.mrf.mxu0
    %1893 = vmatprep.mubr.f32.mxu0 0.0
    %1894 = vmatmul.mubr.f32.gmra.mxu0 %v486
    %v1895 = vpop.f32.mrf.mxu0
    %v1896 = vadd.f32 0.0, %v1895
    %v1897 = vpop.f32.mrf.mxu0
    %1898 = vmatprep.mubr.f32.mxu0 0.0
    %1899 = vmatmul.mubr.f32.gmra.mxu0 %v489
    %v1900 = vpop.f32.mrf.mxu0
    %v1901 = vadd.f32 0.0, %v1900
    %v1902 = vpop.f32.mrf.mxu0
    %1903 = vmatprep.mubr.f32.mxu0 0.0
    %1904 = vmatmul.mubr.f32.gmra.mxu0 %v492
    %v1905 = vpop.f32.mrf.mxu0
    %v1906 = vadd.f32 0.0, %v1905
    %v1907 = vpop.f32.mrf.mxu0
    %1908 = vmatprep.mubr.f32.mxu0 0.0
    %1909 = vmatmul.mubr.f32.gmra.mxu0 %v495
    %v1910 = vpop.f32.mrf.mxu0
    %v1911 = vadd.f32 0.0, %v1910
    %v1912 = vpop.f32.mrf.mxu0
    %1913 = vdwg.mxu0
    %s1914 = scalar_lea.vmem %s7, 8
    %v1915 = vld [vmem:[%s1914] sm:$0xff]
    %s1916 = scalar_lea.vmem %s8, 8
    %v1917 = vld [vmem:[%s1916] sm:$0xff]
    %v1919 = vsel %vm604, %v1771, 0
    %v1922 = vsel %vm604, %v1776, 0
    %v1925 = vsel %vm604, %v1781, 0
    %v1928 = vsel %vm604, %v1786, 0
    %v1931 = vsel %vm604, %v1791, 0
    %v1934 = vsel %vm604, %v1796, 0
    %v1937 = vsel %vm604, %v1801, 0
    %v1940 = vsel %vm604, %v1806, 0
    %1942 = vmatprep.subr.mxu0 0.0
    %1943 = vmatpush1.msra.mxu0 0.0
    %1944 = vmatprep.subr.mxu0 0.0
    %1945 = vmatpush1.msra.mxu0 0.0
    %1946 = vmatprep.subr.mxu0 0.0
    %1947 = vmatpush1.msra.mxu0 0.0
    %1948 = vmatprep.subr.mxu0 0.0
    %1949 = vmatpush1.msra.mxu0 0.0
    %1950 = vmatprep.subr.mxu0 0.0
    %1951 = vmatpush1.msra.mxu0 0.0
    %1952 = vmatprep.subr.mxu0 0.0
    %1953 = vmatpush1.msra.mxu0 0.0
    %1954 = vmatprep.subr.mxu0 0.0
    %1955 = vmatpush1.msra.mxu0 0.0
    %1956 = vmatprep.subr.mxu0 0.0
    %1957 = vmatpush1.msra.mxu0 0.0
    %1958 = vmatprep.subr.mxu0 0.0
    %1959 = vmatpush1.msra.mxu0 0.0
    %1960 = vmatprep.subr.mxu0 0.0
    %1961 = vmatpush1.msra.mxu0 0.0
    %1962 = vmatprep.subr.mxu0 0.0
    %1963 = vmatpush1.msra.mxu0 0.0
    %1964 = vmatprep.subr.mxu0 0.0
    %1965 = vmatpush1.msra.mxu0 0.0
    %1966 = vmatprep.subr.mxu0 0.0
    %1967 = vmatpush1.msra.mxu0 0.0
    %1968 = vmatprep.subr.mxu0 0.0
    %1969 = vmatpush1.msra.mxu0 0.0
    %1970 = vmatprep.subr.mxu0 0.0
    %1971 = vmatpush1.msra.mxu0 0.0
    %1972 = vmatprep.subr.mxu0 0.0
    %1973 = vmatpush1.msra.mxu0 %v1917
    %1974 = vmatprep.subr.mxu0 0.0
    %1975 = vmatpush2.msra.mxu0 0.0
    %1976 = vmatprep.subr.mxu0 0.0
    %1977 = vmatpush2.msra.mxu0 0.0
    %1978 = vmatprep.subr.mxu0 0.0
    %1979 = vmatpush2.msra.mxu0 0.0
    %1980 = vmatprep.subr.mxu0 0.0
    %1981 = vmatpush2.msra.mxu0 0.0
    %1982 = vmatprep.subr.mxu0 0.0
    %1983 = vmatpush2.msra.mxu0 0.0
    %1984 = vmatprep.subr.mxu0 0.0
    %1985 = vmatpush2.msra.mxu0 0.0
    %1986 = vmatprep.subr.mxu0 0.0
    %1987 = vmatpush2.msra.mxu0 0.0
    %1988 = vmatprep.subr.mxu0 0.0
    %1989 = vmatpush2.msra.mxu0 0.0
    %1990 = vmatprep.subr.mxu0 0.0
    %1991 = vmatpush2.msra.mxu0 0.0
    %1992 = vmatprep.subr.mxu0 0.0
    %1993 = vmatpush2.msra.mxu0 0.0
    %1994 = vmatprep.subr.mxu0 0.0
    %1995 = vmatpush2.msra.mxu0 0.0
    %1996 = vmatprep.subr.mxu0 0.0
    %1997 = vmatpush2.msra.mxu0 0.0
    %1998 = vmatprep.subr.mxu0 0.0
    %1999 = vmatpush2.msra.mxu0 0.0
    %2000 = vmatprep.subr.mxu0 0.0
    %2001 = vmatpush2.msra.mxu0 0.0
    %2002 = vmatprep.subr.mxu0 0.0
    %2003 = vmatpush2.msra.mxu0 0.0
    %2004 = vmatprep.subr.mxu0 0.0
    %2005 = vmatpush2.msra.mxu0 0.0
    %2006 = vmatprep.mubr.f32.mxu0 0.0
    %2007 = vmatmul.mubr.f32.gmra.mxu0 %v1919
    %v2008 = vpop.f32.mrf.mxu0
    %v2009 = vadd.f32 0.0, %v2008
    %v2010 = vpop.f32.mrf.mxu0
    %2011 = vmatprep.mubr.f32.mxu0 0.0
    %2012 = vmatmul.mubr.f32.gmra.mxu0 %v1922
    %v2013 = vpop.f32.mrf.mxu0
    %v2014 = vadd.f32 0.0, %v2013
    %v2015 = vpop.f32.mrf.mxu0
    %2016 = vmatprep.mubr.f32.mxu0 0.0
    %2017 = vmatmul.mubr.f32.gmra.mxu0 %v1925
    %v2018 = vpop.f32.mrf.mxu0
    %v2019 = vadd.f32 0.0, %v2018
    %v2020 = vpop.f32.mrf.mxu0
    %2021 = vmatprep.mubr.f32.mxu0 0.0
    %2022 = vmatmul.mubr.f32.gmra.mxu0 %v1928
    %v2023 = vpop.f32.mrf.mxu0
    %v2024 = vadd.f32 0.0, %v2023
    %v2025 = vpop.f32.mrf.mxu0
    %2026 = vmatprep.mubr.f32.mxu0 0.0
    %2027 = vmatmul.mubr.f32.gmra.mxu0 %v1931
    %v2028 = vpop.f32.mrf.mxu0
    %v2029 = vadd.f32 0.0, %v2028
    %v2030 = vpop.f32.mrf.mxu0
    %2031 = vmatprep.mubr.f32.mxu0 0.0
    %2032 = vmatmul.mubr.f32.gmra.mxu0 %v1934
    %v2033 = vpop.f32.mrf.mxu0
    %v2034 = vadd.f32 0.0, %v2033
    %v2035 = vpop.f32.mrf.mxu0
    %2036 = vmatprep.mubr.f32.mxu0 0.0
    %2037 = vmatmul.mubr.f32.gmra.mxu0 %v1937
    %v2038 = vpop.f32.mrf.mxu0
    %v2039 = vadd.f32 0.0, %v2038
    %v2040 = vpop.f32.mrf.mxu0
    %2041 = vmatprep.mubr.f32.mxu0 0.0
    %2042 = vmatmul.mubr.f32.gmra.mxu0 %v1940
    %v2043 = vpop.f32.mrf.mxu0
    %v2044 = vadd.f32 0.0, %v2043
    %v2045 = vpop.f32.mrf.mxu0
    %2046 = vdwg.mxu0
    %v2048 = vsel %vm604, %v1876, 0
    %v2051 = vsel %vm604, %v1881, 0
    %v2054 = vsel %vm604, %v1886, 0
    %v2057 = vsel %vm604, %v1891, 0
    %v2060 = vsel %vm604, %v1896, 0
    %v2063 = vsel %vm604, %v1901, 0
    %v2066 = vsel %vm604, %v1906, 0
    %v2069 = vsel %vm604, %v1911, 0
    %2071 = vmatprep.subr.mxu0 0.0
    %2072 = vmatpush1.msra.mxu0 0.0
    %2073 = vmatprep.subr.mxu0 0.0
    %2074 = vmatpush1.msra.mxu0 0.0
    %2075 = vmatprep.subr.mxu0 0.0
    %2076 = vmatpush1.msra.mxu0 0.0
    %2077 = vmatprep.subr.mxu0 0.0
    %2078 = vmatpush1.msra.mxu0 0.0
    %2079 = vmatprep.subr.mxu0 0.0
    %2080 = vmatpush1.msra.mxu0 0.0
    %2081 = vmatprep.subr.mxu0 0.0
    %2082 = vmatpush1.msra.mxu0 0.0
    %2083 = vmatprep.subr.mxu0 0.0
    %2084 = vmatpush1.msra.mxu0 0.0
    %2085 = vmatprep.subr.mxu0 0.0
    %2086 = vmatpush1.msra.mxu0 0.0
    %2087 = vmatprep.subr.mxu0 0.0
    %2088 = vmatpush1.msra.mxu0 0.0
    %2089 = vmatprep.subr.mxu0 0.0
    %2090 = vmatpush1.msra.mxu0 0.0
    %2091 = vmatprep.subr.mxu0 0.0
    %2092 = vmatpush1.msra.mxu0 0.0
    %2093 = vmatprep.subr.mxu0 0.0
    %2094 = vmatpush1.msra.mxu0 0.0
    %2095 = vmatprep.subr.mxu0 0.0
    %2096 = vmatpush1.msra.mxu0 0.0
    %2097 = vmatprep.subr.mxu0 0.0
    %2098 = vmatpush1.msra.mxu0 0.0
    %2099 = vmatprep.subr.mxu0 0.0
    %2100 = vmatpush1.msra.mxu0 0.0
    %2101 = vmatprep.subr.mxu0 0.0
    %2102 = vmatpush1.msra.mxu0 %v1915
    %2103 = vmatprep.subr.mxu0 0.0
    %2104 = vmatpush2.msra.mxu0 0.0
    %2105 = vmatprep.subr.mxu0 0.0
    %2106 = vmatpush2.msra.mxu0 0.0
    %2107 = vmatprep.subr.mxu0 0.0
    %2108 = vmatpush2.msra.mxu0 0.0
    %2109 = vmatprep.subr.mxu0 0.0
    %2110 = vmatpush2.msra.mxu0 0.0
    %2111 = vmatprep.subr.mxu0 0.0
    %2112 = vmatpush2.msra.mxu0 0.0
    %2113 = vmatprep.subr.mxu0 0.0
    %2114 = vmatpush2.msra.mxu0 0.0
    %2115 = vmatprep.subr.mxu0 0.0
    %2116 = vmatpush2.msra.mxu0 0.0
    %2117 = vmatprep.subr.mxu0 0.0
    %2118 = vmatpush2.msra.mxu0 0.0
    %2119 = vmatprep.subr.mxu0 0.0
    %2120 = vmatpush2.msra.mxu0 0.0
    %2121 = vmatprep.subr.mxu0 0.0
    %2122 = vmatpush2.msra.mxu0 0.0
    %2123 = vmatprep.subr.mxu0 0.0
    %2124 = vmatpush2.msra.mxu0 0.0
    %2125 = vmatprep.subr.mxu0 0.0
    %2126 = vmatpush2.msra.mxu0 0.0
    %2127 = vmatprep.subr.mxu0 0.0
    %2128 = vmatpush2.msra.mxu0 0.0
    %2129 = vmatprep.subr.mxu0 0.0
    %2130 = vmatpush2.msra.mxu0 0.0
    %2131 = vmatprep.subr.mxu0 0.0
    %2132 = vmatpush2.msra.mxu0 0.0
    %2133 = vmatprep.subr.mxu0 0.0
    %2134 = vmatpush2.msra.mxu0 0.0
    %2135 = vmatprep.mubr.f32.mxu0 0.0
    %2136 = vmatmul.mubr.f32.gmra.mxu0 %v2048
    %v2137 = vpop.f32.mrf.mxu0
    %v2138 = vadd.f32 %v2009, %v2137
    %v2139 = vpop.f32.mrf.mxu0
    %2140 = vmatprep.mubr.f32.mxu0 0.0
    %2141 = vmatmul.mubr.f32.gmra.mxu0 %v2051
    %v2142 = vpop.f32.mrf.mxu0
    %v2143 = vadd.f32 %v2014, %v2142
    %v2144 = vpop.f32.mrf.mxu0
    %2145 = vmatprep.mubr.f32.mxu0 0.0
    %2146 = vmatmul.mubr.f32.gmra.mxu0 %v2054
    %v2147 = vpop.f32.mrf.mxu0
    %v2148 = vadd.f32 %v2019, %v2147
    %v2149 = vpop.f32.mrf.mxu0
    %2150 = vmatprep.mubr.f32.mxu0 0.0
    %2151 = vmatmul.mubr.f32.gmra.mxu0 %v2057
    %v2152 = vpop.f32.mrf.mxu0
    %v2153 = vadd.f32 %v2024, %v2152
    %v2154 = vpop.f32.mrf.mxu0
    %2155 = vmatprep.mubr.f32.mxu0 0.0
    %2156 = vmatmul.mubr.f32.gmra.mxu0 %v2060
    %v2157 = vpop.f32.mrf.mxu0
    %v2158 = vadd.f32 %v2029, %v2157
    %v2159 = vpop.f32.mrf.mxu0
    %2160 = vmatprep.mubr.f32.mxu0 0.0
    %2161 = vmatmul.mubr.f32.gmra.mxu0 %v2063
    %v2162 = vpop.f32.mrf.mxu0
    %v2163 = vadd.f32 %v2034, %v2162
    %v2164 = vpop.f32.mrf.mxu0
    %2165 = vmatprep.mubr.f32.mxu0 0.0
    %2166 = vmatmul.mubr.f32.gmra.mxu0 %v2066
    %v2167 = vpop.f32.mrf.mxu0
    %v2168 = vadd.f32 %v2039, %v2167
    %v2169 = vpop.f32.mrf.mxu0
    %2170 = vmatprep.mubr.f32.mxu0 0.0
    %2171 = vmatmul.mubr.f32.gmra.mxu0 %v2069
    %v2172 = vpop.f32.mrf.mxu0
    %v2173 = vadd.f32 %v2044, %v2172
    %v2174 = vpop.f32.mrf.mxu0
    %2175 = vdwg.mxu0
    %s2176 = scalar_lea.vmem %s9, 4
    %v2177 = vld [vmem:[%s2176] sm:$0xf]
    %v2179 = vsel %vm889, %v2177, 0
    %2181 = vmatprep.subr.mxu0 0.0
    %2182 = vmatpush1.msra.mxu0 0.0
    %2183 = vmatprep.subr.mxu0 0.0
    %2184 = vmatpush1.msra.mxu0 0.0
    %2185 = vmatprep.subr.mxu0 0.0
    %2186 = vmatpush1.msra.mxu0 0.0
    %2187 = vmatprep.subr.mxu0 0.0
    %2188 = vmatpush1.msra.mxu0 0.0
    %2189 = vmatprep.subr.mxu0 0.0
    %2190 = vmatpush1.msra.mxu0 0.0
    %2191 = vmatprep.subr.mxu0 0.0
    %2192 = vmatpush1.msra.mxu0 0.0
    %2193 = vmatprep.subr.mxu0 0.0
    %2194 = vmatpush1.msra.mxu0 0.0
    %2195 = vmatprep.subr.mxu0 0.0
    %2196 = vmatpush1.msra.mxu0 0.0
    %2197 = vmatprep.subr.mxu0 0.0
    %2198 = vmatpush1.msra.mxu0 0.0
    %2199 = vmatprep.subr.mxu0 0.0
    %2200 = vmatpush1.msra.mxu0 0.0
    %2201 = vmatprep.subr.mxu0 0.0
    %2202 = vmatpush1.msra.mxu0 0.0
    %2203 = vmatprep.subr.mxu0 0.0
    %2204 = vmatpush1.msra.mxu0 0.0
    %2205 = vmatprep.subr.mxu0 0.0
    %2206 = vmatpush1.msra.mxu0 0.0
    %2207 = vmatprep.subr.mxu0 0.0
    %2208 = vmatpush1.msra.mxu0 0.0
    %2209 = vmatprep.subr.mxu0 0.0
    %2210 = vmatpush1.msra.mxu0 0.0
    %2211 = vmatprep.subr.mxu0 0.0
    %2212 = vmatpush1.msra.mxu0 %v2179
    %2213 = vmatprep.subr.mxu0 0.0
    %2214 = vmatpush2.msra.mxu0 0.0
    %2215 = vmatprep.subr.mxu0 0.0
    %2216 = vmatpush2.msra.mxu0 0.0
    %2217 = vmatprep.subr.mxu0 0.0
    %2218 = vmatpush2.msra.mxu0 0.0
    %2219 = vmatprep.subr.mxu0 0.0
    %2220 = vmatpush2.msra.mxu0 0.0
    %2221 = vmatprep.subr.mxu0 0.0
    %2222 = vmatpush2.msra.mxu0 0.0
    %2223 = vmatprep.subr.mxu0 0.0
    %2224 = vmatpush2.msra.mxu0 0.0
    %2225 = vmatprep.subr.mxu0 0.0
    %2226 = vmatpush2.msra.mxu0 0.0
    %2227 = vmatprep.subr.mxu0 0.0
    %2228 = vmatpush2.msra.mxu0 0.0
    %2229 = vmatprep.subr.mxu0 0.0
    %2230 = vmatpush2.msra.mxu0 0.0
    %2231 = vmatprep.subr.mxu0 0.0
    %2232 = vmatpush2.msra.mxu0 0.0
    %2233 = vmatprep.subr.mxu0 0.0
    %2234 = vmatpush2.msra.mxu0 0.0
    %2235 = vmatprep.subr.mxu0 0.0
    %2236 = vmatpush2.msra.mxu0 0.0
    %2237 = vmatprep.subr.mxu0 0.0
    %2238 = vmatpush2.msra.mxu0 0.0
    %2239 = vmatprep.subr.mxu0 0.0
    %2240 = vmatpush2.msra.mxu0 0.0
    %2241 = vmatprep.subr.mxu0 0.0
    %2242 = vmatpush2.msra.mxu0 0.0
    %2243 = vmatprep.subr.mxu0 0.0
    %2244 = vmatpush2.msra.mxu0 0.0
    %2245 = vmatprep.mubr.f32.mxu0 0.0
    %2246 = vmatmul.mubr.f32.gmra.mxu0 %v866
    %v2247 = vpop.f32.mrf.mxu0
    %v2248 = vadd.f32 0.0, %v2247
    %v2249 = vpop.f32.mrf.mxu0
    %2250 = vmatprep.mubr.f32.mxu0 0.0
    %2251 = vmatmul.mubr.f32.gmra.mxu0 %v869
    %v2252 = vpop.f32.mrf.mxu0
    %v2253 = vadd.f32 0.0, %v2252
    %v2254 = vpop.f32.mrf.mxu0
    %2255 = vmatprep.mubr.f32.mxu0 0.0
    %2256 = vmatmul.mubr.f32.gmra.mxu0 %v872
    %v2257 = vpop.f32.mrf.mxu0
    %v2258 = vadd.f32 0.0, %v2257
    %v2259 = vpop.f32.mrf.mxu0
    %2260 = vmatprep.mubr.f32.mxu0 0.0
    %2261 = vmatmul.mubr.f32.gmra.mxu0 %v875
    %v2262 = vpop.f32.mrf.mxu0
    %v2263 = vadd.f32 0.0, %v2262
    %v2264 = vpop.f32.mrf.mxu0
    %2265 = vmatprep.mubr.f32.mxu0 0.0
    %2266 = vmatmul.mubr.f32.gmra.mxu0 %v878
    %v2267 = vpop.f32.mrf.mxu0
    %v2268 = vadd.f32 0.0, %v2267
    %v2269 = vpop.f32.mrf.mxu0
    %2270 = vmatprep.mubr.f32.mxu0 0.0
    %2271 = vmatmul.mubr.f32.gmra.mxu0 %v881
    %v2272 = vpop.f32.mrf.mxu0
    %v2273 = vadd.f32 0.0, %v2272
    %v2274 = vpop.f32.mrf.mxu0
    %2275 = vmatprep.mubr.f32.mxu0 0.0
    %2276 = vmatmul.mubr.f32.gmra.mxu0 %v884
    %v2277 = vpop.f32.mrf.mxu0
    %v2278 = vadd.f32 0.0, %v2277
    %v2279 = vpop.f32.mrf.mxu0
    %2280 = vmatprep.mubr.f32.mxu0 0.0
    %2281 = vmatmul.mubr.f32.gmra.mxu0 %v887
    %v2282 = vpop.f32.mrf.mxu0
    %v2283 = vadd.f32 0.0, %v2282
    %v2284 = vpop.f32.mrf.mxu0
    %2285 = vdwg.mxu0
    %v2286 = vadd.f32 %v2138, %v2248
    %v2287 = vadd.f32 %v2143, %v2253
    %v2288 = vadd.f32 %v2148, %v2258
    %v2289 = vadd.f32 %v2153, %v2263
    %v2290 = vadd.f32 %v2158, %v2268
    %v2291 = vadd.f32 %v2163, %v2273
    %v2292 = vadd.f32 %v2168, %v2278
    %v2293 = vadd.f32 %v2173, %v2283
    %s2294 = scalar_lea.vmem %s10, 1
    %v2295 = vld [vmem:[%s2294] sm:$0x1]
    %v2297 = vlaneseq
    %v2298 = vshrl.u32 %v2297, 7
    %v2299 = vsub.s32 0, %v2298
    %v2300 = vrot.slane %v2295, %v2299
    %v2302 = vadd.f32 %v2286, %v2300
    %v2303 = vadd.f32 %v2287, %v2300
    %v2304 = vadd.f32 %v2288, %v2300
    %v2305 = vadd.f32 %v2289, %v2300
    %v2306 = vadd.f32 %v2290, %v2300
    %v2307 = vadd.f32 %v2291, %v2300
    %v2308 = vadd.f32 %v2292, %v2300
    %v2309 = vadd.f32 %v2293, %v2300
    %s2310 = scalar_lea.vmem %s11, 8
    %v2311 = vld [vmem:[%s2310] sm:$0xff]
    %s2312 = scalar_lea.vmem %s12, 8
    %v2313 = vld [vmem:[%s2312] sm:$0xff]
    %2314 = vmatprep.subr.mxu0 0.0
    %2315 = vmatpush1.msra.mxu0 0.0
    %2316 = vmatprep.subr.mxu0 0.0
    %2317 = vmatpush1.msra.mxu0 0.0
    %2318 = vmatprep.subr.mxu0 0.0
    %2319 = vmatpush1.msra.mxu0 0.0
    %2320 = vmatprep.subr.mxu0 0.0
    %2321 = vmatpush1.msra.mxu0 0.0
    %2322 = vmatprep.subr.mxu0 0.0
    %2323 = vmatpush1.msra.mxu0 0.0
    %2324 = vmatprep.subr.mxu0 0.0
    %2325 = vmatpush1.msra.mxu0 0.0
    %2326 = vmatprep.subr.mxu0 0.0
    %2327 = vmatpush1.msra.mxu0 0.0
    %2328 = vmatprep.subr.mxu0 0.0
    %2329 = vmatpush1.msra.mxu0 0.0
    %2330 = vmatprep.subr.mxu0 0.0
    %2331 = vmatpush1.msra.mxu0 0.0
    %2332 = vmatprep.subr.mxu0 0.0
    %2333 = vmatpush1.msra.mxu0 0.0
    %2334 = vmatprep.subr.mxu0 0.0
    %2335 = vmatpush1.msra.mxu0 0.0
    %2336 = vmatprep.subr.mxu0 0.0
    %2337 = vmatpush1.msra.mxu0 0.0
    %2338 = vmatprep.subr.mxu0 0.0
    %2339 = vmatpush1.msra.mxu0 0.0
    %2340 = vmatprep.subr.mxu0 0.0
    %2341 = vmatpush1.msra.mxu0 0.0
    %2342 = vmatprep.subr.mxu0 0.0
    %2343 = vmatpush1.msra.mxu0 0.0
    %2344 = vmatprep.subr.mxu0 0.0
    %2345 = vmatpush1.msra.mxu0 %v2313
    %2346 = vmatprep.subr.mxu0 0.0
    %2347 = vmatpush2.msra.mxu0 0.0
    %2348 = vmatprep.subr.mxu0 0.0
    %2349 = vmatpush2.msra.mxu0 0.0
    %2350 = vmatprep.subr.mxu0 0.0
    %2351 = vmatpush2.msra.mxu0 0.0
    %2352 = vmatprep.subr.mxu0 0.0
    %2353 = vmatpush2.msra.mxu0 0.0
    %2354 = vmatprep.subr.mxu0 0.0
    %2355 = vmatpush2.msra.mxu0 0.0
    %2356 = vmatprep.subr.mxu0 0.0
    %2357 = vmatpush2.msra.mxu0 0.0
    %2358 = vmatprep.subr.mxu0 0.0
    %2359 = vmatpush2.msra.mxu0 0.0
    %2360 = vmatprep.subr.mxu0 0.0
    %2361 = vmatpush2.msra.mxu0 0.0
    %2362 = vmatprep.subr.mxu0 0.0
    %2363 = vmatpush2.msra.mxu0 0.0
    %2364 = vmatprep.subr.mxu0 0.0
    %2365 = vmatpush2.msra.mxu0 0.0
    %2366 = vmatprep.subr.mxu0 0.0
    %2367 = vmatpush2.msra.mxu0 0.0
    %2368 = vmatprep.subr.mxu0 0.0
    %2369 = vmatpush2.msra.mxu0 0.0
    %2370 = vmatprep.subr.mxu0 0.0
    %2371 = vmatpush2.msra.mxu0 0.0
    %2372 = vmatprep.subr.mxu0 0.0
    %2373 = vmatpush2.msra.mxu0 0.0
    %2374 = vmatprep.subr.mxu0 0.0
    %2375 = vmatpush2.msra.mxu0 0.0
    %2376 = vmatprep.subr.mxu0 0.0
    %2377 = vmatpush2.msra.mxu0 0.0
    %2378 = vmatprep.mubr.f32.mxu0 0.0
    %2379 = vmatmul.mubr.f32.gmra.mxu0 %v1919
    %v2380 = vpop.f32.mrf.mxu0
    %v2381 = vadd.f32 0.0, %v2380
    %v2382 = vpop.f32.mrf.mxu0
    %2383 = vmatprep.mubr.f32.mxu0 0.0
    %2384 = vmatmul.mubr.f32.gmra.mxu0 %v1922
    %v2385 = vpop.f32.mrf.mxu0
    %v2386 = vadd.f32 0.0, %v2385
    %v2387 = vpop.f32.mrf.mxu0
    %2388 = vmatprep.mubr.f32.mxu0 0.0
    %2389 = vmatmul.mubr.f32.gmra.mxu0 %v1925
    %v2390 = vpop.f32.mrf.mxu0
    %v2391 = vadd.f32 0.0, %v2390
    %v2392 = vpop.f32.mrf.mxu0
    %2393 = vmatprep.mubr.f32.mxu0 0.0
    %2394 = vmatmul.mubr.f32.gmra.mxu0 %v1928
    %v2395 = vpop.f32.mrf.mxu0
    %v2396 = vadd.f32 0.0, %v2395
    %v2397 = vpop.f32.mrf.mxu0
    %2398 = vmatprep.mubr.f32.mxu0 0.0
    %2399 = vmatmul.mubr.f32.gmra.mxu0 %v1931
    %v2400 = vpop.f32.mrf.mxu0
    %v2401 = vadd.f32 0.0, %v2400
    %v2402 = vpop.f32.mrf.mxu0
    %2403 = vmatprep.mubr.f32.mxu0 0.0
    %2404 = vmatmul.mubr.f32.gmra.mxu0 %v1934
    %v2405 = vpop.f32.mrf.mxu0
    %v2406 = vadd.f32 0.0, %v2405
    %v2407 = vpop.f32.mrf.mxu0
    %2408 = vmatprep.mubr.f32.mxu0 0.0
    %2409 = vmatmul.mubr.f32.gmra.mxu0 %v1937
    %v2410 = vpop.f32.mrf.mxu0
    %v2411 = vadd.f32 0.0, %v2410
    %v2412 = vpop.f32.mrf.mxu0
    %2413 = vmatprep.mubr.f32.mxu0 0.0
    %2414 = vmatmul.mubr.f32.gmra.mxu0 %v1940
    %v2415 = vpop.f32.mrf.mxu0
    %v2416 = vadd.f32 0.0, %v2415
    %v2417 = vpop.f32.mrf.mxu0
    %2418 = vdwg.mxu0
    %2419 = vmatprep.subr.mxu0 0.0
    %2420 = vmatpush1.msra.mxu0 0.0
    %2421 = vmatprep.subr.mxu0 0.0
    %2422 = vmatpush1.msra.mxu0 0.0
    %2423 = vmatprep.subr.mxu0 0.0
    %2424 = vmatpush1.msra.mxu0 0.0
    %2425 = vmatprep.subr.mxu0 0.0
    %2426 = vmatpush1.msra.mxu0 0.0
    %2427 = vmatprep.subr.mxu0 0.0
    %2428 = vmatpush1.msra.mxu0 0.0
    %2429 = vmatprep.subr.mxu0 0.0
    %2430 = vmatpush1.msra.mxu0 0.0
    %2431 = vmatprep.subr.mxu0 0.0
    %2432 = vmatpush1.msra.mxu0 0.0
    %2433 = vmatprep.subr.mxu0 0.0
    %2434 = vmatpush1.msra.mxu0 0.0
    %2435 = vmatprep.subr.mxu0 0.0
    %2436 = vmatpush1.msra.mxu0 0.0
    %2437 = vmatprep.subr.mxu0 0.0
    %2438 = vmatpush1.msra.mxu0 0.0
    %2439 = vmatprep.subr.mxu0 0.0
    %2440 = vmatpush1.msra.mxu0 0.0
    %2441 = vmatprep.subr.mxu0 0.0
    %2442 = vmatpush1.msra.mxu0 0.0
    %2443 = vmatprep.subr.mxu0 0.0
    %2444 = vmatpush1.msra.mxu0 0.0
    %2445 = vmatprep.subr.mxu0 0.0
    %2446 = vmatpush1.msra.mxu0 0.0
    %2447 = vmatprep.subr.mxu0 0.0
    %2448 = vmatpush1.msra.mxu0 0.0
    %2449 = vmatprep.subr.mxu0 0.0
    %2450 = vmatpush1.msra.mxu0 %v2311
    %2451 = vmatprep.subr.mxu0 0.0
    %2452 = vmatpush2.msra.mxu0 0.0
    %2453 = vmatprep.subr.mxu0 0.0
    %2454 = vmatpush2.msra.mxu0 0.0
    %2455 = vmatprep.subr.mxu0 0.0
    %2456 = vmatpush2.msra.mxu0 0.0
    %2457 = vmatprep.subr.mxu0 0.0
    %2458 = vmatpush2.msra.mxu0 0.0
    %2459 = vmatprep.subr.mxu0 0.0
    %2460 = vmatpush2.msra.mxu0 0.0
    %2461 = vmatprep.subr.mxu0 0.0
    %2462 = vmatpush2.msra.mxu0 0.0
    %2463 = vmatprep.subr.mxu0 0.0
    %2464 = vmatpush2.msra.mxu0 0.0
    %2465 = vmatprep.subr.mxu0 0.0
    %2466 = vmatpush2.msra.mxu0 0.0
    %2467 = vmatprep.subr.mxu0 0.0
    %2468 = vmatpush2.msra.mxu0 0.0
    %2469 = vmatprep.subr.mxu0 0.0
    %2470 = vmatpush2.msra.mxu0 0.0
    %2471 = vmatprep.subr.mxu0 0.0
    %2472 = vmatpush2.msra.mxu0 0.0
    %2473 = vmatprep.subr.mxu0 0.0
    %2474 = vmatpush2.msra.mxu0 0.0
    %2475 = vmatprep.subr.mxu0 0.0
    %2476 = vmatpush2.msra.mxu0 0.0
    %2477 = vmatprep.subr.mxu0 0.0
    %2478 = vmatpush2.msra.mxu0 0.0
    %2479 = vmatprep.subr.mxu0 0.0
    %2480 = vmatpush2.msra.mxu0 0.0
    %2481 = vmatprep.subr.mxu0 0.0
    %2482 = vmatpush2.msra.mxu0 0.0
    %2483 = vmatprep.mubr.f32.mxu0 0.0
    %2484 = vmatmul.mubr.f32.gmra.mxu0 %v2048
    %v2485 = vpop.f32.mrf.mxu0
    %v2486 = vadd.f32 %v2381, %v2485
    %v2487 = vpop.f32.mrf.mxu0
    %2488 = vmatprep.mubr.f32.mxu0 0.0
    %2489 = vmatmul.mubr.f32.gmra.mxu0 %v2051
    %v2490 = vpop.f32.mrf.mxu0
    %v2491 = vadd.f32 %v2386, %v2490
    %v2492 = vpop.f32.mrf.mxu0
    %2493 = vmatprep.mubr.f32.mxu0 0.0
    %2494 = vmatmul.mubr.f32.gmra.mxu0 %v2054
    %v2495 = vpop.f32.mrf.mxu0
    %v2496 = vadd.f32 %v2391, %v2495
    %v2497 = vpop.f32.mrf.mxu0
    %2498 = vmatprep.mubr.f32.mxu0 0.0
    %2499 = vmatmul.mubr.f32.gmra.mxu0 %v2057
    %v2500 = vpop.f32.mrf.mxu0
    %v2501 = vadd.f32 %v2396, %v2500
    %v2502 = vpop.f32.mrf.mxu0
    %2503 = vmatprep.mubr.f32.mxu0 0.0
    %2504 = vmatmul.mubr.f32.gmra.mxu0 %v2060
    %v2505 = vpop.f32.mrf.mxu0
    %v2506 = vadd.f32 %v2401, %v2505
    %v2507 = vpop.f32.mrf.mxu0
    %2508 = vmatprep.mubr.f32.mxu0 0.0
    %2509 = vmatmul.mubr.f32.gmra.mxu0 %v2063
    %v2510 = vpop.f32.mrf.mxu0
    %v2511 = vadd.f32 %v2406, %v2510
    %v2512 = vpop.f32.mrf.mxu0
    %2513 = vmatprep.mubr.f32.mxu0 0.0
    %2514 = vmatmul.mubr.f32.gmra.mxu0 %v2066
    %v2515 = vpop.f32.mrf.mxu0
    %v2516 = vadd.f32 %v2411, %v2515
    %v2517 = vpop.f32.mrf.mxu0
    %2518 = vmatprep.mubr.f32.mxu0 0.0
    %2519 = vmatmul.mubr.f32.gmra.mxu0 %v2069
    %v2520 = vpop.f32.mrf.mxu0
    %v2521 = vadd.f32 %v2416, %v2520
    %v2522 = vpop.f32.mrf.mxu0
    %2523 = vdwg.mxu0
    %s2524 = scalar_lea.vmem %s13, 4
    %v2525 = vld [vmem:[%s2524] sm:$0xf]
    %v2527 = vsel %vm889, %v2525, 0
    %2529 = vmatprep.subr.mxu0 0.0
    %2530 = vmatpush1.msra.mxu0 0.0
    %2531 = vmatprep.subr.mxu0 0.0
    %2532 = vmatpush1.msra.mxu0 0.0
    %2533 = vmatprep.subr.mxu0 0.0
    %2534 = vmatpush1.msra.mxu0 0.0
    %2535 = vmatprep.subr.mxu0 0.0
    %2536 = vmatpush1.msra.mxu0 0.0
    %2537 = vmatprep.subr.mxu0 0.0
    %2538 = vmatpush1.msra.mxu0 0.0
    %2539 = vmatprep.subr.mxu0 0.0
    %2540 = vmatpush1.msra.mxu0 0.0
    %2541 = vmatprep.subr.mxu0 0.0
    %2542 = vmatpush1.msra.mxu0 0.0
    %2543 = vmatprep.subr.mxu0 0.0
    %2544 = vmatpush1.msra.mxu0 0.0
    %2545 = vmatprep.subr.mxu0 0.0
    %2546 = vmatpush1.msra.mxu0 0.0
    %2547 = vmatprep.subr.mxu0 0.0
    %2548 = vmatpush1.msra.mxu0 0.0
    %2549 = vmatprep.subr.mxu0 0.0
    %2550 = vmatpush1.msra.mxu0 0.0
    %2551 = vmatprep.subr.mxu0 0.0
    %2552 = vmatpush1.msra.mxu0 0.0
    %2553 = vmatprep.subr.mxu0 0.0
    %2554 = vmatpush1.msra.mxu0 0.0
    %2555 = vmatprep.subr.mxu0 0.0
    %2556 = vmatpush1.msra.mxu0 0.0
    %2557 = vmatprep.subr.mxu0 0.0
    %2558 = vmatpush1.msra.mxu0 0.0
    %2559 = vmatprep.subr.mxu0 0.0
    %2560 = vmatpush1.msra.mxu0 %v2527
    %2561 = vmatprep.subr.mxu0 0.0
    %2562 = vmatpush2.msra.mxu0 0.0
    %2563 = vmatprep.subr.mxu0 0.0
    %2564 = vmatpush2.msra.mxu0 0.0
    %2565 = vmatprep.subr.mxu0 0.0
    %2566 = vmatpush2.msra.mxu0 0.0
    %2567 = vmatprep.subr.mxu0 0.0
    %2568 = vmatpush2.msra.mxu0 0.0
    %2569 = vmatprep.subr.mxu0 0.0
    %2570 = vmatpush2.msra.mxu0 0.0
    %2571 = vmatprep.subr.mxu0 0.0
    %2572 = vmatpush2.msra.mxu0 0.0
    %2573 = vmatprep.subr.mxu0 0.0
    %2574 = vmatpush2.msra.mxu0 0.0
    %2575 = vmatprep.subr.mxu0 0.0
    %2576 = vmatpush2.msra.mxu0 0.0
    %2577 = vmatprep.subr.mxu0 0.0
    %2578 = vmatpush2.msra.mxu0 0.0
    %2579 = vmatprep.subr.mxu0 0.0
    %2580 = vmatpush2.msra.mxu0 0.0
    %2581 = vmatprep.subr.mxu0 0.0
    %2582 = vmatpush2.msra.mxu0 0.0
    %2583 = vmatprep.subr.mxu0 0.0
    %2584 = vmatpush2.msra.mxu0 0.0
    %2585 = vmatprep.subr.mxu0 0.0
    %2586 = vmatpush2.msra.mxu0 0.0
    %2587 = vmatprep.subr.mxu0 0.0
    %2588 = vmatpush2.msra.mxu0 0.0
    %2589 = vmatprep.subr.mxu0 0.0
    %2590 = vmatpush2.msra.mxu0 0.0
    %2591 = vmatprep.subr.mxu0 0.0
    %2592 = vmatpush2.msra.mxu0 0.0
    %2593 = vmatprep.mubr.f32.mxu0 0.0
    %2594 = vmatmul.mubr.f32.gmra.mxu0 %v866
    %v2595 = vpop.f32.mrf.mxu0
    %v2596 = vadd.f32 0.0, %v2595
    %v2597 = vpop.f32.mrf.mxu0
    %2598 = vmatprep.mubr.f32.mxu0 0.0
    %2599 = vmatmul.mubr.f32.gmra.mxu0 %v869
    %v2600 = vpop.f32.mrf.mxu0
    %v2601 = vadd.f32 0.0, %v2600
    %v2602 = vpop.f32.mrf.mxu0
    %2603 = vmatprep.mubr.f32.mxu0 0.0
    %2604 = vmatmul.mubr.f32.gmra.mxu0 %v872
    %v2605 = vpop.f32.mrf.mxu0
    %v2606 = vadd.f32 0.0, %v2605
    %v2607 = vpop.f32.mrf.mxu0
    %2608 = vmatprep.mubr.f32.mxu0 0.0
    %2609 = vmatmul.mubr.f32.gmra.mxu0 %v875
    %v2610 = vpop.f32.mrf.mxu0
    %v2611 = vadd.f32 0.0, %v2610
    %v2612 = vpop.f32.mrf.mxu0
    %2613 = vmatprep.mubr.f32.mxu0 0.0
    %2614 = vmatmul.mubr.f32.gmra.mxu0 %v878
    %v2615 = vpop.f32.mrf.mxu0
    %v2616 = vadd.f32 0.0, %v2615
    %v2617 = vpop.f32.mrf.mxu0
    %2618 = vmatprep.mubr.f32.mxu0 0.0
    %2619 = vmatmul.mubr.f32.gmra.mxu0 %v881
    %v2620 = vpop.f32.mrf.mxu0
    %v2621 = vadd.f32 0.0, %v2620
    %v2622 = vpop.f32.mrf.mxu0
    %2623 = vmatprep.mubr.f32.mxu0 0.0
    %2624 = vmatmul.mubr.f32.gmra.mxu0 %v884
    %v2625 = vpop.f32.mrf.mxu0
    %v2626 = vadd.f32 0.0, %v2625
    %v2627 = vpop.f32.mrf.mxu0
    %2628 = vmatprep.mubr.f32.mxu0 0.0
    %2629 = vmatmul.mubr.f32.gmra.mxu0 %v887
    %v2630 = vpop.f32.mrf.mxu0
    %v2631 = vadd.f32 0.0, %v2630
    %v2632 = vpop.f32.mrf.mxu0
    %2633 = vdwg.mxu0
    %v2634 = vadd.f32 %v2486, %v2596
    %v2635 = vadd.f32 %v2491, %v2601
    %v2636 = vadd.f32 %v2496, %v2606
    %v2637 = vadd.f32 %v2501, %v2611
    %v2638 = vadd.f32 %v2506, %v2616
    %v2639 = vadd.f32 %v2511, %v2621
    %v2640 = vadd.f32 %v2516, %v2626
    %v2641 = vadd.f32 %v2521, %v2631
    %s2642 = scalar_lea.vmem %s14, 1
    %v2643 = vld [vmem:[%s2642] sm:$0x1]
    %v2645 = vlaneseq
    %v2646 = vshrl.u32 %v2645, 7
    %v2647 = vsub.s32 0, %v2646
    %v2648 = vrot.slane %v2643, %v2647
    %v2650 = vadd.f32 %v2634, %v2648
    %v2651 = vadd.f32 %v2635, %v2648
    %v2652 = vadd.f32 %v2636, %v2648
    %v2653 = vadd.f32 %v2637, %v2648
    %v2654 = vadd.f32 %v2638, %v2648
    %v2655 = vadd.f32 %v2639, %v2648
    %v2656 = vadd.f32 %v2640, %v2648
    %v2657 = vadd.f32 %v2641, %v2648
    %v2658 = vsub.f32 0.0, %v2302
    %v2659 = vsub.f32 0.0, %v2303
    %v2660 = vsub.f32 0.0, %v2304
    %v2661 = vsub.f32 0.0, %v2305
    %v2662 = vsub.f32 0.0, %v2306
    %v2663 = vsub.f32 0.0, %v2307
    %v2664 = vsub.f32 0.0, %v2308
    %v2665 = vsub.f32 0.0, %v2309
    %v2666 = vmul.f32 %v2658, 1.442695
    %v2667 = vpow.pop %v2666
    %v2668 = vmul.f32 %v2659, 1.442695
    %v2669 = vpow.pop %v2668
    %v2670 = vmul.f32 %v2660, 1.442695
    %v2671 = vpow.pop %v2670
    %v2672 = vmul.f32 %v2661, 1.442695
    %v2673 = vpow.pop %v2672
    %v2674 = vmul.f32 %v2662, 1.442695
    %v2675 = vpow.pop %v2674
    %v2676 = vmul.f32 %v2663, 1.442695
    %v2677 = vpow.pop %v2676
    %v2678 = vmul.f32 %v2664, 1.442695
    %v2679 = vpow.pop %v2678
    %v2680 = vmul.f32 %v2665, 1.442695
    %v2681 = vpow.pop %v2680
    %v2682 = vadd.f32 %v2667, 1.0
    %v2683 = vadd.f32 %v2669, 1.0
    %v2684 = vadd.f32 %v2671, 1.0
    %v2685 = vadd.f32 %v2673, 1.0
    %v2686 = vadd.f32 %v2675, 1.0
    %v2687 = vadd.f32 %v2677, 1.0
    %v2688 = vadd.f32 %v2679, 1.0
    %v2689 = vadd.f32 %v2681, 1.0
    %v2690 = vrcp.pop %v2682
    %v2691 = vmul.f32 1.0, %v2690
    %v2692 = vrcp.pop %v2683
    %v2693 = vmul.f32 1.0, %v2692
    %v2694 = vrcp.pop %v2684
    %v2695 = vmul.f32 1.0, %v2694
    %v2696 = vrcp.pop %v2685
    %v2697 = vmul.f32 1.0, %v2696
    %v2698 = vrcp.pop %v2686
    %v2699 = vmul.f32 1.0, %v2698
    %v2700 = vrcp.pop %v2687
    %v2701 = vmul.f32 1.0, %v2700
    %v2702 = vrcp.pop %v2688
    %v2703 = vmul.f32 1.0, %v2702
    %v2704 = vrcp.pop %v2689
    %v2705 = vmul.f32 1.0, %v2704
    %v2706 = vmax.f32 %v2650, 0.0
    %v2707 = vmax.f32 %v2651, 0.0
    %v2708 = vmax.f32 %v2652, 0.0
    %v2709 = vmax.f32 %v2653, 0.0
    %v2710 = vmax.f32 %v2654, 0.0
    %v2711 = vmax.f32 %v2655, 0.0
    %v2712 = vmax.f32 %v2656, 0.0
    %v2713 = vmax.f32 %v2657, 0.0
    %v2714 = vand.u32 2147483647, %v2650
    %v2715 = vand.u32 2147483647, %v2651
    %v2716 = vand.u32 2147483647, %v2652
    %v2717 = vand.u32 2147483647, %v2653
    %v2718 = vand.u32 2147483647, %v2654
    %v2719 = vand.u32 2147483647, %v2655
    %v2720 = vand.u32 2147483647, %v2656
    %v2721 = vand.u32 2147483647, %v2657
    %v2722 = vsub.f32 0.0, %v2714
    %v2723 = vsub.f32 0.0, %v2715
    %v2724 = vsub.f32 0.0, %v2716
    %v2725 = vsub.f32 0.0, %v2717
    %v2726 = vsub.f32 0.0, %v2718
    %v2727 = vsub.f32 0.0, %v2719
    %v2728 = vsub.f32 0.0, %v2720
    %v2729 = vsub.f32 0.0, %v2721
    %v2730 = vmul.f32 %v2722, 1.442695
    %v2731 = vpow.pop %v2730
    %v2732 = vmul.f32 %v2723, 1.442695
    %v2733 = vpow.pop %v2732
    %v2734 = vmul.f32 %v2724, 1.442695
    %v2735 = vpow.pop %v2734
    %v2736 = vmul.f32 %v2725, 1.442695
    %v2737 = vpow.pop %v2736
    %v2738 = vmul.f32 %v2726, 1.442695
    %v2739 = vpow.pop %v2738
    %v2740 = vmul.f32 %v2727, 1.442695
    %v2741 = vpow.pop %v2740
    %v2742 = vmul.f32 %v2728, 1.442695
    %v2743 = vpow.pop %v2742
    %v2744 = vmul.f32 %v2729, 1.442695
    %v2745 = vpow.pop %v2744
    %v2746 = vadd.f32 %v2731, 1.0
    %v2747 = vadd.f32 %v2733, 1.0
    %v2748 = vadd.f32 %v2735, 1.0
    %v2749 = vadd.f32 %v2737, 1.0
    %v2750 = vadd.f32 %v2739, 1.0
    %v2751 = vadd.f32 %v2741, 1.0
    %v2752 = vadd.f32 %v2743, 1.0
    %v2753 = vadd.f32 %v2745, 1.0
    %v2754 = vlog2.pop %v2746
    %v2755 = vmul.f32 %v2754, 0.6931472
    %v2756 = vlog2.pop %v2747
    %v2757 = vmul.f32 %v2756, 0.6931472
    %v2758 = vlog2.pop %v2748
    %v2759 = vmul.f32 %v2758, 0.6931472
    %v2760 = vlog2.pop %v2749
    %v2761 = vmul.f32 %v2760, 0.6931472
    %v2762 = vlog2.pop %v2750
    %v2763 = vmul.f32 %v2762, 0.6931472
    %v2764 = vlog2.pop %v2751
    %v2765 = vmul.f32 %v2764, 0.6931472
    %v2766 = vlog2.pop %v2752
    %v2767 = vmul.f32 %v2766, 0.6931472
    %v2768 = vlog2.pop %v2753
    %v2769 = vmul.f32 %v2768, 0.6931472
    %v2770 = vadd.f32 %v2706, %v2755
    %v2771 = vadd.f32 %v2707, %v2757
    %v2772 = vadd.f32 %v2708, %v2759
    %v2773 = vadd.f32 %v2709, %v2761
    %v2774 = vadd.f32 %v2710, %v2763
    %v2775 = vadd.f32 %v2711, %v2765
    %v2776 = vadd.f32 %v2712, %v2767
    %v2777 = vadd.f32 %v2713, %v2769
    %v2778 = vmul.f32 %v2691, %v2770
    %v2779 = vmul.f32 %v2693, %v2771
    %v2780 = vmul.f32 %v2695, %v2772
    %v2781 = vmul.f32 %v2697, %v2773
    %v2782 = vmul.f32 %v2699, %v2774
    %v2783 = vmul.f32 %v2701, %v2775
    %v2784 = vmul.f32 %v2703, %v2776
    %v2785 = vmul.f32 %v2705, %v2777
    %2786 = vmatprep.subr.mxu0 0.0
    %2787 = vmatpush1.msra.mxu0 0.0
    %2788 = vmatprep.subr.mxu0 0.0
    %2789 = vmatpush1.msra.mxu0 0.0
    %2790 = vmatprep.subr.mxu0 0.0
    %2791 = vmatpush1.msra.mxu0 0.0
    %2792 = vmatprep.subr.mxu0 0.0
    %2793 = vmatpush1.msra.mxu0 0.0
    %2794 = vmatprep.subr.mxu0 0.0
    %2795 = vmatpush1.msra.mxu0 0.0
    %2796 = vmatprep.subr.mxu0 0.0
    %2797 = vmatpush1.msra.mxu0 0.0
    %2798 = vmatprep.subr.mxu0 0.0
    %2799 = vmatpush1.msra.mxu0 0.0
    %2800 = vmatprep.subr.mxu0 0.0
    %2801 = vmatpush1.msra.mxu0 0.0
    %2802 = vmatprep.subr.mxu0 0.0
    %2803 = vmatpush1.msra.mxu0 %v2785
    %2804 = vmatprep.subr.mxu0 0.0
    %2805 = vmatpush1.msra.mxu0 %v2784
    %2806 = vmatprep.subr.mxu0 0.0
    %2807 = vmatpush1.msra.mxu0 %v2783
    %2808 = vmatprep.subr.mxu0 0.0
    %2809 = vmatpush1.msra.mxu0 %v2782
    %2810 = vmatprep.subr.mxu0 0.0
    %2811 = vmatpush1.msra.mxu0 %v2781
    %2812 = vmatprep.subr.mxu0 0.0
    %2813 = vmatpush1.msra.mxu0 %v2780
    %2814 = vmatprep.subr.mxu0 0.0
    %2815 = vmatpush1.msra.mxu0 %v2779
    %2816 = vmatprep.subr.mxu0 0.0
    %2817 = vmatpush1.msra.mxu0 %v2778
    %2818 = vmatprep.subr.mxu0 0.0
    %2819 = vmatpush2.msra.mxu0 0.0
    %2820 = vmatprep.subr.mxu0 0.0
    %2821 = vmatpush2.msra.mxu0 0.0
    %2822 = vmatprep.subr.mxu0 0.0
    %2823 = vmatpush2.msra.mxu0 0.0
    %2824 = vmatprep.subr.mxu0 0.0
    %2825 = vmatpush2.msra.mxu0 0.0
    %2826 = vmatprep.subr.mxu0 0.0
    %2827 = vmatpush2.msra.mxu0 0.0
    %2828 = vmatprep.subr.mxu0 0.0
    %2829 = vmatpush2.msra.mxu0 0.0
    %2830 = vmatprep.subr.mxu0 0.0
    %2831 = vmatpush2.msra.mxu0 0.0
    %2832 = vmatprep.subr.mxu0 0.0
    %2833 = vmatpush2.msra.mxu0 0.0
    %2834 = vmatprep.subr.mxu0 0.0
    %2835 = vmatpush2.msra.mxu0 0.0
    %2836 = vmatprep.subr.mxu0 0.0
    %2837 = vmatpush2.msra.mxu0 0.0
    %2838 = vmatprep.subr.mxu0 0.0
    %2839 = vmatpush2.msra.mxu0 0.0
    %2840 = vmatprep.subr.mxu0 0.0
    %2841 = vmatpush2.msra.mxu0 0.0
    %2842 = vmatprep.subr.mxu0 0.0
    %2843 = vmatpush2.msra.mxu0 0.0
    %2844 = vmatprep.subr.mxu0 0.0
    %2845 = vmatpush2.msra.mxu0 0.0
    %2846 = vmatprep.subr.mxu0 0.0
    %2847 = vmatpush2.msra.mxu0 0.0
    %2848 = vmatprep.subr.mxu0 0.0
    %2849 = vmatpush2.msra.mxu0 0.0
    %2850 = vmatprep.mubr.f32.mxu0 0.0
    %2851 = vmatmul.mubr.f32.gmra.mxu0 %v1495
    %v2852 = vpop.f32.mrf.mxu0
    %v2853 = vadd.f32 0.0, %v2852
    %v2854 = vpop.f32.mrf.mxu0
    %2855 = vmatprep.mubr.f32.mxu0 0.0
    %2856 = vmatmul.mubr.f32.gmra.mxu0 %v1498
    %v2857 = vpop.f32.mrf.mxu0
    %v2858 = vadd.f32 0.0, %v2857
    %v2859 = vpop.f32.mrf.mxu0
    %2860 = vmatprep.mubr.f32.mxu0 0.0
    %2861 = vmatmul.mubr.f32.gmra.mxu0 %v1501
    %v2862 = vpop.f32.mrf.mxu0
    %v2863 = vadd.f32 0.0, %v2862
    %v2864 = vpop.f32.mrf.mxu0
    %2865 = vmatprep.mubr.f32.mxu0 0.0
    %2866 = vmatmul.mubr.f32.gmra.mxu0 %v1504
    %v2867 = vpop.f32.mrf.mxu0
    %v2868 = vadd.f32 0.0, %v2867
    %v2869 = vpop.f32.mrf.mxu0
    %2870 = vdwg.mxu0
    %v2871 = vadd.f32 %v1700, %v2853
    %v2872 = vadd.f32 %v1701, %v2858
    %v2873 = vadd.f32 %v1702, %v2863
    %v2874 = vadd.f32 %v1703, %v2868
    %s2875 = scalar_lea.vmem %s15, 8
    %v2876 = vld [vmem:[%s2875] sm:$0xff]
    %s2877 = scalar_lea.vmem %s16, 1
    %v2878 = vld [vmem:[%s2877] sm:$0x1]
    %v2880 = vlaneseq
    %v2881 = vshrl.u32 %v2880, 7
    %v2882 = vsub.s32 0, %v2881
    %v2883 = vrot.slane %v2878, %v2882
    %v2886 = vsel %vm604, %v2871, 0
    %v2889 = vsel %vm604, %v2872, 0
    %v2892 = vsel %vm604, %v2873, 0
    %v2895 = vsel %vm604, %v2874, 0
    %2897 = vmatprep.subr.mxu0 0.0
    %2898 = vmatpush1.msra.mxu0 0.0
    %2899 = vmatprep.subr.mxu0 0.0
    %2900 = vmatpush1.msra.mxu0 0.0
    %2901 = vmatprep.subr.mxu0 0.0
    %2902 = vmatpush1.msra.mxu0 0.0
    %2903 = vmatprep.subr.mxu0 0.0
    %2904 = vmatpush1.msra.mxu0 0.0
    %2905 = vmatprep.subr.mxu0 0.0
    %2906 = vmatpush1.msra.mxu0 0.0
    %2907 = vmatprep.subr.mxu0 0.0
    %2908 = vmatpush1.msra.mxu0 0.0
    %2909 = vmatprep.subr.mxu0 0.0
    %2910 = vmatpush1.msra.mxu0 0.0
    %2911 = vmatprep.subr.mxu0 0.0
    %2912 = vmatpush1.msra.mxu0 0.0
    %2913 = vmatprep.subr.mxu0 0.0
    %2914 = vmatpush1.msra.mxu0 0.0
    %2915 = vmatprep.subr.mxu0 0.0
    %2916 = vmatpush1.msra.mxu0 0.0
    %2917 = vmatprep.subr.mxu0 0.0
    %2918 = vmatpush1.msra.mxu0 0.0
    %2919 = vmatprep.subr.mxu0 0.0
    %2920 = vmatpush1.msra.mxu0 0.0
    %2921 = vmatprep.subr.mxu0 0.0
    %2922 = vmatpush1.msra.mxu0 0.0
    %2923 = vmatprep.subr.mxu0 0.0
    %2924 = vmatpush1.msra.mxu0 0.0
    %2925 = vmatprep.subr.mxu0 0.0
    %2926 = vmatpush1.msra.mxu0 0.0
    %2927 = vmatprep.subr.mxu0 0.0
    %2928 = vmatpush1.msra.mxu0 %v2876
    %2929 = vmatprep.subr.mxu0 0.0
    %2930 = vmatpush2.msra.mxu0 0.0
    %2931 = vmatprep.subr.mxu0 0.0
    %2932 = vmatpush2.msra.mxu0 0.0
    %2933 = vmatprep.subr.mxu0 0.0
    %2934 = vmatpush2.msra.mxu0 0.0
    %2935 = vmatprep.subr.mxu0 0.0
    %2936 = vmatpush2.msra.mxu0 0.0
    %2937 = vmatprep.subr.mxu0 0.0
    %2938 = vmatpush2.msra.mxu0 0.0
    %2939 = vmatprep.subr.mxu0 0.0
    %2940 = vmatpush2.msra.mxu0 0.0
    %2941 = vmatprep.subr.mxu0 0.0
    %2942 = vmatpush2.msra.mxu0 0.0
    %2943 = vmatprep.subr.mxu0 0.0
    %2944 = vmatpush2.msra.mxu0 0.0
    %2945 = vmatprep.subr.mxu0 0.0
    %2946 = vmatpush2.msra.mxu0 0.0
    %2947 = vmatprep.subr.mxu0 0.0
    %2948 = vmatpush2.msra.mxu0 0.0
    %2949 = vmatprep.subr.mxu0 0.0
    %2950 = vmatpush2.msra.mxu0 0.0
    %2951 = vmatprep.subr.mxu0 0.0
    %2952 = vmatpush2.msra.mxu0 0.0
    %2953 = vmatprep.subr.mxu0 0.0
    %2954 = vmatpush2.msra.mxu0 0.0
    %2955 = vmatprep.subr.mxu0 0.0
    %2956 = vmatpush2.msra.mxu0 0.0
    %2957 = vmatprep.subr.mxu0 0.0
    %2958 = vmatpush2.msra.mxu0 0.0
    %2959 = vmatprep.subr.mxu0 0.0
    %2960 = vmatpush2.msra.mxu0 0.0
    %2961 = vmatprep.mubr.f32.mxu0 0.0
    %2962 = vmatmul.mubr.f32.gmra.mxu0 %v2886
    %v2963 = vpop.f32.mrf.mxu0
    %v2964 = vadd.f32 %v2883, %v2963
    %v2965 = vpop.f32.mrf.mxu0
    %2966 = vmatprep.mubr.f32.mxu0 0.0
    %2967 = vmatmul.mubr.f32.gmra.mxu0 %v2889
    %v2968 = vpop.f32.mrf.mxu0
    %v2969 = vadd.f32 %v2883, %v2968
    %v2970 = vpop.f32.mrf.mxu0
    %2971 = vmatprep.mubr.f32.mxu0 0.0
    %2972 = vmatmul.mubr.f32.gmra.mxu0 %v2892
    %v2973 = vpop.f32.mrf.mxu0
    %v2974 = vadd.f32 %v2883, %v2973
    %v2975 = vpop.f32.mrf.mxu0
    %2976 = vmatprep.mubr.f32.mxu0 0.0
    %2977 = vmatmul.mubr.f32.gmra.mxu0 %v2895
    %v2978 = vpop.f32.mrf.mxu0
    %v2979 = vadd.f32 %v2883, %v2978
    %v2980 = vpop.f32.mrf.mxu0
    %2981 = vdwg.mxu0
    %v2982 = vmax.f32 %v2964, 0.0
    %v2983 = vmax.f32 %v2969, 0.0
    %v2984 = vmax.f32 %v2974, 0.0
    %v2985 = vmax.f32 %v2979, 0.0
    %2986 = vmatprep.subr.mxu0 0.0
    %2987 = vmatpush1.msra.mxu0 0.0
    %2988 = vmatprep.subr.mxu0 0.0
    %2989 = vmatpush1.msra.mxu0 0.0
    %2990 = vmatprep.subr.mxu0 0.0
    %2991 = vmatpush1.msra.mxu0 0.0
    %2992 = vmatprep.subr.mxu0 0.0
    %2993 = vmatpush1.msra.mxu0 0.0
    %2994 = vmatprep.subr.mxu0 0.0
    %2995 = vmatpush1.msra.mxu0 0.0
    %2996 = vmatprep.subr.mxu0 0.0
    %2997 = vmatpush1.msra.mxu0 0.0
    %2998 = vmatprep.subr.mxu0 0.0
    %2999 = vmatpush1.msra.mxu0 0.0
    %3000 = vmatprep.subr.mxu0 0.0
    %3001 = vmatpush1.msra.mxu0 0.0
    %3002 = vmatprep.subr.mxu0 0.0
    %3003 = vmatpush1.msra.mxu0 0.0
    %3004 = vmatprep.subr.mxu0 0.0
    %3005 = vmatpush1.msra.mxu0 0.0
    %3006 = vmatprep.subr.mxu0 0.0
    %3007 = vmatpush1.msra.mxu0 0.0
    %3008 = vmatprep.subr.mxu0 0.0
    %3009 = vmatpush1.msra.mxu0 0.0
    %3010 = vmatprep.subr.mxu0 0.0
    %3011 = vmatpush1.msra.mxu0 %v2985
    %3012 = vmatprep.subr.mxu0 0.0
    %3013 = vmatpush1.msra.mxu0 %v2984
    %3014 = vmatprep.subr.mxu0 0.0
    %3015 = vmatpush1.msra.mxu0 %v2983
    %3016 = vmatprep.subr.mxu0 0.0
    %3017 = vmatpush1.msra.mxu0 %v2982
    %3018 = vmatprep.subr.mxu0 0.0
    %3019 = vmatpush2.msra.mxu0 0.0
    %3020 = vmatprep.subr.mxu0 0.0
    %3021 = vmatpush2.msra.mxu0 0.0
    %3022 = vmatprep.subr.mxu0 0.0
    %3023 = vmatpush2.msra.mxu0 0.0
    %3024 = vmatprep.subr.mxu0 0.0
    %3025 = vmatpush2.msra.mxu0 0.0
    %3026 = vmatprep.subr.mxu0 0.0
    %3027 = vmatpush2.msra.mxu0 0.0
    %3028 = vmatprep.subr.mxu0 0.0
    %3029 = vmatpush2.msra.mxu0 0.0
    %3030 = vmatprep.subr.mxu0 0.0
    %3031 = vmatpush2.msra.mxu0 0.0
    %3032 = vmatprep.subr.mxu0 0.0
    %3033 = vmatpush2.msra.mxu0 0.0
    %3034 = vmatprep.subr.mxu0 0.0
    %3035 = vmatpush2.msra.mxu0 0.0
    %3036 = vmatprep.subr.mxu0 0.0
    %3037 = vmatpush2.msra.mxu0 0.0
    %3038 = vmatprep.subr.mxu0 0.0
    %3039 = vmatpush2.msra.mxu0 0.0
    %3040 = vmatprep.subr.mxu0 0.0
    %3041 = vmatpush2.msra.mxu0 0.0
    %3042 = vmatprep.subr.mxu0 0.0
    %3043 = vmatpush2.msra.mxu0 0.0
    %3044 = vmatprep.subr.mxu0 0.0
    %3045 = vmatpush2.msra.mxu0 0.0
    %3046 = vmatprep.subr.mxu0 0.0
    %3047 = vmatpush2.msra.mxu0 0.0
    %3048 = vmatprep.subr.mxu0 0.0
    %3049 = vmatpush2.msra.mxu0 0.0
    %3050 = vmatprep.mubr.f32.mxu0 0.0
    %3051 = vmatmul.mubr.f32.gmra.mxu0 %v345
    %v3052 = vpop.f32.mrf.mxu0
    %v3053 = vadd.f32 0.0, %v3052
    %v3054 = vpop.f32.mrf.mxu0
    %3055 = vmatprep.mubr.f32.mxu0 0.0
    %3056 = vmatmul.mubr.f32.gmra.mxu0 %v348
    %v3057 = vpop.f32.mrf.mxu0
    %v3058 = vadd.f32 0.0, %v3057
    %v3059 = vpop.f32.mrf.mxu0
    %3060 = vmatprep.mubr.f32.mxu0 0.0
    %3061 = vmatmul.mubr.f32.gmra.mxu0 %v351
    %v3062 = vpop.f32.mrf.mxu0
    %v3063 = vadd.f32 0.0, %v3062
    %v3064 = vpop.f32.mrf.mxu0
    %3065 = vmatprep.mubr.f32.mxu0 0.0
    %3066 = vmatmul.mubr.f32.gmra.mxu0 %v354
    %v3067 = vpop.f32.mrf.mxu0
    %v3068 = vadd.f32 0.0, %v3067
    %v3069 = vpop.f32.mrf.mxu0
    %3070 = vmatprep.mubr.f32.mxu0 0.0
    %3071 = vmatmul.mubr.f32.gmra.mxu0 %v357
    %v3072 = vpop.f32.mrf.mxu0
    %v3073 = vadd.f32 0.0, %v3072
    %v3074 = vpop.f32.mrf.mxu0
    %3075 = vmatprep.mubr.f32.mxu0 0.0
    %3076 = vmatmul.mubr.f32.gmra.mxu0 %v360
    %v3077 = vpop.f32.mrf.mxu0
    %v3078 = vadd.f32 0.0, %v3077
    %v3079 = vpop.f32.mrf.mxu0
    %3080 = vmatprep.mubr.f32.mxu0 0.0
    %3081 = vmatmul.mubr.f32.gmra.mxu0 %v363
    %v3082 = vpop.f32.mrf.mxu0
    %v3083 = vadd.f32 0.0, %v3082
    %v3084 = vpop.f32.mrf.mxu0
    %3085 = vmatprep.mubr.f32.mxu0 0.0
    %3086 = vmatmul.mubr.f32.gmra.mxu0 %v366
    %v3087 = vpop.f32.mrf.mxu0
    %v3088 = vadd.f32 0.0, %v3087
    %v3089 = vpop.f32.mrf.mxu0
    %3090 = vdwg.mxu0
    %3091 = vmatprep.subr.mxu0 0.0
    %3092 = vmatpush1.msra.mxu0 0.0
    %3093 = vmatprep.subr.mxu0 0.0
    %3094 = vmatpush1.msra.mxu0 0.0
    %3095 = vmatprep.subr.mxu0 0.0
    %3096 = vmatpush1.msra.mxu0 0.0
    %3097 = vmatprep.subr.mxu0 0.0
    %3098 = vmatpush1.msra.mxu0 0.0
    %3099 = vmatprep.subr.mxu0 0.0
    %3100 = vmatpush1.msra.mxu0 0.0
    %3101 = vmatprep.subr.mxu0 0.0
    %3102 = vmatpush1.msra.mxu0 0.0
    %3103 = vmatprep.subr.mxu0 0.0
    %3104 = vmatpush1.msra.mxu0 0.0
    %3105 = vmatprep.subr.mxu0 0.0
    %3106 = vmatpush1.msra.mxu0 0.0
    %3107 = vmatprep.subr.mxu0 0.0
    %3108 = vmatpush1.msra.mxu0 0.0
    %3109 = vmatprep.subr.mxu0 0.0
    %3110 = vmatpush1.msra.mxu0 0.0
    %3111 = vmatprep.subr.mxu0 0.0
    %3112 = vmatpush1.msra.mxu0 0.0
    %3113 = vmatprep.subr.mxu0 0.0
    %3114 = vmatpush1.msra.mxu0 0.0
    %3115 = vmatprep.subr.mxu0 0.0
    %3116 = vmatpush1.msra.mxu0 %v2985
    %3117 = vmatprep.subr.mxu0 0.0
    %3118 = vmatpush1.msra.mxu0 %v2984
    %3119 = vmatprep.subr.mxu0 0.0
    %3120 = vmatpush1.msra.mxu0 %v2983
    %3121 = vmatprep.subr.mxu0 0.0
    %3122 = vmatpush1.msra.mxu0 %v2982
    %3123 = vmatprep.subr.mxu0 0.0
    %3124 = vmatpush2.msra.mxu0 0.0
    %3125 = vmatprep.subr.mxu0 0.0
    %3126 = vmatpush2.msra.mxu0 0.0
    %3127 = vmatprep.subr.mxu0 0.0
    %3128 = vmatpush2.msra.mxu0 0.0
    %3129 = vmatprep.subr.mxu0 0.0
    %3130 = vmatpush2.msra.mxu0 0.0
    %3131 = vmatprep.subr.mxu0 0.0
    %3132 = vmatpush2.msra.mxu0 0.0
    %3133 = vmatprep.subr.mxu0 0.0
    %3134 = vmatpush2.msra.mxu0 0.0
    %3135 = vmatprep.subr.mxu0 0.0
    %3136 = vmatpush2.msra.mxu0 0.0
    %3137 = vmatprep.subr.mxu0 0.0
    %3138 = vmatpush2.msra.mxu0 0.0
    %3139 = vmatprep.subr.mxu0 0.0
    %3140 = vmatpush2.msra.mxu0 0.0
    %3141 = vmatprep.subr.mxu0 0.0
    %3142 = vmatpush2.msra.mxu0 0.0
    %3143 = vmatprep.subr.mxu0 0.0
    %3144 = vmatpush2.msra.mxu0 0.0
    %3145 = vmatprep.subr.mxu0 0.0
    %3146 = vmatpush2.msra.mxu0 0.0
    %3147 = vmatprep.subr.mxu0 0.0
    %3148 = vmatpush2.msra.mxu0 0.0
    %3149 = vmatprep.subr.mxu0 0.0
    %3150 = vmatpush2.msra.mxu0 0.0
    %3151 = vmatprep.subr.mxu0 0.0
    %3152 = vmatpush2.msra.mxu0 0.0
    %3153 = vmatprep.subr.mxu0 0.0
    %3154 = vmatpush2.msra.mxu0 0.0
    %3155 = vmatprep.mubr.f32.mxu0 0.0
    %3156 = vmatmul.mubr.f32.gmra.mxu0 %v474
    %v3157 = vpop.f32.mrf.mxu0
    %v3158 = vadd.f32 0.0, %v3157
    %v3159 = vpop.f32.mrf.mxu0
    %3160 = vmatprep.mubr.f32.mxu0 0.0
    %3161 = vmatmul.mubr.f32.gmra.mxu0 %v477
    %v3162 = vpop.f32.mrf.mxu0
    %v3163 = vadd.f32 0.0, %v3162
    %v3164 = vpop.f32.mrf.mxu0
    %3165 = vmatprep.mubr.f32.mxu0 0.0
    %3166 = vmatmul.mubr.f32.gmra.mxu0 %v480
    %v3167 = vpop.f32.mrf.mxu0
    %v3168 = vadd.f32 0.0, %v3167
    %v3169 = vpop.f32.mrf.mxu0
    %3170 = vmatprep.mubr.f32.mxu0 0.0
    %3171 = vmatmul.mubr.f32.gmra.mxu0 %v483
    %v3172 = vpop.f32.mrf.mxu0
    %v3173 = vadd.f32 0.0, %v3172
    %v3174 = vpop.f32.mrf.mxu0
    %3175 = vmatprep.mubr.f32.mxu0 0.0
    %3176 = vmatmul.mubr.f32.gmra.mxu0 %v486
    %v3177 = vpop.f32.mrf.mxu0
    %v3178 = vadd.f32 0.0, %v3177
    %v3179 = vpop.f32.mrf.mxu0
    %3180 = vmatprep.mubr.f32.mxu0 0.0
    %3181 = vmatmul.mubr.f32.gmra.mxu0 %v489
    %v3182 = vpop.f32.mrf.mxu0
    %v3183 = vadd.f32 0.0, %v3182
    %v3184 = vpop.f32.mrf.mxu0
    %3185 = vmatprep.mubr.f32.mxu0 0.0
    %3186 = vmatmul.mubr.f32.gmra.mxu0 %v492
    %v3187 = vpop.f32.mrf.mxu0
    %v3188 = vadd.f32 0.0, %v3187
    %v3189 = vpop.f32.mrf.mxu0
    %3190 = vmatprep.mubr.f32.mxu0 0.0
    %3191 = vmatmul.mubr.f32.gmra.mxu0 %v495
    %v3192 = vpop.f32.mrf.mxu0
    %v3193 = vadd.f32 0.0, %v3192
    %v3194 = vpop.f32.mrf.mxu0
    %3195 = vdwg.mxu0
    %v3196 = vld [vmem:[%s17] sm:$0xff]
    %v3197 = vld [vmem:[%s18] sm:$0xff]
    %v3199 = vsel %vm604, %v3158, 0
    %v3202 = vsel %vm604, %v3163, 0
    %v3205 = vsel %vm604, %v3168, 0
    %v3208 = vsel %vm604, %v3173, 0
    %v3211 = vsel %vm604, %v3178, 0
    %v3214 = vsel %vm604, %v3183, 0
    %v3217 = vsel %vm604, %v3188, 0
    %v3220 = vsel %vm604, %v3193, 0
    %3222 = vmatprep.subr.mxu0 0.0
    %3223 = vmatpush1.msra.mxu0 0.0
    %3224 = vmatprep.subr.mxu0 0.0
    %3225 = vmatpush1.msra.mxu0 0.0
    %3226 = vmatprep.subr.mxu0 0.0
    %3227 = vmatpush1.msra.mxu0 0.0
    %3228 = vmatprep.subr.mxu0 0.0
    %3229 = vmatpush1.msra.mxu0 0.0
    %3230 = vmatprep.subr.mxu0 0.0
    %3231 = vmatpush1.msra.mxu0 0.0
    %3232 = vmatprep.subr.mxu0 0.0
    %3233 = vmatpush1.msra.mxu0 0.0
    %3234 = vmatprep.subr.mxu0 0.0
    %3235 = vmatpush1.msra.mxu0 0.0
    %3236 = vmatprep.subr.mxu0 0.0
    %3237 = vmatpush1.msra.mxu0 0.0
    %3238 = vmatprep.subr.mxu0 0.0
    %3239 = vmatpush1.msra.mxu0 0.0
    %3240 = vmatprep.subr.mxu0 0.0
    %3241 = vmatpush1.msra.mxu0 0.0
    %3242 = vmatprep.subr.mxu0 0.0
    %3243 = vmatpush1.msra.mxu0 0.0
    %3244 = vmatprep.subr.mxu0 0.0
    %3245 = vmatpush1.msra.mxu0 0.0
    %3246 = vmatprep.subr.mxu0 0.0
    %3247 = vmatpush1.msra.mxu0 0.0
    %3248 = vmatprep.subr.mxu0 0.0
    %3249 = vmatpush1.msra.mxu0 0.0
    %3250 = vmatprep.subr.mxu0 0.0
    %3251 = vmatpush1.msra.mxu0 0.0
    %3252 = vmatprep.subr.mxu0 0.0
    %3253 = vmatpush1.msra.mxu0 %v3197
    %3254 = vmatprep.subr.mxu0 0.0
    %3255 = vmatpush2.msra.mxu0 0.0
    %3256 = vmatprep.subr.mxu0 0.0
    %3257 = vmatpush2.msra.mxu0 0.0
    %3258 = vmatprep.subr.mxu0 0.0
    %3259 = vmatpush2.msra.mxu0 0.0
    %3260 = vmatprep.subr.mxu0 0.0
    %3261 = vmatpush2.msra.mxu0 0.0
    %3262 = vmatprep.subr.mxu0 0.0
    %3263 = vmatpush2.msra.mxu0 0.0
    %3264 = vmatprep.subr.mxu0 0.0
    %3265 = vmatpush2.msra.mxu0 0.0
    %3266 = vmatprep.subr.mxu0 0.0
    %3267 = vmatpush2.msra.mxu0 0.0
    %3268 = vmatprep.subr.mxu0 0.0
    %3269 = vmatpush2.msra.mxu0 0.0
    %3270 = vmatprep.subr.mxu0 0.0
    %3271 = vmatpush2.msra.mxu0 0.0
    %3272 = vmatprep.subr.mxu0 0.0
    %3273 = vmatpush2.msra.mxu0 0.0
    %3274 = vmatprep.subr.mxu0 0.0
    %3275 = vmatpush2.msra.mxu0 0.0
    %3276 = vmatprep.subr.mxu0 0.0
    %3277 = vmatpush2.msra.mxu0 0.0
    %3278 = vmatprep.subr.mxu0 0.0
    %3279 = vmatpush2.msra.mxu0 0.0
    %3280 = vmatprep.subr.mxu0 0.0
    %3281 = vmatpush2.msra.mxu0 0.0
    %3282 = vmatprep.subr.mxu0 0.0
    %3283 = vmatpush2.msra.mxu0 0.0
    %3284 = vmatprep.subr.mxu0 0.0
    %3285 = vmatpush2.msra.mxu0 0.0
    %3286 = vmatprep.mubr.f32.mxu0 0.0
    %3287 = vmatmul.mubr.f32.gmra.mxu0 %v3199
    %v3288 = vpop.f32.mrf.mxu0
    %v3289 = vadd.f32 0.0, %v3288
    %v3290 = vpop.f32.mrf.mxu0
    %3291 = vmatprep.mubr.f32.mxu0 0.0
    %3292 = vmatmul.mubr.f32.gmra.mxu0 %v3202
    %v3293 = vpop.f32.mrf.mxu0
    %v3294 = vadd.f32 0.0, %v3293
    %v3295 = vpop.f32.mrf.mxu0
    %3296 = vmatprep.mubr.f32.mxu0 0.0
    %3297 = vmatmul.mubr.f32.gmra.mxu0 %v3205
    %v3298 = vpop.f32.mrf.mxu0
    %v3299 = vadd.f32 0.0, %v3298
    %v3300 = vpop.f32.mrf.mxu0
    %3301 = vmatprep.mubr.f32.mxu0 0.0
    %3302 = vmatmul.mubr.f32.gmra.mxu0 %v3208
    %v3303 = vpop.f32.mrf.mxu0
    %v3304 = vadd.f32 0.0, %v3303
    %v3305 = vpop.f32.mrf.mxu0
    %3306 = vmatprep.mubr.f32.mxu0 0.0
    %3307 = vmatmul.mubr.f32.gmra.mxu0 %v3211
    %v3308 = vpop.f32.mrf.mxu0
    %v3309 = vadd.f32 0.0, %v3308
    %v3310 = vpop.f32.mrf.mxu0
    %3311 = vmatprep.mubr.f32.mxu0 0.0
    %3312 = vmatmul.mubr.f32.gmra.mxu0 %v3214
    %v3313 = vpop.f32.mrf.mxu0
    %v3314 = vadd.f32 0.0, %v3313
    %v3315 = vpop.f32.mrf.mxu0
    %3316 = vmatprep.mubr.f32.mxu0 0.0
    %3317 = vmatmul.mubr.f32.gmra.mxu0 %v3217
    %v3318 = vpop.f32.mrf.mxu0
    %v3319 = vadd.f32 0.0, %v3318
    %v3320 = vpop.f32.mrf.mxu0
    %3321 = vmatprep.mubr.f32.mxu0 0.0
    %3322 = vmatmul.mubr.f32.gmra.mxu0 %v3220
    %v3323 = vpop.f32.mrf.mxu0
    %v3324 = vadd.f32 0.0, %v3323
    %v3325 = vpop.f32.mrf.mxu0
    %3326 = vdwg.mxu0
    %v3328 = vsel %vm604, %v3053, 0
    %v3331 = vsel %vm604, %v3058, 0
    %v3334 = vsel %vm604, %v3063, 0
    %v3337 = vsel %vm604, %v3068, 0
    %v3340 = vsel %vm604, %v3073, 0
    %v3343 = vsel %vm604, %v3078, 0
    %v3346 = vsel %vm604, %v3083, 0
    %v3349 = vsel %vm604, %v3088, 0
    %3351 = vmatprep.subr.mxu0 0.0
    %3352 = vmatpush1.msra.mxu0 0.0
    %3353 = vmatprep.subr.mxu0 0.0
    %3354 = vmatpush1.msra.mxu0 0.0
    %3355 = vmatprep.subr.mxu0 0.0
    %3356 = vmatpush1.msra.mxu0 0.0
    %3357 = vmatprep.subr.mxu0 0.0
    %3358 = vmatpush1.msra.mxu0 0.0
    %3359 = vmatprep.subr.mxu0 0.0
    %3360 = vmatpush1.msra.mxu0 0.0
    %3361 = vmatprep.subr.mxu0 0.0
    %3362 = vmatpush1.msra.mxu0 0.0
    %3363 = vmatprep.subr.mxu0 0.0
    %3364 = vmatpush1.msra.mxu0 0.0
    %3365 = vmatprep.subr.mxu0 0.0
    %3366 = vmatpush1.msra.mxu0 0.0
    %3367 = vmatprep.subr.mxu0 0.0
    %3368 = vmatpush1.msra.mxu0 0.0
    %3369 = vmatprep.subr.mxu0 0.0
    %3370 = vmatpush1.msra.mxu0 0.0
    %3371 = vmatprep.subr.mxu0 0.0
    %3372 = vmatpush1.msra.mxu0 0.0
    %3373 = vmatprep.subr.mxu0 0.0
    %3374 = vmatpush1.msra.mxu0 0.0
    %3375 = vmatprep.subr.mxu0 0.0
    %3376 = vmatpush1.msra.mxu0 0.0
    %3377 = vmatprep.subr.mxu0 0.0
    %3378 = vmatpush1.msra.mxu0 0.0
    %3379 = vmatprep.subr.mxu0 0.0
    %3380 = vmatpush1.msra.mxu0 0.0
    %3381 = vmatprep.subr.mxu0 0.0
    %3382 = vmatpush1.msra.mxu0 %v3196
    %3383 = vmatprep.subr.mxu0 0.0
    %3384 = vmatpush2.msra.mxu0 0.0
    %3385 = vmatprep.subr.mxu0 0.0
    %3386 = vmatpush2.msra.mxu0 0.0
    %3387 = vmatprep.subr.mxu0 0.0
    %3388 = vmatpush2.msra.mxu0 0.0
    %3389 = vmatprep.subr.mxu0 0.0
    %3390 = vmatpush2.msra.mxu0 0.0
    %3391 = vmatprep.subr.mxu0 0.0
    %3392 = vmatpush2.msra.mxu0 0.0
    %3393 = vmatprep.subr.mxu0 0.0
    %3394 = vmatpush2.msra.mxu0 0.0
    %3395 = vmatprep.subr.mxu0 0.0
    %3396 = vmatpush2.msra.mxu0 0.0
    %3397 = vmatprep.subr.mxu0 0.0
    %3398 = vmatpush2.msra.mxu0 0.0
    %3399 = vmatprep.subr.mxu0 0.0
    %3400 = vmatpush2.msra.mxu0 0.0
    %3401 = vmatprep.subr.mxu0 0.0
    %3402 = vmatpush2.msra.mxu0 0.0
    %3403 = vmatprep.subr.mxu0 0.0
    %3404 = vmatpush2.msra.mxu0 0.0
    %3405 = vmatprep.subr.mxu0 0.0
    %3406 = vmatpush2.msra.mxu0 0.0
    %3407 = vmatprep.subr.mxu0 0.0
    %3408 = vmatpush2.msra.mxu0 0.0
    %3409 = vmatprep.subr.mxu0 0.0
    %3410 = vmatpush2.msra.mxu0 0.0
    %3411 = vmatprep.subr.mxu0 0.0
    %3412 = vmatpush2.msra.mxu0 0.0
    %3413 = vmatprep.subr.mxu0 0.0
    %3414 = vmatpush2.msra.mxu0 0.0
    %3415 = vmatprep.mubr.f32.mxu0 0.0
    %3416 = vmatmul.mubr.f32.gmra.mxu0 %v3328
    %v3417 = vpop.f32.mrf.mxu0
    %v3418 = vadd.f32 %v3289, %v3417
    %v3419 = vpop.f32.mrf.mxu0
    %3420 = vmatprep.mubr.f32.mxu0 0.0
    %3421 = vmatmul.mubr.f32.gmra.mxu0 %v3331
    %v3422 = vpop.f32.mrf.mxu0
    %v3423 = vadd.f32 %v3294, %v3422
    %v3424 = vpop.f32.mrf.mxu0
    %3425 = vmatprep.mubr.f32.mxu0 0.0
    %3426 = vmatmul.mubr.f32.gmra.mxu0 %v3334
    %v3427 = vpop.f32.mrf.mxu0
    %v3428 = vadd.f32 %v3299, %v3427
    %v3429 = vpop.f32.mrf.mxu0
    %3430 = vmatprep.mubr.f32.mxu0 0.0
    %3431 = vmatmul.mubr.f32.gmra.mxu0 %v3337
    %v3432 = vpop.f32.mrf.mxu0
    %v3433 = vadd.f32 %v3304, %v3432
    %v3434 = vpop.f32.mrf.mxu0
    %3435 = vmatprep.mubr.f32.mxu0 0.0
    %3436 = vmatmul.mubr.f32.gmra.mxu0 %v3340
    %v3437 = vpop.f32.mrf.mxu0
    %v3438 = vadd.f32 %v3309, %v3437
    %v3439 = vpop.f32.mrf.mxu0
    %3440 = vmatprep.mubr.f32.mxu0 0.0
    %3441 = vmatmul.mubr.f32.gmra.mxu0 %v3343
    %v3442 = vpop.f32.mrf.mxu0
    %v3443 = vadd.f32 %v3314, %v3442
    %v3444 = vpop.f32.mrf.mxu0
    %3445 = vmatprep.mubr.f32.mxu0 0.0
    %3446 = vmatmul.mubr.f32.gmra.mxu0 %v3346
    %v3447 = vpop.f32.mrf.mxu0
    %v3448 = vadd.f32 %v3319, %v3447
    %v3449 = vpop.f32.mrf.mxu0
    %3450 = vmatprep.mubr.f32.mxu0 0.0
    %3451 = vmatmul.mubr.f32.gmra.mxu0 %v3349
    %v3452 = vpop.f32.mrf.mxu0
    %v3453 = vadd.f32 %v3324, %v3452
    %v3454 = vpop.f32.mrf.mxu0
    %3455 = vdwg.mxu0
    %v3456 = vld [vmem:[%s19] sm:$0xf]
    %v3458 = vsel %vm889, %v3456, 0
    %3460 = vmatprep.subr.mxu0 0.0
    %3461 = vmatpush1.msra.mxu0 0.0
    %3462 = vmatprep.subr.mxu0 0.0
    %3463 = vmatpush1.msra.mxu0 0.0
    %3464 = vmatprep.subr.mxu0 0.0
    %3465 = vmatpush1.msra.mxu0 0.0
    %3466 = vmatprep.subr.mxu0 0.0
    %3467 = vmatpush1.msra.mxu0 0.0
    %3468 = vmatprep.subr.mxu0 0.0
    %3469 = vmatpush1.msra.mxu0 0.0
    %3470 = vmatprep.subr.mxu0 0.0
    %3471 = vmatpush1.msra.mxu0 0.0
    %3472 = vmatprep.subr.mxu0 0.0
    %3473 = vmatpush1.msra.mxu0 0.0
    %3474 = vmatprep.subr.mxu0 0.0
    %3475 = vmatpush1.msra.mxu0 0.0
    %3476 = vmatprep.subr.mxu0 0.0
    %3477 = vmatpush1.msra.mxu0 0.0
    %3478 = vmatprep.subr.mxu0 0.0
    %3479 = vmatpush1.msra.mxu0 0.0
    %3480 = vmatprep.subr.mxu0 0.0
    %3481 = vmatpush1.msra.mxu0 0.0
    %3482 = vmatprep.subr.mxu0 0.0
    %3483 = vmatpush1.msra.mxu0 0.0
    %3484 = vmatprep.subr.mxu0 0.0
    %3485 = vmatpush1.msra.mxu0 0.0
    %3486 = vmatprep.subr.mxu0 0.0
    %3487 = vmatpush1.msra.mxu0 0.0
    %3488 = vmatprep.subr.mxu0 0.0
    %3489 = vmatpush1.msra.mxu0 0.0
    %3490 = vmatprep.subr.mxu0 0.0
    %3491 = vmatpush1.msra.mxu0 %v3458
    %3492 = vmatprep.subr.mxu0 0.0
    %3493 = vmatpush2.msra.mxu0 0.0
    %3494 = vmatprep.subr.mxu0 0.0
    %3495 = vmatpush2.msra.mxu0 0.0
    %3496 = vmatprep.subr.mxu0 0.0
    %3497 = vmatpush2.msra.mxu0 0.0
    %3498 = vmatprep.subr.mxu0 0.0
    %3499 = vmatpush2.msra.mxu0 0.0
    %3500 = vmatprep.subr.mxu0 0.0
    %3501 = vmatpush2.msra.mxu0 0.0
    %3502 = vmatprep.subr.mxu0 0.0
    %3503 = vmatpush2.msra.mxu0 0.0
    %3504 = vmatprep.subr.mxu0 0.0
    %3505 = vmatpush2.msra.mxu0 0.0
    %3506 = vmatprep.subr.mxu0 0.0
    %3507 = vmatpush2.msra.mxu0 0.0
    %3508 = vmatprep.subr.mxu0 0.0
    %3509 = vmatpush2.msra.mxu0 0.0
    %3510 = vmatprep.subr.mxu0 0.0
    %3511 = vmatpush2.msra.mxu0 0.0
    %3512 = vmatprep.subr.mxu0 0.0
    %3513 = vmatpush2.msra.mxu0 0.0
    %3514 = vmatprep.subr.mxu0 0.0
    %3515 = vmatpush2.msra.mxu0 0.0
    %3516 = vmatprep.subr.mxu0 0.0
    %3517 = vmatpush2.msra.mxu0 0.0
    %3518 = vmatprep.subr.mxu0 0.0
    %3519 = vmatpush2.msra.mxu0 0.0
    %3520 = vmatprep.subr.mxu0 0.0
    %3521 = vmatpush2.msra.mxu0 0.0
    %3522 = vmatprep.subr.mxu0 0.0
    %3523 = vmatpush2.msra.mxu0 0.0
    %3524 = vmatprep.mubr.f32.mxu0 0.0
    %3525 = vmatmul.mubr.f32.gmra.mxu0 %v866
    %v3526 = vpop.f32.mrf.mxu0
    %v3527 = vadd.f32 0.0, %v3526
    %v3528 = vpop.f32.mrf.mxu0
    %3529 = vmatprep.mubr.f32.mxu0 0.0
    %3530 = vmatmul.mubr.f32.gmra.mxu0 %v869
    %v3531 = vpop.f32.mrf.mxu0
    %v3532 = vadd.f32 0.0, %v3531
    %v3533 = vpop.f32.mrf.mxu0
    %3534 = vmatprep.mubr.f32.mxu0 0.0
    %3535 = vmatmul.mubr.f32.gmra.mxu0 %v872
    %v3536 = vpop.f32.mrf.mxu0
    %v3537 = vadd.f32 0.0, %v3536
    %v3538 = vpop.f32.mrf.mxu0
    %3539 = vmatprep.mubr.f32.mxu0 0.0
    %3540 = vmatmul.mubr.f32.gmra.mxu0 %v875
    %v3541 = vpop.f32.mrf.mxu0
    %v3542 = vadd.f32 0.0, %v3541
    %v3543 = vpop.f32.mrf.mxu0
    %3544 = vmatprep.mubr.f32.mxu0 0.0
    %3545 = vmatmul.mubr.f32.gmra.mxu0 %v878
    %v3546 = vpop.f32.mrf.mxu0
    %v3547 = vadd.f32 0.0, %v3546
    %v3548 = vpop.f32.mrf.mxu0
    %3549 = vmatprep.mubr.f32.mxu0 0.0
    %3550 = vmatmul.mubr.f32.gmra.mxu0 %v881
    %v3551 = vpop.f32.mrf.mxu0
    %v3552 = vadd.f32 0.0, %v3551
    %v3553 = vpop.f32.mrf.mxu0
    %3554 = vmatprep.mubr.f32.mxu0 0.0
    %3555 = vmatmul.mubr.f32.gmra.mxu0 %v884
    %v3556 = vpop.f32.mrf.mxu0
    %v3557 = vadd.f32 0.0, %v3556
    %v3558 = vpop.f32.mrf.mxu0
    %3559 = vmatprep.mubr.f32.mxu0 0.0
    %3560 = vmatmul.mubr.f32.gmra.mxu0 %v887
    %v3561 = vpop.f32.mrf.mxu0
    %v3562 = vadd.f32 0.0, %v3561
    %v3563 = vpop.f32.mrf.mxu0
    %3564 = vdwg.mxu0
    %v3565 = vadd.f32 %v3418, %v3527
    %v3566 = vadd.f32 %v3423, %v3532
    %v3567 = vadd.f32 %v3428, %v3537
    %v3568 = vadd.f32 %v3433, %v3542
    %v3569 = vadd.f32 %v3438, %v3547
    %v3570 = vadd.f32 %v3443, %v3552
    %v3571 = vadd.f32 %v3448, %v3557
    %v3572 = vadd.f32 %v3453, %v3562
    %v3573 = vld [vmem:[%s21] sm:$0x1]
    %v3575 = vlaneseq
    %v3576 = vshrl.u32 %v3575, 7
    %v3577 = vsub.s32 0, %v3576
    %v3578 = vrot.slane %v3573, %v3577
    %v3580 = vadd.f32 %v3565, %v3578
    %v3581 = vadd.f32 %v3566, %v3578
    %v3582 = vadd.f32 %v3567, %v3578
    %v3583 = vadd.f32 %v3568, %v3578
    %v3584 = vadd.f32 %v3569, %v3578
    %v3585 = vadd.f32 %v3570, %v3578
    %v3586 = vadd.f32 %v3571, %v3578
    %v3587 = vadd.f32 %v3572, %v3578
    %v3588 = vmax.f32 %v3580, 0.0
    %v3589 = vmax.f32 %v3581, 0.0
    %v3590 = vmax.f32 %v3582, 0.0
    %v3591 = vmax.f32 %v3583, 0.0
    %v3592 = vmax.f32 %v3584, 0.0
    %v3593 = vmax.f32 %v3585, 0.0
    %v3594 = vmax.f32 %v3586, 0.0
    %v3595 = vmax.f32 %v3587, 0.0
    %s3596 = scalar_lea.vmem %s20, 24
    %v3597 = vld [vmem:[%s3596] sm:$0xff]
    %v3598 = vld [vmem:[%s3596 + $0x8] sm:$0xff]
    %v3599 = vld [vmem:[%s3596 + $0x10] sm:$0xf]
    %s3600 = scalar_lea.vmem %s21, 1
    %v3601 = vld [vmem:[%s3600] sm:$0x1]
    %v3603 = vlaneseq
    %v3604 = vshrl.u32 %v3603, 7
    %v3605 = vsub.s32 0, %v3604
    %v3606 = vrot.slane %v3601, %v3605
    %vm3608 = vcmask 162816
    %v3610 = vsel %vm3608, %v3588, 0
    %v3613 = vsel %vm3608, %v3589, 0
    %v3616 = vsel %vm3608, %v3590, 0
    %v3619 = vsel %vm3608, %v3591, 0
    %v3622 = vsel %vm3608, %v3592, 0
    %v3625 = vsel %vm3608, %v3593, 0
    %v3628 = vsel %vm3608, %v3594, 0
    %v3631 = vsel %vm3608, %v3595, 0
    %v3634 = vsel %vm889, %v3599, 0
    %3636 = vmatprep.subr.mxu0 0.0
    %3637 = vmatpush1.msra.mxu0 0.0
    %3638 = vmatprep.subr.mxu0 0.0
    %3639 = vmatpush1.msra.mxu0 0.0
    %3640 = vmatprep.subr.mxu0 0.0
    %3641 = vmatpush1.msra.mxu0 0.0
    %3642 = vmatprep.subr.mxu0 0.0
    %3643 = vmatpush1.msra.mxu0 0.0
    %3644 = vmatprep.subr.mxu0 0.0
    %3645 = vmatpush1.msra.mxu0 0.0
    %3646 = vmatprep.subr.mxu0 0.0
    %3647 = vmatpush1.msra.mxu0 0.0
    %3648 = vmatprep.subr.mxu0 0.0
    %3649 = vmatpush1.msra.mxu0 0.0
    %3650 = vmatprep.subr.mxu0 0.0
    %3651 = vmatpush1.msra.mxu0 0.0
    %3652 = vmatprep.subr.mxu0 0.0
    %3653 = vmatpush1.msra.mxu0 0.0
    %3654 = vmatprep.subr.mxu0 0.0
    %3655 = vmatpush1.msra.mxu0 0.0
    %3656 = vmatprep.subr.mxu0 0.0
    %3657 = vmatpush1.msra.mxu0 0.0
    %3658 = vmatprep.subr.mxu0 0.0
    %3659 = vmatpush1.msra.mxu0 0.0
    %3660 = vmatprep.subr.mxu0 0.0
    %3661 = vmatpush1.msra.mxu0 0.0
    %3662 = vmatprep.subr.mxu0 0.0
    %3663 = vmatpush1.msra.mxu0 %v3634
    %3664 = vmatprep.subr.mxu0 0.0
    %3665 = vmatpush1.msra.mxu0 %v3598
    %3666 = vmatprep.subr.mxu0 0.0
    %3667 = vmatpush1.msra.mxu0 %v3597
    %3668 = vmatprep.subr.mxu0 0.0
    %3669 = vmatpush2.msra.mxu0 0.0
    %3670 = vmatprep.subr.mxu0 0.0
    %3671 = vmatpush2.msra.mxu0 0.0
    %3672 = vmatprep.subr.mxu0 0.0
    %3673 = vmatpush2.msra.mxu0 0.0
    %3674 = vmatprep.subr.mxu0 0.0
    %3675 = vmatpush2.msra.mxu0 0.0
    %3676 = vmatprep.subr.mxu0 0.0
    %3677 = vmatpush2.msra.mxu0 0.0
    %3678 = vmatprep.subr.mxu0 0.0
    %3679 = vmatpush2.msra.mxu0 0.0
    %3680 = vmatprep.subr.mxu0 0.0
    %3681 = vmatpush2.msra.mxu0 0.0
    %3682 = vmatprep.subr.mxu0 0.0
    %3683 = vmatpush2.msra.mxu0 0.0
    %3684 = vmatprep.subr.mxu0 0.0
    %3685 = vmatpush2.msra.mxu0 0.0
    %3686 = vmatprep.subr.mxu0 0.0
    %3687 = vmatpush2.msra.mxu0 0.0
    %3688 = vmatprep.subr.mxu0 0.0
    %3689 = vmatpush2.msra.mxu0 0.0
    %3690 = vmatprep.subr.mxu0 0.0
    %3691 = vmatpush2.msra.mxu0 0.0
    %3692 = vmatprep.subr.mxu0 0.0
    %3693 = vmatpush2.msra.mxu0 0.0
    %3694 = vmatprep.subr.mxu0 0.0
    %3695 = vmatpush2.msra.mxu0 0.0
    %3696 = vmatprep.subr.mxu0 0.0
    %3697 = vmatpush2.msra.mxu0 0.0
    %3698 = vmatprep.subr.mxu0 0.0
    %3699 = vmatpush2.msra.mxu0 0.0
    %3700 = vmatprep.mubr.f32.mxu0 0.0
    %3701 = vmatmul.mubr.f32.gmra.mxu0 %v3610
    %v3702 = vpop.f32.mrf.mxu0
    %v3703 = vadd.f32 %v3606, %v3702
    %v3704 = vpop.f32.mrf.mxu0
    %3705 = vmatprep.mubr.f32.mxu0 0.0
    %3706 = vmatmul.mubr.f32.gmra.mxu0 %v3613
    %v3707 = vpop.f32.mrf.mxu0
    %v3708 = vadd.f32 %v3606, %v3707
    %v3709 = vpop.f32.mrf.mxu0
    %3710 = vmatprep.mubr.f32.mxu0 0.0
    %3711 = vmatmul.mubr.f32.gmra.mxu0 %v3616
    %v3712 = vpop.f32.mrf.mxu0
    %v3713 = vadd.f32 %v3606, %v3712
    %v3714 = vpop.f32.mrf.mxu0
    %3715 = vmatprep.mubr.f32.mxu0 0.0
    %3716 = vmatmul.mubr.f32.gmra.mxu0 %v3619
    %v3717 = vpop.f32.mrf.mxu0
    %v3718 = vadd.f32 %v3606, %v3717
    %v3719 = vpop.f32.mrf.mxu0
    %3720 = vmatprep.mubr.f32.mxu0 0.0
    %3721 = vmatmul.mubr.f32.gmra.mxu0 %v3622
    %v3722 = vpop.f32.mrf.mxu0
    %v3723 = vadd.f32 %v3606, %v3722
    %v3724 = vpop.f32.mrf.mxu0
    %3725 = vmatprep.mubr.f32.mxu0 0.0
    %3726 = vmatmul.mubr.f32.gmra.mxu0 %v3625
    %v3727 = vpop.f32.mrf.mxu0
    %v3728 = vadd.f32 %v3606, %v3727
    %v3729 = vpop.f32.mrf.mxu0
    %3730 = vmatprep.mubr.f32.mxu0 0.0
    %3731 = vmatmul.mubr.f32.gmra.mxu0 %v3628
    %v3732 = vpop.f32.mrf.mxu0
    %v3733 = vadd.f32 %v3606, %v3732
    %v3734 = vpop.f32.mrf.mxu0
    %3735 = vmatprep.mubr.f32.mxu0 0.0
    %3736 = vmatmul.mubr.f32.gmra.mxu0 %v3631
    %v3737 = vpop.f32.mrf.mxu0
    %v3738 = vadd.f32 %v3606, %v3737
    %v3739 = vpop.f32.mrf.mxu0
    %3740 = vdwg.mxu0
    %v3741 = vmax.f32 %v3703, 0.0
    %v3742 = vmax.f32 %v3708, 0.0
    %v3743 = vmax.f32 %v3713, 0.0
    %v3744 = vmax.f32 %v3718, 0.0
    %v3745 = vmax.f32 %v3723, 0.0
    %v3746 = vmax.f32 %v3728, 0.0
    %v3747 = vmax.f32 %v3733, 0.0
    %v3748 = vmax.f32 %v3738, 0.0
    %v3749 = vld [vmem:[%s22] sm:$0xff]
    %v3750 = vld [vmem:[%s22 + $0x8] sm:$0xff]
    %v3751 = vld [vmem:[%s22 + $0x10] sm:$0xf]
    %v3752 = vld [vmem:[%s23] sm:$0x1]
    %v3754 = vlaneseq
    %v3755 = vshrl.u32 %v3754, 7
    %v3756 = vsub.s32 0, %v3755
    %v3757 = vrot.slane %v3752, %v3756
    %v3760 = vsel %vm3608, %v3741, 0
    %v3763 = vsel %vm3608, %v3742, 0
    %v3766 = vsel %vm3608, %v3743, 0
    %v3769 = vsel %vm3608, %v3744, 0
    %v3772 = vsel %vm3608, %v3745, 0
    %v3775 = vsel %vm3608, %v3746, 0
    %v3778 = vsel %vm3608, %v3747, 0
    %v3781 = vsel %vm3608, %v3748, 0
    %v3784 = vsel %vm889, %v3751, 0
    %3786 = vmatprep.subr.mxu0 0.0
    %3787 = vmatpush1.msra.mxu0 0.0
    %3788 = vmatprep.subr.mxu0 0.0
    %3789 = vmatpush1.msra.mxu0 0.0
    %3790 = vmatprep.subr.mxu0 0.0
    %3791 = vmatpush1.msra.mxu0 0.0
    %3792 = vmatprep.subr.mxu0 0.0
    %3793 = vmatpush1.msra.mxu0 0.0
    %3794 = vmatprep.subr.mxu0 0.0
    %3795 = vmatpush1.msra.mxu0 0.0
    %3796 = vmatprep.subr.mxu0 0.0
    %3797 = vmatpush1.msra.mxu0 0.0
    %3798 = vmatprep.subr.mxu0 0.0
    %3799 = vmatpush1.msra.mxu0 0.0
    %3800 = vmatprep.subr.mxu0 0.0
    %3801 = vmatpush1.msra.mxu0 0.0
    %3802 = vmatprep.subr.mxu0 0.0
    %3803 = vmatpush1.msra.mxu0 0.0
    %3804 = vmatprep.subr.mxu0 0.0
    %3805 = vmatpush1.msra.mxu0 0.0
    %3806 = vmatprep.subr.mxu0 0.0
    %3807 = vmatpush1.msra.mxu0 0.0
    %3808 = vmatprep.subr.mxu0 0.0
    %3809 = vmatpush1.msra.mxu0 0.0
    %3810 = vmatprep.subr.mxu0 0.0
    %3811 = vmatpush1.msra.mxu0 0.0
    %3812 = vmatprep.subr.mxu0 0.0
    %3813 = vmatpush1.msra.mxu0 %v3784
    %3814 = vmatprep.subr.mxu0 0.0
    %3815 = vmatpush1.msra.mxu0 %v3750
    %3816 = vmatprep.subr.mxu0 0.0
    %3817 = vmatpush1.msra.mxu0 %v3749
    %3818 = vmatprep.subr.mxu0 0.0
    %3819 = vmatpush2.msra.mxu0 0.0
    %3820 = vmatprep.subr.mxu0 0.0
    %3821 = vmatpush2.msra.mxu0 0.0
    %3822 = vmatprep.subr.mxu0 0.0
    %3823 = vmatpush2.msra.mxu0 0.0
    %3824 = vmatprep.subr.mxu0 0.0
    %3825 = vmatpush2.msra.mxu0 0.0
    %3826 = vmatprep.subr.mxu0 0.0
    %3827 = vmatpush2.msra.mxu0 0.0
    %3828 = vmatprep.subr.mxu0 0.0
    %3829 = vmatpush2.msra.mxu0 0.0
    %3830 = vmatprep.subr.mxu0 0.0
    %3831 = vmatpush2.msra.mxu0 0.0
    %3832 = vmatprep.subr.mxu0 0.0
    %3833 = vmatpush2.msra.mxu0 0.0
    %3834 = vmatprep.subr.mxu0 0.0
    %3835 = vmatpush2.msra.mxu0 0.0
    %3836 = vmatprep.subr.mxu0 0.0
    %3837 = vmatpush2.msra.mxu0 0.0
    %3838 = vmatprep.subr.mxu0 0.0
    %3839 = vmatpush2.msra.mxu0 0.0
    %3840 = vmatprep.subr.mxu0 0.0
    %3841 = vmatpush2.msra.mxu0 0.0
    %3842 = vmatprep.subr.mxu0 0.0
    %3843 = vmatpush2.msra.mxu0 0.0
    %3844 = vmatprep.subr.mxu0 0.0
    %3845 = vmatpush2.msra.mxu0 0.0
    %3846 = vmatprep.subr.mxu0 0.0
    %3847 = vmatpush2.msra.mxu0 0.0
    %3848 = vmatprep.subr.mxu0 0.0
    %3849 = vmatpush2.msra.mxu0 0.0
    %3850 = vmatprep.mubr.f32.mxu0 0.0
    %3851 = vmatmul.mubr.f32.gmra.mxu0 %v3760
    %v3852 = vpop.f32.mrf.mxu0
    %v3853 = vadd.f32 %v3757, %v3852
    %v3854 = vpop.f32.mrf.mxu0
    %3855 = vmatprep.mubr.f32.mxu0 0.0
    %3856 = vmatmul.mubr.f32.gmra.mxu0 %v3763
    %v3857 = vpop.f32.mrf.mxu0
    %v3858 = vadd.f32 %v3757, %v3857
    %v3859 = vpop.f32.mrf.mxu0
    %3860 = vmatprep.mubr.f32.mxu0 0.0
    %3861 = vmatmul.mubr.f32.gmra.mxu0 %v3766
    %v3862 = vpop.f32.mrf.mxu0
    %v3863 = vadd.f32 %v3757, %v3862
    %v3864 = vpop.f32.mrf.mxu0
    %3865 = vmatprep.mubr.f32.mxu0 0.0
    %3866 = vmatmul.mubr.f32.gmra.mxu0 %v3769
    %v3867 = vpop.f32.mrf.mxu0
    %v3868 = vadd.f32 %v3757, %v3867
    %v3869 = vpop.f32.mrf.mxu0
    %3870 = vmatprep.mubr.f32.mxu0 0.0
    %3871 = vmatmul.mubr.f32.gmra.mxu0 %v3772
    %v3872 = vpop.f32.mrf.mxu0
    %v3873 = vadd.f32 %v3757, %v3872
    %v3874 = vpop.f32.mrf.mxu0
    %3875 = vmatprep.mubr.f32.mxu0 0.0
    %3876 = vmatmul.mubr.f32.gmra.mxu0 %v3775
    %v3877 = vpop.f32.mrf.mxu0
    %v3878 = vadd.f32 %v3757, %v3877
    %v3879 = vpop.f32.mrf.mxu0
    %3880 = vmatprep.mubr.f32.mxu0 0.0
    %3881 = vmatmul.mubr.f32.gmra.mxu0 %v3778
    %v3882 = vpop.f32.mrf.mxu0
    %v3883 = vadd.f32 %v3757, %v3882
    %v3884 = vpop.f32.mrf.mxu0
    %3885 = vmatprep.mubr.f32.mxu0 0.0
    %3886 = vmatmul.mubr.f32.gmra.mxu0 %v3781
    %v3887 = vpop.f32.mrf.mxu0
    %v3888 = vadd.f32 %v3757, %v3887
    %v3889 = vpop.f32.mrf.mxu0
    %3890 = vdwg.mxu0
    %3891 = vst.msk [vmem:[%s24] sm:$0xff] %vm604, %v2982
    %3892 = vst.msk [vmem:[%s24 + $0x8] sm:$0xff] %vm604, %v2983
    %3893 = vst.msk [vmem:[%s24 + $0x10] sm:$0xff] %vm604, %v2984
    %3894 = vst.msk [vmem:[%s24 + $0x18] sm:$0xff] %vm604, %v2985
    %3895 = vst [vmem:[#allocation2] sm:$0xff] %v3853
    %3896 = vst [vmem:[#allocation2 + $0x8] sm:$0xff] %v3858
    %3897 = vst [vmem:[#allocation2 + $0x10] sm:$0xff] %v3863
    %3898 = vst [vmem:[#allocation2 + $0x18] sm:$0xff] %v3868
    %3899 = vst [vmem:[#allocation2 + $0x20] sm:$0xff] %v3873
    %3900 = vst [vmem:[#allocation2 + $0x28] sm:$0xff] %v3878
    %3901 = vst [vmem:[#allocation2 + $0x30] sm:$0xff] %v3883
    %3902 = vst [vmem:[#allocation2 + $0x38] sm:$0xff] %v3888
    // Predicated region
    $region98: #{tpu_custom_call.1} parent=1 // pred_check
      _
    $region99: #{tpu_custom_call.1} parent=1 // pred_check_branch
      %3904 = sbr.rel (0) target = $region101
    $region100: #{tpu_custom_call.1} parent=1 // pred_region
      _
    $region101: #{tpu_custom_call.1} parent=1 // pred_fallthru
      _
    // Predicated region
    $region102: #{tpu_custom_call.1} parent=1 // pred_check
      _
    $region103: #{tpu_custom_call.1} parent=1 // pred_check_branch
      %3906 = sbr.rel (0) target = $region105
    $region104: #{tpu_custom_call.1} parent=1 // pred_region
      %s3908 = ssub.s32 1024, 1024
      %3909 = vsyncadd [#allocation3], %s3908
      %s3910 = sshll.u32 [#allocation2], 4
      %s3911 = int_to_ptr.vmem [resolvable:$true] %s3910
      %3916 = dma.vmem_to_hbm [thread:$0]  %s3911, 1024, %s25, [#allocation3], 128, 128, 8
    $region105: #{tpu_custom_call.1} parent=1 // pred_fallthru
      _
    // Predicated region
    $region106: #{tpu_custom_call.1} parent=1 // pred_check
      _
    $region107: #{tpu_custom_call.1} parent=1 // pred_check_branch
      %3918 = sbr.rel (0) target = $region109
    $region108: #{tpu_custom_call.1} parent=1 // pred_region
      _
    $region109: #{tpu_custom_call.1} parent=1 // pred_fallthru
      _
    // Predicated region
    $region110: #{tpu_custom_call.1} parent=1 // pred_check
      _
    $region111: #{tpu_custom_call.1} parent=1 // pred_check_branch
      %3920 = sbr.rel (0) target = $region113
    $region112: #{tpu_custom_call.1} parent=1 // pred_region
      %3921 = dma.done [#allocation3], 1024
    $region113: #{tpu_custom_call.1} parent=1 // pred_fallthru
      _
    %3922 = vsyncpa [#allocation3], 1

</llo_original>
